<compile_context>
chip_gen: v5e
topology: v5e:2x2
jax: 0.10.0
libtpu: 0.0.40
codegen_flags: <defaults>
</compile_context>

<pallas_src>
import jax
import jax.numpy as jnp
from jax.experimental import pallas as pl
from jax.experimental.pallas import tpu as pltpu

NATIVE_DIMS = [784, 520, 320, 240, 120, 10]
# Input features stay at the native 784; every other feature dim is zero-padded
# to a multiple of 128 so all loads/stores are lane-dense (incl. the 10-wide
# logits -> 128, avoiding masked vst on the output).
PAD_DIMS = [784, 640, 384, 256, 128, 128]

MAX_TILE_B = 1024                    # per-step batch rows (review: sweep 512-1024)
VMEM_LIMIT_BYTES = 32 * 1024 * 1024  # raise v5e's 16 MiB default; == v6e/v7x default


def _round_up(x, m):
    return (x + m - 1) // m * m


def mlp_kernel(x_ref,
               w1_ref, b1_ref,
               w2_ref, b2_ref,
               w3_ref, b3_ref,
               w4_ref, b4_ref,
               w5_ref, b5_ref,
               o_ref):
    def layer(h, w_ref, b_ref, relu):
        # bf16 x bf16 matmul on the MXU with f32 accumulation; bias-add / ReLU
        # run in f32 on the VPU (v5e's VPU has no bf16).
        y = jnp.dot(h, w_ref[...], preferred_element_type=jnp.float32) + b_ref[...]
        if relu:
            y = jnp.maximum(y, 0.0)
        return y

    h = x_ref[...]                                                # bf16 (tile_b, 784)
    h = layer(h, w1_ref, b1_ref, True).astype(jnp.bfloat16)
    h = layer(h, w2_ref, b2_ref, True).astype(jnp.bfloat16)
    h = layer(h, w3_ref, b3_ref, True).astype(jnp.bfloat16)
    h = layer(h, w4_ref, b4_ref, True).astype(jnp.bfloat16)
    o_ref[...] = layer(h, w5_ref, b5_ref, False).astype(o_ref.dtype)   # no ReLU


def init_params(key):
    """PyTorch-style uniform(+/- 1/sqrt(fan_in)) init at the native dims.

    Weights are (in_features, out_features) so the kernel computes x @ W + b
    (equivalent to PyTorch's x @ W.T + b). Biases are (1, out_features) f32.
    """
    params = []
    for i in range(5):
        fan_in, fan_out = NATIVE_DIMS[i], NATIVE_DIMS[i + 1]
        key, kw, kb = jax.random.split(key, 3)
        bound = 1.0 / (fan_in ** 0.5)
        w = jax.random.uniform(kw, (fan_in, fan_out), jnp.float32, -bound, bound)
        b = jax.random.uniform(kb, (1, fan_out), jnp.float32, -bound, bound)
        params.append((w, b))
    return params


def prepare_params(params):
    """Zero-pad weights/biases to 128-aligned output dims; weights -> bf16.

    W1 keeps its native 784 input rows (no K padding of layer 1).
    """
    flat = []
    for i, (w, b) in enumerate(params):
        in_p, out_p = PAD_DIMS[i], PAD_DIMS[i + 1]
        w_p = jnp.zeros((in_p, out_p), jnp.bfloat16)
        w_p = w_p.at[: w.shape[0], : w.shape[1]].set(w.astype(jnp.bfloat16))
        b_p = jnp.zeros((1, out_p), jnp.float32)
        b_p = b_p.at[:, : b.shape[1]].set(b.astype(jnp.float32))
        flat.extend([w_p, b_p])
    return flat


def neural_net_forward(x_nchw, flat_params):
    b = x_nchw.shape[0]
    x = x_nchw.reshape(b, NATIVE_DIMS[0]).astype(jnp.bfloat16)   # x.view(-1, 784)

    # Adaptive batch tile:
    #  * multiple of 16 sublanes (bf16 packs rows in pairs),
    #  * capped at MAX_TILE_B so per-step VMEM stays bounded,
    #  * >=2 grid steps when b > 16 so the "parallel" batch axis can shard
    #    across v7x's two TensorCores,
    #  * sized from cdiv(b, num_tiles) so any batch padding is <16 rows per
    #    tile instead of up to a whole tile of slack.
    num_tiles = max(pl.cdiv(b, MAX_TILE_B), 2 if b > 16 else 1)
    tile_b = _round_up(pl.cdiv(b, num_tiles), 16)
    grid_n = pl.cdiv(b, tile_b)
    b_pad = grid_n * tile_b
    if b_pad != b:
        # Batch-row-only pad; the lane dim stays at the native 784 so there is
        # no lane-pad copy and no wasted layer-1 K work.
        x = jnp.pad(x, ((0, b_pad - b), (0, 0)))

    in_specs = [pl.BlockSpec((tile_b, PAD_DIMS[0]), lambda i: (i, 0))]
    for p in flat_params:
        # Constant block index -> Pallas keeps weights/biases resident in VMEM
        # across all grid steps (no per-step re-DMA).
        in_specs.append(pl.BlockSpec(p.shape, lambda i: (0, 0)))
    out_spec = pl.BlockSpec((tile_b, PAD_DIMS[-1]), lambda i: (i, 0))

    out = pl.pallas_call(
        mlp_kernel,
        out_shape=jax.ShapeDtypeStruct((b_pad, PAD_DIMS[-1]), jnp.float32),
        grid=(grid_n,),
        in_specs=in_specs,
        out_specs=out_spec,
        compiler_params=pltpu.CompilerParams(
            dimension_semantics=("parallel",),
            vmem_limit_bytes=VMEM_LIMIT_BYTES),
    )(x, *flat_params)

    # Slice padded batch rows and padded logit lanes back to the true shape.
    return out[:b, : NATIVE_DIMS[-1]]


if __name__ == "__main__":
    key = jax.random.PRNGKey(0)
    kx, kp = jax.random.split(key)

    # Small batch, multiple of 16 -> two 16-row tiles, exercising the 2-step
    # "parallel" grid path; image shape implied by the 784-wide first linear.
    batch = 32
    x = jax.random.normal(kx, (batch, 1, 28, 28), jnp.float32)
    params = init_params(kp)
    flat_params = prepare_params(params)

    out = neural_net_forward(x, flat_params)
    jax.block_until_ready(out)

    # Reference with the same bf16 weight/activation casts and f32 accumulation
    # (the zero-padding scheme itself is numerically exact).
    h = x.reshape(batch, 784).astype(jnp.bfloat16)
    ref = None
    for i, (w, bias) in enumerate(params):
        y = jnp.dot(h, w.astype(jnp.bfloat16),
                    preferred_element_type=jnp.float32) + bias
        if i < 4:
            h = jnp.maximum(y, 0.0).astype(jnp.bfloat16)
        else:
            ref = y

    assert out.shape == (batch, 10)
    assert jnp.allclose(out, ref, atol=1e-2, rtol=1e-2)

    print("KERNEL_OK")
</pallas_src>

<mosaic_0001>
module attributes {stable_mosaic.version = 11 : i64} {
  func.func @mlp_kernel(%arg0: i32, %arg1: memref<16x784xbf16, #tpu.memory_space<vmem>>, %arg2: memref<784x640xbf16, #tpu.memory_space<vmem>>, %arg3: memref<1x640xf32, #tpu.memory_space<vmem>>, %arg4: memref<640x384xbf16, #tpu.memory_space<vmem>>, %arg5: memref<1x384xf32, #tpu.memory_space<vmem>>, %arg6: memref<384x256xbf16, #tpu.memory_space<vmem>>, %arg7: memref<1x256xf32, #tpu.memory_space<vmem>>, %arg8: memref<256x128xbf16, #tpu.memory_space<vmem>>, %arg9: memref<1x128xf32, #tpu.memory_space<vmem>>, %arg10: memref<128x128xbf16, #tpu.memory_space<vmem>>, %arg11: memref<1x128xf32, #tpu.memory_space<vmem>>, %arg12: memref<16x128xf32, #tpu.memory_space<vmem>>) attributes {dimension_semantics = [#tpu.dimension_semantics<parallel>], iteration_bounds = array<i64: 2>, scalar_prefetch = 0 : i64, scratch_operands = 0 : i64, tpu.core_type = #tpu.core_type<tc>, window_params = [{transform_indices = @transform_0, window_bounds = array<i64: 16, 784>}, {pipeline_mode = #tpu.pipeline_mode<synchronous>, transform_indices = @transform_1, window_bounds = array<i64: 784, 640>}, {pipeline_mode = #tpu.pipeline_mode<synchronous>, transform_indices = @transform_2, window_bounds = array<i64: 1, 640>}, {pipeline_mode = #tpu.pipeline_mode<synchronous>, transform_indices = @transform_3, window_bounds = array<i64: 640, 384>}, {pipeline_mode = #tpu.pipeline_mode<synchronous>, transform_indices = @transform_4, window_bounds = array<i64: 1, 384>}, {pipeline_mode = #tpu.pipeline_mode<synchronous>, transform_indices = @transform_5, window_bounds = array<i64: 384, 256>}, {pipeline_mode = #tpu.pipeline_mode<synchronous>, transform_indices = @transform_6, window_bounds = array<i64: 1, 256>}, {pipeline_mode = #tpu.pipeline_mode<synchronous>, transform_indices = @transform_7, window_bounds = array<i64: 256, 128>}, {pipeline_mode = #tpu.pipeline_mode<synchronous>, transform_indices = @transform_8, window_bounds = array<i64: 1, 128>}, {pipeline_mode = #tpu.pipeline_mode<synchronous>, transform_indices = @transform_9, window_bounds = array<i64: 128, 128>}, {pipeline_mode = #tpu.pipeline_mode<synchronous>, transform_indices = @transform_10, window_bounds = array<i64: 1, 128>}, {transform_indices = @transform_11, window_bounds = array<i64: 16, 128>}]} {
    %c0 = arith.constant 0 : index
    %c0_0 = arith.constant 0 : index
    %0 = vector.load %arg1[%c0, %c0_0] : memref<16x784xbf16, #tpu.memory_space<vmem>>, vector<16x784xbf16>
    %c0_1 = arith.constant 0 : index
    %c0_2 = arith.constant 0 : index
    %1 = vector.load %arg2[%c0_1, %c0_2] : memref<784x640xbf16, #tpu.memory_space<vmem>>, vector<784x640xbf16>
    %cst = arith.constant dense<0.000000e+00> : vector<16x640xf32>
    %2 = tpu.matmul %0, %1, %cst {dimension_numbers = #tpu.dot_dimension_numbers<[1], [0], [0], [1], [0, 0, 1, 1], [], []>} : vector<16x784xbf16>, vector<784x640xbf16>, vector<16x640xf32> -> vector<16x640xf32>
    %c0_3 = arith.constant 0 : index
    %c0_4 = arith.constant 0 : index
    %3 = vector.load %arg3[%c0_3, %c0_4] : memref<1x640xf32, #tpu.memory_space<vmem>>, vector<1x640xf32>
    %4 = vector.broadcast %3 : vector<1x640xf32> to vector<16x640xf32>
    %5 = arith.addf %2, %4 : vector<16x640xf32>
    %cst_5 = arith.constant 0.000000e+00 : f32
    %6 = vector.broadcast %cst_5 : f32 to vector<16x640xf32>
    %7 = arith.maximumf %5, %6 : vector<16x640xf32>
    %8 = arith.truncf %7 : vector<16x640xf32> to vector<16x640xbf16>
    %c0_6 = arith.constant 0 : index
    %c0_7 = arith.constant 0 : index
    %9 = vector.load %arg4[%c0_6, %c0_7] : memref<640x384xbf16, #tpu.memory_space<vmem>>, vector<640x384xbf16>
    %cst_8 = arith.constant dense<0.000000e+00> : vector<16x384xf32>
    %10 = tpu.matmul %8, %9, %cst_8 {dimension_numbers = #tpu.dot_dimension_numbers<[1], [0], [0], [1], [0, 0, 1, 1], [], []>} : vector<16x640xbf16>, vector<640x384xbf16>, vector<16x384xf32> -> vector<16x384xf32>
    %c0_9 = arith.constant 0 : index
    %c0_10 = arith.constant 0 : index
    %11 = vector.load %arg5[%c0_9, %c0_10] : memref<1x384xf32, #tpu.memory_space<vmem>>, vector<1x384xf32>
    %12 = vector.broadcast %11 : vector<1x384xf32> to vector<16x384xf32>
    %13 = arith.addf %10, %12 : vector<16x384xf32>
    %cst_11 = arith.constant 0.000000e+00 : f32
    %14 = vector.broadcast %cst_11 : f32 to vector<16x384xf32>
    %15 = arith.maximumf %13, %14 : vector<16x384xf32>
    %16 = arith.truncf %15 : vector<16x384xf32> to vector<16x384xbf16>
    %c0_12 = arith.constant 0 : index
    %c0_13 = arith.constant 0 : index
    %17 = vector.load %arg6[%c0_12, %c0_13] : memref<384x256xbf16, #tpu.memory_space<vmem>>, vector<384x256xbf16>
    %cst_14 = arith.constant dense<0.000000e+00> : vector<16x256xf32>
    %18 = tpu.matmul %16, %17, %cst_14 {dimension_numbers = #tpu.dot_dimension_numbers<[1], [0], [0], [1], [0, 0, 1, 1], [], []>} : vector<16x384xbf16>, vector<384x256xbf16>, vector<16x256xf32> -> vector<16x256xf32>
    %c0_15 = arith.constant 0 : index
    %c0_16 = arith.constant 0 : index
    %19 = vector.load %arg7[%c0_15, %c0_16] : memref<1x256xf32, #tpu.memory_space<vmem>>, vector<1x256xf32>
    %20 = vector.broadcast %19 : vector<1x256xf32> to vector<16x256xf32>
    %21 = arith.addf %18, %20 : vector<16x256xf32>
    %cst_17 = arith.constant 0.000000e+00 : f32
    %22 = vector.broadcast %cst_17 : f32 to vector<16x256xf32>
    %23 = arith.maximumf %21, %22 : vector<16x256xf32>
    %24 = arith.truncf %23 : vector<16x256xf32> to vector<16x256xbf16>
    %c0_18 = arith.constant 0 : index
    %c0_19 = arith.constant 0 : index
    %25 = vector.load %arg8[%c0_18, %c0_19] : memref<256x128xbf16, #tpu.memory_space<vmem>>, vector<256x128xbf16>
    %cst_20 = arith.constant dense<0.000000e+00> : vector<16x128xf32>
    %26 = tpu.matmul %24, %25, %cst_20 {dimension_numbers = #tpu.dot_dimension_numbers<[1], [0], [0], [1], [0, 0, 1, 1], [], []>} : vector<16x256xbf16>, vector<256x128xbf16>, vector<16x128xf32> -> vector<16x128xf32>
    %c0_21 = arith.constant 0 : index
    %c0_22 = arith.constant 0 : index
    %27 = vector.load %arg9[%c0_21, %c0_22] : memref<1x128xf32, #tpu.memory_space<vmem>>, vector<1x128xf32>
    %28 = vector.broadcast %27 : vector<1x128xf32> to vector<16x128xf32>
    %29 = arith.addf %26, %28 : vector<16x128xf32>
    %cst_23 = arith.constant 0.000000e+00 : f32
    %30 = vector.broadcast %cst_23 : f32 to vector<16x128xf32>
    %31 = arith.maximumf %29, %30 : vector<16x128xf32>
    %32 = arith.truncf %31 : vector<16x128xf32> to vector<16x128xbf16>
    %c0_24 = arith.constant 0 : index
    %c0_25 = arith.constant 0 : index
    %33 = vector.load %arg10[%c0_24, %c0_25] : memref<128x128xbf16, #tpu.memory_space<vmem>>, vector<128x128xbf16>
    %cst_26 = arith.constant dense<0.000000e+00> : vector<16x128xf32>
    %34 = tpu.matmul %32, %33, %cst_26 {dimension_numbers = #tpu.dot_dimension_numbers<[1], [0], [0], [1], [0, 0, 1, 1], [], []>} : vector<16x128xbf16>, vector<128x128xbf16>, vector<16x128xf32> -> vector<16x128xf32>
    %c0_27 = arith.constant 0 : index
    %c0_28 = arith.constant 0 : index
    %35 = vector.load %arg11[%c0_27, %c0_28] : memref<1x128xf32, #tpu.memory_space<vmem>>, vector<1x128xf32>
    %36 = vector.broadcast %35 : vector<1x128xf32> to vector<16x128xf32>
    %37 = arith.addf %34, %36 : vector<16x128xf32>
    %c0_29 = arith.constant 0 : index
    %c0_30 = arith.constant 0 : index
    %38 = vector.load %arg12[%c0_29, %c0_30] : memref<16x128xf32, #tpu.memory_space<vmem>>, vector<16x128xf32>
    tpu.vector_store %arg12[%c0_29, %c0_30], %37 {strides = array<i32>} : memref<16x128xf32, #tpu.memory_space<vmem>>, vector<16x128xf32>,
    return
  }
  func.func @transform_0(%arg0: i32) -> (i32, i32) {
    %c0_i32 = arith.constant 0 : i32
    %c0_i32_0 = arith.constant 0 : i32
    return %arg0, %c0_i32 : i32, i32
  }
  func.func @transform_1(%arg0: i32) -> (i32, i32) {
    %c0_i32 = arith.constant 0 : i32
    %c0_i32_0 = arith.constant 0 : i32
    %c0_i32_1 = arith.constant 0 : i32
    return %c0_i32, %c0_i32_0 : i32, i32
  }
  func.func @transform_2(%arg0: i32) -> (i32, i32) {
    %c0_i32 = arith.constant 0 : i32
    %c0_i32_0 = arith.constant 0 : i32
    %c0_i32_1 = arith.constant 0 : i32
    return %c0_i32, %c0_i32_0 : i32, i32
  }
  func.func @transform_3(%arg0: i32) -> (i32, i32) {
    %c0_i32 = arith.constant 0 : i32
    %c0_i32_0 = arith.constant 0 : i32
    %c0_i32_1 = arith.constant 0 : i32
    return %c0_i32, %c0_i32_0 : i32, i32
  }
  func.func @transform_4(%arg0: i32) -> (i32, i32) {
    %c0_i32 = arith.constant 0 : i32
    %c0_i32_0 = arith.constant 0 : i32
    %c0_i32_1 = arith.constant 0 : i32
    return %c0_i32, %c0_i32_0 : i32, i32
  }
  func.func @transform_5(%arg0: i32) -> (i32, i32) {
    %c0_i32 = arith.constant 0 : i32
    %c0_i32_0 = arith.constant 0 : i32
    %c0_i32_1 = arith.constant 0 : i32
    return %c0_i32, %c0_i32_0 : i32, i32
  }
  func.func @transform_6(%arg0: i32) -> (i32, i32) {
    %c0_i32 = arith.constant 0 : i32
    %c0_i32_0 = arith.constant 0 : i32
    %c0_i32_1 = arith.constant 0 : i32
    return %c0_i32, %c0_i32_0 : i32, i32
  }
  func.func @transform_7(%arg0: i32) -> (i32, i32) {
    %c0_i32 = arith.constant 0 : i32
    %c0_i32_0 = arith.constant 0 : i32
    %c0_i32_1 = arith.constant 0 : i32
    return %c0_i32, %c0_i32_0 : i32, i32
  }
  func.func @transform_8(%arg0: i32) -> (i32, i32) {
    %c0_i32 = arith.constant 0 : i32
    %c0_i32_0 = arith.constant 0 : i32
    %c0_i32_1 = arith.constant 0 : i32
    return %c0_i32, %c0_i32_0 : i32, i32
  }
  func.func @transform_9(%arg0: i32) -> (i32, i32) {
    %c0_i32 = arith.constant 0 : i32
    %c0_i32_0 = arith.constant 0 : i32
    %c0_i32_1 = arith.constant 0 : i32
    return %c0_i32, %c0_i32_0 : i32, i32
  }
  func.func @transform_10(%arg0: i32) -> (i32, i32) {
    %c0_i32 = arith.constant 0 : i32
    %c0_i32_0 = arith.constant 0 : i32
    %c0_i32_1 = arith.constant 0 : i32
    return %c0_i32, %c0_i32_0 : i32, i32
  }
  func.func @transform_11(%arg0: i32) -> (i32, i32) {
    %c0_i32 = arith.constant 0 : i32
    %c0_i32_0 = arith.constant 0 : i32
    return %arg0, %c0_i32 : i32, i32
  }
}

</mosaic_0001>

<llo_original>
// kernel: tpu_custom_call.1
$region0: #{tpu_custom_call.1}
  #allocation0 [shape = 'u32[]', space=smem, size = 0x4, offset = 0x4, fixed_abs, tag = 'smem constant byte address 0x4 - core index']
  #allocation1 [shape = 'u32[72,128]{1,0:T(1,128)}', space=vmem, size = 0x9000, scoped, tag = 'internal scratch']
  %s0 = inlined_call_operand.hbm [shape: bf16[32,784], index: 0, kind: input, shape index: {}]
  %s1 = inlined_call_operand.hbm [shape: bf16[784,640], index: 1, kind: input, shape index: {}]
  %s2 = inlined_call_operand.hbm [shape: f32[1,640], index: 2, kind: input, shape index: {}]
  %s3 = inlined_call_operand.hbm [shape: bf16[640,384], index: 3, kind: input, shape index: {}]
  %s4 = inlined_call_operand.vmem [shape: f32[1,384], index: 4, kind: input, shape index: {}]
  %s5 = inlined_call_operand.hbm [shape: bf16[384,256], index: 5, kind: input, shape index: {}]
  %s6 = inlined_call_operand.vmem [shape: f32[1,256], index: 6, kind: input, shape index: {}]
  %s7 = inlined_call_operand.hbm [shape: bf16[256,128], index: 7, kind: input, shape index: {}]
  %s8 = inlined_call_operand.vmem [shape: f32[1,128], index: 8, kind: input, shape index: {}]
  %s9 = inlined_call_operand.hbm [shape: bf16[128,128], index: 9, kind: input, shape index: {}]
  %s10 = inlined_call_operand.vmem [shape: f32[1,128], index: 10, kind: input, shape index: {}]
  %s11 = inlined_call_operand.hbm [shape: f32[32,128], index: 11, kind: output, shape index: {}]
  %s12 = sld [smem:[#allocation0]]
  $region105: #{tpu_custom_call.1} parent=0
    _
  %s14 = ssub.s32 1, %s12
  %s15 = scalar_select 0, %s14, %s12
  $region1: #{tpu_custom_call.1} parent=0
    #allocation2 [shape = 'u8[57344]{0}', space=vmem, size = 0xe000, scoped, tag = 'input window, operand 0']
    #allocation3 [shape = 's32[2]{0}', space=sflag, size = 0x8, scoped, tag = 'scoped memory for tpu_custom_call.1']
    #allocation4 [shape = 's32[2]{0}', space=sflag, size = 0x8, scoped, tag = 'scoped memory for tpu_custom_call.1']
    #allocation5 [shape = 'u8[1003520]{0}', space=vmem, size = 0xf5000, scoped, tag = 'input window, operand 1, single buffered']
    #allocation6 [shape = 's32[1]{0}', space=sflag, size = 0x4, scoped, tag = 'scoped memory for tpu_custom_call.1']
    #allocation7 [shape = 'u8[2560]{0}', space=vmem, size = 0xc00, scoped, tag = 'input window, operand 2, single buffered']
    #allocation8 [shape = 'u8[491520]{0}', space=vmem, size = 0x78000, scoped, tag = 'input window, operand 3, single buffered']
    #allocation9 [shape = 's32[1]{0}', space=sflag, size = 0x4, scoped, tag = 'scoped memory for tpu_custom_call.1']
    #allocation10 [shape = 'u8[196608]{0}', space=vmem, size = 0x30000, scoped, tag = 'input window, operand 5, single buffered']
    #allocation11 [shape = 'u8[65536]{0}', space=vmem, size = 0x10000, scoped, tag = 'input window, operand 7, single buffered']
    #allocation12 [shape = 's32[1]{0}', space=sflag, size = 0x4, scoped, tag = 'scoped memory for tpu_custom_call.1']
    #allocation13 [shape = 'u8[32768]{0}', space=vmem, size = 0x8000, scoped, tag = 'input window, operand 9, single buffered']
    #allocation14 [shape = 'u8[16384]{0}', space=vmem, size = 0x4000, scoped, tag = 'output window, operand 0']
    %16 = vsyncpa [#allocation3], 0
    %s17 = scalar_lea.sflag [#allocation3], 1
    %18 = vsyncpa %s17, 0
    %19 = vsyncpa [#allocation6], 0
    %20 = vsyncpa [#allocation9], 0
    %21 = vsyncpa [#allocation12], 0
    %22 = vsyncpa [#allocation4], 0
    %s23 = scalar_lea.sflag [#allocation4], 1
    %24 = vsyncpa %s23, 0
    loop: start=0, step=1, limit=4
    $region2: #{tpu_custom_call.1} parent=1 // loop_pre_header
      _
    $region3: #{tpu_custom_call.1} parent=1 // loop_header
      %s26 = sphi 0, %s30
      %p27 = scmp.ge.s32.totalorder %s26, 4
      %s36 = sphi 0, %s38
      %s39 = sphi 0, %s36
      %s40 = sphi 0, %s39
      %s56 = sphi 0, %s40
      %s60 = sphi 0, %s60
      %s62 = sphi 0, %s60
      %s63 = sphi 0, %s62
      %s77 = sphi 0, %s63
      %s81 = sphi 0, %s81
      %s83 = sphi 0, %s81
      %s84 = sphi 0, %s83
      %s98 = sphi 0, %s84
      %s102 = sphi 0, %s102
      %s104 = sphi 0, %s102
      %s105 = sphi 0, %s104
      %s119 = sphi 0, %s105
      %s123 = sphi 0, %s123
      %s125 = sphi 0, %s123
      %s126 = sphi 0, %s125
      %s140 = sphi 0, %s126
      %s144 = sphi 0, %s144
      %s146 = sphi 0, %s144
      %s147 = sphi 0, %s146
      %s161 = sphi 0, %s147
      %s165 = sphi 0, %s165
      %s167 = sphi 0, %s165
      %s168 = sphi 0, %s167
      %s182 = sphi 0, %s168
      %s186 = sphi 0, %s186
      %s188 = sphi 0, %s186
      %s189 = sphi 0, %s188
      %s203 = sphi 0, %s189
      %s207 = sphi 0, %s207
      %s209 = sphi 0, %s207
      %s210 = sphi 0, %s209
      %s224 = sphi 0, %s210
      %s228 = sphi 0, %s228
      %s230 = sphi 0, %s228
      %s231 = sphi 0, %s230
      %s245 = sphi 0, %s231
      %s249 = sphi 0, %s249
      %s251 = sphi 0, %s249
      %s252 = sphi 0, %s251
      %s266 = sphi 0, %s252
      %s272 = sphi 0, %s274
      %s275 = sphi 0, %s272
      %s276 = sphi 0, %s275
      %s292 = sphi 0, %s276
    $region4: #{tpu_custom_call.1} parent=1 // loop_header_branch
      %29 = sbr.rel (%p27) target = $region8
    $region5: #{tpu_custom_call.1} parent=1 // loop_body
      %s31 = ssub.s32 %s26, 1
      %s32 = ssub.s32 %s26, 2
      %s33 = sadd.s32 %s26, 1
      %s34 = ssub.s32 %s26, %s33
      %p35 = scmp.eq.s32.totalorder %s34, 0
      %s37 = sadd.s32 %s36, 1
      %s38 = scalar_select %p35, %s36, %s37
      %p41 = pneg %p35
      %p42 = scmp.eq.s32.totalorder %s26, 1
      %p43 = por %p41, %p42
      %p44 = scmp.ne.s32.totalorder %s36, %s39
      %p45 = scmp.eq.s32.totalorder %s26, 0
      %p46 = por %p44, %p45
      %p47 = scmp.ne.s32.totalorder %s36, %s39
      %p48 = scmp.eq.s32.totalorder %s31, 1
      %p49 = por %p47, %p48
      %p50 = scmp.ne.s32.totalorder %s39, %s40
      %p51 = scmp.eq.s32.totalorder %s31, 0
      %p52 = por %p50, %p51
      %p53 = scmp.ne.s32.totalorder %s39, %s40
      %p54 = scmp.eq.s32.totalorder %s32, 1
      %p55 = por %p53, %p54
      %p57 = scmp.ne.s32.totalorder %s40, %s56
      %p58 = scmp.eq.s32.totalorder %s32, 0
      %p59 = por %p57, %p58
      %s61 = sadd.s32 %s60, 1
      %p64 = scmp.eq.s32.totalorder %s26, 1
      %p65 = scmp.ne.s32.totalorder %s60, %s62
      %p66 = scmp.eq.s32.totalorder %s26, 0
      %p67 = por %p65, %p66
      %p68 = scmp.ne.s32.totalorder %s60, %s62
      %p69 = scmp.eq.s32.totalorder %s31, 1
      %p70 = por %p68, %p69
      %p71 = scmp.ne.s32.totalorder %s62, %s63
      %p72 = scmp.eq.s32.totalorder %s31, 0
      %p73 = por %p71, %p72
      %p74 = scmp.ne.s32.totalorder %s62, %s63
      %p75 = scmp.eq.s32.totalorder %s32, 1
      %p76 = por %p74, %p75
      %p78 = scmp.ne.s32.totalorder %s63, %s77
      %p79 = scmp.eq.s32.totalorder %s32, 0
      %p80 = por %p78, %p79
      %s82 = sadd.s32 %s81, 1
      %p85 = scmp.eq.s32.totalorder %s26, 1
      %p86 = scmp.ne.s32.totalorder %s81, %s83
      %p87 = scmp.eq.s32.totalorder %s26, 0
      %p88 = por %p86, %p87
      %p89 = scmp.ne.s32.totalorder %s81, %s83
      %p90 = scmp.eq.s32.totalorder %s31, 1
      %p91 = por %p89, %p90
      %p92 = scmp.ne.s32.totalorder %s83, %s84
      %p93 = scmp.eq.s32.totalorder %s31, 0
      %p94 = por %p92, %p93
      %p95 = scmp.ne.s32.totalorder %s83, %s84
      %p96 = scmp.eq.s32.totalorder %s32, 1
      %p97 = por %p95, %p96
      %p99 = scmp.ne.s32.totalorder %s84, %s98
      %p100 = scmp.eq.s32.totalorder %s32, 0
      %p101 = por %p99, %p100
      %s103 = sadd.s32 %s102, 1
      %p106 = scmp.eq.s32.totalorder %s26, 1
      %p107 = scmp.ne.s32.totalorder %s102, %s104
      %p108 = scmp.eq.s32.totalorder %s26, 0
      %p109 = por %p107, %p108
      %p110 = scmp.ne.s32.totalorder %s102, %s104
      %p111 = scmp.eq.s32.totalorder %s31, 1
      %p112 = por %p110, %p111
      %p113 = scmp.ne.s32.totalorder %s104, %s105
      %p114 = scmp.eq.s32.totalorder %s31, 0
      %p115 = por %p113, %p114
      %p116 = scmp.ne.s32.totalorder %s104, %s105
      %p117 = scmp.eq.s32.totalorder %s32, 1
      %p118 = por %p116, %p117
      %p120 = scmp.ne.s32.totalorder %s105, %s119
      %p121 = scmp.eq.s32.totalorder %s32, 0
      %p122 = por %p120, %p121
      %s124 = sadd.s32 %s123, 1
      %p127 = scmp.eq.s32.totalorder %s26, 1
      %p128 = scmp.ne.s32.totalorder %s123, %s125
      %p129 = scmp.eq.s32.totalorder %s26, 0
      %p130 = por %p128, %p129
      %p131 = scmp.ne.s32.totalorder %s123, %s125
      %p132 = scmp.eq.s32.totalorder %s31, 1
      %p133 = por %p131, %p132
      %p134 = scmp.ne.s32.totalorder %s125, %s126
      %p135 = scmp.eq.s32.totalorder %s31, 0
      %p136 = por %p134, %p135
      %p137 = scmp.ne.s32.totalorder %s125, %s126
      %p138 = scmp.eq.s32.totalorder %s32, 1
      %p139 = por %p137, %p138
      %p141 = scmp.ne.s32.totalorder %s126, %s140
      %p142 = scmp.eq.s32.totalorder %s32, 0
      %p143 = por %p141, %p142
      %s145 = sadd.s32 %s144, 1
      %p148 = scmp.eq.s32.totalorder %s26, 1
      %p149 = scmp.ne.s32.totalorder %s144, %s146
      %p150 = scmp.eq.s32.totalorder %s26, 0
      %p151 = por %p149, %p150
      %p152 = scmp.ne.s32.totalorder %s144, %s146
      %p153 = scmp.eq.s32.totalorder %s31, 1
      %p154 = por %p152, %p153
      %p155 = scmp.ne.s32.totalorder %s146, %s147
      %p156 = scmp.eq.s32.totalorder %s31, 0
      %p157 = por %p155, %p156
      %p158 = scmp.ne.s32.totalorder %s146, %s147
      %p159 = scmp.eq.s32.totalorder %s32, 1
      %p160 = por %p158, %p159
      %p162 = scmp.ne.s32.totalorder %s147, %s161
      %p163 = scmp.eq.s32.totalorder %s32, 0
      %p164 = por %p162, %p163
      %s166 = sadd.s32 %s165, 1
      %p169 = scmp.eq.s32.totalorder %s26, 1
      %p170 = scmp.ne.s32.totalorder %s165, %s167
      %p171 = scmp.eq.s32.totalorder %s26, 0
      %p172 = por %p170, %p171
      %p173 = scmp.ne.s32.totalorder %s165, %s167
      %p174 = scmp.eq.s32.totalorder %s31, 1
      %p175 = por %p173, %p174
      %p176 = scmp.ne.s32.totalorder %s167, %s168
      %p177 = scmp.eq.s32.totalorder %s31, 0
      %p178 = por %p176, %p177
      %p179 = scmp.ne.s32.totalorder %s167, %s168
      %p180 = scmp.eq.s32.totalorder %s32, 1
      %p181 = por %p179, %p180
      %p183 = scmp.ne.s32.totalorder %s168, %s182
      %p184 = scmp.eq.s32.totalorder %s32, 0
      %p185 = por %p183, %p184
      %s187 = sadd.s32 %s186, 1
      %p190 = scmp.eq.s32.totalorder %s26, 1
      %p191 = scmp.ne.s32.totalorder %s186, %s188
      %p192 = scmp.eq.s32.totalorder %s26, 0
      %p193 = por %p191, %p192
      %p194 = scmp.ne.s32.totalorder %s186, %s188
      %p195 = scmp.eq.s32.totalorder %s31, 1
      %p196 = por %p194, %p195
      %p197 = scmp.ne.s32.totalorder %s188, %s189
      %p198 = scmp.eq.s32.totalorder %s31, 0
      %p199 = por %p197, %p198
      %p200 = scmp.ne.s32.totalorder %s188, %s189
      %p201 = scmp.eq.s32.totalorder %s32, 1
      %p202 = por %p200, %p201
      %p204 = scmp.ne.s32.totalorder %s189, %s203
      %p205 = scmp.eq.s32.totalorder %s32, 0
      %p206 = por %p204, %p205
      %s208 = sadd.s32 %s207, 1
      %p211 = scmp.eq.s32.totalorder %s26, 1
      %p212 = scmp.ne.s32.totalorder %s207, %s209
      %p213 = scmp.eq.s32.totalorder %s26, 0
      %p214 = por %p212, %p213
      %p215 = scmp.ne.s32.totalorder %s207, %s209
      %p216 = scmp.eq.s32.totalorder %s31, 1
      %p217 = por %p215, %p216
      %p218 = scmp.ne.s32.totalorder %s209, %s210
      %p219 = scmp.eq.s32.totalorder %s31, 0
      %p220 = por %p218, %p219
      %p221 = scmp.ne.s32.totalorder %s209, %s210
      %p222 = scmp.eq.s32.totalorder %s32, 1
      %p223 = por %p221, %p222
      %p225 = scmp.ne.s32.totalorder %s210, %s224
      %p226 = scmp.eq.s32.totalorder %s32, 0
      %p227 = por %p225, %p226
      %s229 = sadd.s32 %s228, 1
      %p232 = scmp.eq.s32.totalorder %s26, 1
      %p233 = scmp.ne.s32.totalorder %s228, %s230
      %p234 = scmp.eq.s32.totalorder %s26, 0
      %p235 = por %p233, %p234
      %p236 = scmp.ne.s32.totalorder %s228, %s230
      %p237 = scmp.eq.s32.totalorder %s31, 1
      %p238 = por %p236, %p237
      %p239 = scmp.ne.s32.totalorder %s230, %s231
      %p240 = scmp.eq.s32.totalorder %s31, 0
      %p241 = por %p239, %p240
      %p242 = scmp.ne.s32.totalorder %s230, %s231
      %p243 = scmp.eq.s32.totalorder %s32, 1
      %p244 = por %p242, %p243
      %p246 = scmp.ne.s32.totalorder %s231, %s245
      %p247 = scmp.eq.s32.totalorder %s32, 0
      %p248 = por %p246, %p247
      %s250 = sadd.s32 %s249, 1
      %p253 = scmp.eq.s32.totalorder %s26, 1
      %p254 = scmp.ne.s32.totalorder %s249, %s251
      %p255 = scmp.eq.s32.totalorder %s26, 0
      %p256 = por %p254, %p255
      %p257 = scmp.ne.s32.totalorder %s249, %s251
      %p258 = scmp.eq.s32.totalorder %s31, 1
      %p259 = por %p257, %p258
      %p260 = scmp.ne.s32.totalorder %s251, %s252
      %p261 = scmp.eq.s32.totalorder %s31, 0
      %p262 = por %p260, %p261
      %p263 = scmp.ne.s32.totalorder %s251, %s252
      %p264 = scmp.eq.s32.totalorder %s32, 1
      %p265 = por %p263, %p264
      %p267 = scmp.ne.s32.totalorder %s252, %s266
      %p268 = scmp.eq.s32.totalorder %s32, 0
      %p269 = por %p267, %p268
      %s270 = ssub.s32 %s26, %s33
      %p271 = scmp.eq.s32.totalorder %s270, 0
      %s273 = sadd.s32 %s272, 1
      %s274 = scalar_select %p271, %s272, %s273
      %p277 = pneg %p271
      %p278 = scmp.eq.s32.totalorder %s26, 1
      %p279 = por %p277, %p278
      %p280 = scmp.ne.s32.totalorder %s272, %s275
      %p281 = scmp.eq.s32.totalorder %s26, 0
      %p282 = por %p280, %p281
      %p283 = scmp.ne.s32.totalorder %s272, %s275
      %p284 = scmp.eq.s32.totalorder %s31, 1
      %p285 = por %p283, %p284
      %p286 = scmp.ne.s32.totalorder %s275, %s276
      %p287 = scmp.eq.s32.totalorder %s31, 0
      %p288 = por %p286, %p287
      %p289 = scmp.ne.s32.totalorder %s275, %s276
      %p290 = scmp.eq.s32.totalorder %s32, 1
      %p291 = por %p289, %p290
      %p293 = scmp.ne.s32.totalorder %s276, %s292
      %p294 = scmp.eq.s32.totalorder %s32, 0
      %p295 = por %p293, %p294
      %p296 = scmp.le.s32.totalorder 1, %s26
      %p297 = scmp.lt.s32.totalorder %s26, 3
      %p298 = pnand %p296, %p297
      %p299 = pneg %p298
      // Predicated region
      $region9: #{tpu_custom_call.1} parent=5 // pred_check
        _
      $region10: #{tpu_custom_call.1} parent=5 // pred_check_branch
        %301 = sbr.rel (%p298) target = $region12
      $region11: #{tpu_custom_call.1} parent=5 // pred_region
        %s302 = ssub.s32 %s26, 1
        // Predicated region
        $region13: #{tpu_custom_call.1} parent=11 // pred_check
          %p303 = pneg %p73
        $region14: #{tpu_custom_call.1} parent=11 // pred_check_branch
          %305 = sbr.rel (%p303) target = $region16
        $region15: #{tpu_custom_call.1} parent=11 // pred_region
          %307 = vsyncadd [#allocation6], 0
          %s308 = sshll.u32 %s1, 4
          %s309 = int_to_ptr.hbm [resolvable:$true] %s308
          %s310 = sshll.u32 [#allocation5], 4
          %s311 = int_to_ptr.vmem [resolvable:$true] %s310
          %316 = dma.hbm_to_vmem [thread:$0]  %s309, 31360, %s311, [#allocation6], 320, 320, 20
        $region16: #{tpu_custom_call.1} parent=11 // pred_fallthru
          _
        // Predicated region
        $region17: #{tpu_custom_call.1} parent=11 // pred_check
          %p317 = pneg %p94
        $region18: #{tpu_custom_call.1} parent=11 // pred_check_branch
          %319 = sbr.rel (%p317) target = $region20
        $region19: #{tpu_custom_call.1} parent=11 // pred_region
          %321 = vsyncadd [#allocation6], 0
          %s323 = sshll.u32 %s2, 4
          %s324 = int_to_ptr.hbm [resolvable:$true] %s323
          %s325 = sshll.u32 [#allocation7], 4
          %s326 = int_to_ptr.vmem [resolvable:$true] %s325
          %328 = dma.hbm_to_vmem [thread:$0]  %s324, 80, %s326, [#allocation6]
        $region20: #{tpu_custom_call.1} parent=11 // pred_fallthru
          _
        // Predicated region
        $region21: #{tpu_custom_call.1} parent=11 // pred_check
          %p329 = pneg %p115
        $region22: #{tpu_custom_call.1} parent=11 // pred_check_branch
          %331 = sbr.rel (%p329) target = $region24
        $region23: #{tpu_custom_call.1} parent=11 // pred_region
          %333 = vsyncadd [#allocation9], 0
          %s334 = sshll.u32 %s3, 4
          %s335 = int_to_ptr.hbm [resolvable:$true] %s334
          %s336 = sshll.u32 [#allocation8], 4
          %s337 = int_to_ptr.vmem [resolvable:$true] %s336
          %342 = dma.hbm_to_vmem [thread:$0]  %s335, 15360, %s337, [#allocation9], 192, 192, 12
        $region24: #{tpu_custom_call.1} parent=11 // pred_fallthru
          _
        // Predicated region
        $region25: #{tpu_custom_call.1} parent=11 // pred_check
          %p343 = pneg %p136
        $region26: #{tpu_custom_call.1} parent=11 // pred_check_branch
          %345 = sbr.rel (%p343) target = $region28
        $region27: #{tpu_custom_call.1} parent=11 // pred_region
          _
        $region28: #{tpu_custom_call.1} parent=11 // pred_fallthru
          _
        // Predicated region
        $region29: #{tpu_custom_call.1} parent=11 // pred_check
          %p346 = pneg %p157
        $region30: #{tpu_custom_call.1} parent=11 // pred_check_branch
          %348 = sbr.rel (%p346) target = $region32
        $region31: #{tpu_custom_call.1} parent=11 // pred_region
          %350 = vsyncadd [#allocation9], 0
          %s351 = sshll.u32 %s5, 4
          %s352 = int_to_ptr.hbm [resolvable:$true] %s351
          %s353 = sshll.u32 [#allocation10], 4
          %s354 = int_to_ptr.vmem [resolvable:$true] %s353
          %359 = dma.hbm_to_vmem [thread:$0]  %s352, 6144, %s354, [#allocation9], 128, 128, 8
        $region32: #{tpu_custom_call.1} parent=11 // pred_fallthru
          _
        // Predicated region
        $region33: #{tpu_custom_call.1} parent=11 // pred_check
          %p360 = pneg %p178
        $region34: #{tpu_custom_call.1} parent=11 // pred_check_branch
          %362 = sbr.rel (%p360) target = $region36
        $region35: #{tpu_custom_call.1} parent=11 // pred_region
          _
        $region36: #{tpu_custom_call.1} parent=11 // pred_fallthru
          _
        // Predicated region
        $region37: #{tpu_custom_call.1} parent=11 // pred_check
          %p363 = pneg %p199
        $region38: #{tpu_custom_call.1} parent=11 // pred_check_branch
          %365 = sbr.rel (%p363) target = $region40
        $region39: #{tpu_custom_call.1} parent=11 // pred_region
          %367 = vsyncadd [#allocation12], 0
          %s368 = sshll.u32 %s7, 4
          %s369 = int_to_ptr.hbm [resolvable:$true] %s368
          %s370 = sshll.u32 [#allocation11], 4
          %s371 = int_to_ptr.vmem [resolvable:$true] %s370
          %376 = dma.hbm_to_vmem [thread:$0]  %s369, 2048, %s371, [#allocation12], 64, 64, 4
        $region40: #{tpu_custom_call.1} parent=11 // pred_fallthru
          _
        // Predicated region
        $region41: #{tpu_custom_call.1} parent=11 // pred_check
          %p377 = pneg %p220
        $region42: #{tpu_custom_call.1} parent=11 // pred_check_branch
          %379 = sbr.rel (%p377) target = $region44
        $region43: #{tpu_custom_call.1} parent=11 // pred_region
          _
        $region44: #{tpu_custom_call.1} parent=11 // pred_fallthru
          _
        // Predicated region
        $region45: #{tpu_custom_call.1} parent=11 // pred_check
          %p380 = pneg %p241
        $region46: #{tpu_custom_call.1} parent=11 // pred_check_branch
          %382 = sbr.rel (%p380) target = $region48
        $region47: #{tpu_custom_call.1} parent=11 // pred_region
          %384 = vsyncadd [#allocation12], 0
          %s385 = sshll.u32 %s9, 4
          %s386 = int_to_ptr.hbm [resolvable:$true] %s385
          %s387 = sshll.u32 [#allocation13], 4
          %s388 = int_to_ptr.vmem [resolvable:$true] %s387
          %393 = dma.hbm_to_vmem [thread:$0]  %s386, 1024, %s388, [#allocation12], 64, 64, 4
        $region48: #{tpu_custom_call.1} parent=11 // pred_fallthru
          _
        // Predicated region
        $region49: #{tpu_custom_call.1} parent=11 // pred_check
          %p394 = pneg %p262
        $region50: #{tpu_custom_call.1} parent=11 // pred_check_branch
          %396 = sbr.rel (%p394) target = $region52
        $region51: #{tpu_custom_call.1} parent=11 // pred_region
          _
        $region52: #{tpu_custom_call.1} parent=11 // pred_fallthru
          _
      $region12: #{tpu_custom_call.1} parent=5 // pred_fallthru
        _
      %p397 = scmp.lt.s32.totalorder %s26, 2
      // Predicated region
      $region53: #{tpu_custom_call.1} parent=5 // pred_check
        %p398 = pneg %p397
      $region54: #{tpu_custom_call.1} parent=5 // pred_check_branch
        %400 = sbr.rel (%p398) target = $region56
      $region55: #{tpu_custom_call.1} parent=5 // pred_region
        // Predicated region
        $region57: #{tpu_custom_call.1} parent=55 // pred_check
          %p401 = pneg %p46
        $region58: #{tpu_custom_call.1} parent=55 // pred_check_branch
          %403 = sbr.rel (%p401) target = $region60
        $region59: #{tpu_custom_call.1} parent=55 // pred_region
          %s404 = sand.u32 %s36, 1
          %s405 = scalar_lea.sflag [#allocation3], %s404
          %s406 = sand.u32 %s36, 1
          %s407 = smul.addr %s406, 56
          %s408 = scalar_lea.vmem [#allocation2], %s407
          %s409 = smul.u32 2, %s26
          %411 = vsyncadd %s405, 0
          %s412 = smul.addr %s409, 7
          %s413 = smul.addr %s412, 4
          %s414 = scalar_lea.hbm %s0, %s413
          %s415 = sshll.u32 %s414, 4
          %s416 = int_to_ptr.hbm [resolvable:$true] %s415
          %s417 = sshll.u32 %s408, 4
          %s418 = int_to_ptr.vmem [resolvable:$true] %s417
          %423 = dma.hbm_to_vmem [thread:$0]  %s416, 896, %s418, %s405, 448, 448, 28
        $region60: #{tpu_custom_call.1} parent=55 // pred_fallthru
          _
      $region56: #{tpu_custom_call.1} parent=5 // pred_fallthru
        _
      %p424 = scmp.le.s32.totalorder 1, %s26
      %p425 = scmp.lt.s32.totalorder %s26, 3
      %p426 = pnand %p424, %p425
      %p427 = pneg %p426
      // Predicated region
      $region61: #{tpu_custom_call.1} parent=5 // pred_check
        _
      $region62: #{tpu_custom_call.1} parent=5 // pred_check_branch
        %429 = sbr.rel (%p426) target = $region64
      $region63: #{tpu_custom_call.1} parent=5 // pred_region
        %s430 = ssub.s32 %s26, 1
        %s431 = sand.u32 %s39, 1
        %s432 = scalar_lea.sflag [#allocation3], %s431
        %s433 = sand.u32 %s39, 1
        %s434 = smul.addr %s433, 56
        %s435 = scalar_lea.vmem [#allocation2], %s434
        // Predicated region
        $region65: #{tpu_custom_call.1} parent=63 // pred_check
          %p436 = pneg %p52
        $region66: #{tpu_custom_call.1} parent=63 // pred_check_branch
          %438 = sbr.rel (%p436) target = $region68
        $region67: #{tpu_custom_call.1} parent=63 // pred_region
          %440 = dma.done %s432, 896
        $region68: #{tpu_custom_call.1} parent=63 // pred_fallthru
          _
        // Predicated region
        $region69: #{tpu_custom_call.1} parent=63 // pred_check
          %p441 = pneg %p73
        $region70: #{tpu_custom_call.1} parent=63 // pred_check_branch
          %443 = sbr.rel (%p441) target = $region72
        $region71: #{tpu_custom_call.1} parent=63 // pred_region
          %445 = dma.done [#allocation6], 31360
        $region72: #{tpu_custom_call.1} parent=63 // pred_fallthru
          _
        // Predicated region
        $region73: #{tpu_custom_call.1} parent=63 // pred_check
          %p446 = pneg %p94
        $region74: #{tpu_custom_call.1} parent=63 // pred_check_branch
          %448 = sbr.rel (%p446) target = $region76
        $region75: #{tpu_custom_call.1} parent=63 // pred_region
          %450 = dma.done [#allocation6], 80
        $region76: #{tpu_custom_call.1} parent=63 // pred_fallthru
          _
        // Predicated region
        $region77: #{tpu_custom_call.1} parent=63 // pred_check
          %p451 = pneg %p115
        $region78: #{tpu_custom_call.1} parent=63 // pred_check_branch
          %453 = sbr.rel (%p451) target = $region80
        $region79: #{tpu_custom_call.1} parent=63 // pred_region
          %455 = dma.done [#allocation9], 15360
        $region80: #{tpu_custom_call.1} parent=63 // pred_fallthru
          _
        // Predicated region
        $region81: #{tpu_custom_call.1} parent=63 // pred_check
          %p456 = pneg %p157
        $region82: #{tpu_custom_call.1} parent=63 // pred_check_branch
          %458 = sbr.rel (%p456) target = $region84
        $region83: #{tpu_custom_call.1} parent=63 // pred_region
          %460 = dma.done [#allocation9], 6144
        $region84: #{tpu_custom_call.1} parent=63 // pred_fallthru
          _
        // Predicated region
        $region85: #{tpu_custom_call.1} parent=63 // pred_check
          %p461 = pneg %p199
        $region86: #{tpu_custom_call.1} parent=63 // pred_check_branch
          %463 = sbr.rel (%p461) target = $region88
        $region87: #{tpu_custom_call.1} parent=63 // pred_region
          %465 = dma.done [#allocation12], 2048
        $region88: #{tpu_custom_call.1} parent=63 // pred_fallthru
          _
        // Predicated region
        $region89: #{tpu_custom_call.1} parent=63 // pred_check
          %p466 = pneg %p241
        $region90: #{tpu_custom_call.1} parent=63 // pred_check_branch
          %468 = sbr.rel (%p466) target = $region92
        $region91: #{tpu_custom_call.1} parent=63 // pred_region
          %470 = dma.done [#allocation12], 1024
        $region92: #{tpu_custom_call.1} parent=63 // pred_fallthru
          _
        %s471 = sand.u32 %s39, 1
        %s472 = scalar_lea.sflag [#allocation3], %s471
        %s473 = sand.u32 %s39, 1
        %s474 = smul.addr %s473, 56
        %s475 = scalar_lea.vmem [#allocation2], %s474
        %p476 = pneg %p52
        %p477 = pneg %p49
        %p478 = pneg %p73
        %p479 = pneg %p70
        %p480 = pneg %p94
        %p481 = pneg %p91
        %p482 = pneg %p115
        %p483 = pneg %p112
        %p484 = pneg %p136
        %p485 = pneg %p133
        %p486 = pneg %p157
        %p487 = pneg %p154
        %p488 = pneg %p178
        %p489 = pneg %p175
        %p490 = pneg %p199
        %p491 = pneg %p196
        %p492 = pneg %p220
        %p493 = pneg %p217
        %p494 = pneg %p241
        %p495 = pneg %p238
        %p496 = pneg %p262
        %p497 = pneg %p259
        %p498 = pneg %p288
        %p499 = pneg %p285
        %s500 = sand.u32 %s275, 1
        %s501 = scalar_lea.sflag [#allocation4], %s500
        %s502 = sand.u32 %s275, 1
        %s503 = smul.addr %s502, 16
        %s504 = scalar_lea.vmem [#allocation14], %s503
        %s505 = smul.u32 2, %s31
        %s506 = smul.u32 2, %s31
        %v508 = vld [vmem:[%s435] sm:$0xff]
        %v509 = vld [vmem:[%s435 + $0x8] sm:$0xff]
        %v510 = vld [vmem:[%s435 + $0x10] sm:$0xff]
        %v511 = vld [vmem:[%s435 + $0x18] sm:$0xf]
        %v512 = vld [vmem:[%s435 + $0x1c] sm:$0xff]
        %v513 = vld [vmem:[%s435 + $0x24] sm:$0xff]
        %v514 = vld [vmem:[%s435 + $0x2c] sm:$0xff]
        %v515 = vld [vmem:[%s435 + $0x34] sm:$0xf]
        %v516 = vld [vmem:[#allocation5] sm:$0xff]
        %v517 = vld [vmem:[#allocation5 + $0x8] sm:$0xff]
        %v518 = vld [vmem:[#allocation5 + $0x10] sm:$0xf]
        %v519 = vld [vmem:[#allocation5 + $0x14] sm:$0xff]
        %v520 = vld [vmem:[#allocation5 + $0x1c] sm:$0xff]
        %v521 = vld [vmem:[#allocation5 + $0x24] sm:$0xf]
        %v522 = vld [vmem:[#allocation5 + $0x28] sm:$0xff]
        %v523 = vld [vmem:[#allocation5 + $0x30] sm:$0xff]
        %v524 = vld [vmem:[#allocation5 + $0x38] sm:$0xf]
        %v525 = vld [vmem:[#allocation5 + $0x3c] sm:$0xff]
        %v526 = vld [vmem:[#allocation5 + $0x44] sm:$0xff]
        %v527 = vld [vmem:[#allocation5 + $0x4c] sm:$0xf]
        %v528 = vld [vmem:[#allocation5 + $0x50] sm:$0xff]
        %v529 = vld [vmem:[#allocation5 + $0x58] sm:$0xff]
        %v530 = vld [vmem:[#allocation5 + $0x60] sm:$0xf]
        %v531 = vld [vmem:[#allocation5 + $0x64] sm:$0xff]
        %v532 = vld [vmem:[#allocation5 + $0x6c] sm:$0xff]
        %v533 = vld [vmem:[#allocation5 + $0x74] sm:$0xf]
        %v534 = vld [vmem:[#allocation5 + $0x78] sm:$0xff]
        %v535 = vld [vmem:[#allocation5 + $0x80] sm:$0xff]
        %v536 = vld [vmem:[#allocation5 + $0x88] sm:$0xf]
        %v537 = vld [vmem:[#allocation5 + $0x8c] sm:$0xff]
        %v538 = vld [vmem:[#allocation5 + $0x94] sm:$0xff]
        %v539 = vld [vmem:[#allocation5 + $0x9c] sm:$0xf]
        %v540 = vld [vmem:[#allocation5 + $0xa0] sm:$0xff]
        %v541 = vld [vmem:[#allocation5 + $0xa8] sm:$0xff]
        %v542 = vld [vmem:[#allocation5 + $0xb0] sm:$0xf]
        %v543 = vld [vmem:[#allocation5 + $0xb4] sm:$0xff]
        %v544 = vld [vmem:[#allocation5 + $0xbc] sm:$0xff]
        %v545 = vld [vmem:[#allocation5 + $0xc4] sm:$0xf]
        %v546 = vld [vmem:[#allocation5 + $0xc8] sm:$0xff]
        %v547 = vld [vmem:[#allocation5 + $0xd0] sm:$0xff]
        %v548 = vld [vmem:[#allocation5 + $0xd8] sm:$0xf]
        %v549 = vld [vmem:[#allocation5 + $0xdc] sm:$0xff]
        %v550 = vld [vmem:[#allocation5 + $0xe4] sm:$0xff]
        %v551 = vld [vmem:[#allocation5 + $0xec] sm:$0xf]
        %v552 = vld [vmem:[#allocation5 + $0xf0] sm:$0xff]
        %v553 = vld [vmem:[#allocation5 + $0xf8] sm:$0xff]
        %v554 = vld [vmem:[#allocation5 + $0x100] sm:$0xf]
        %v555 = vld [vmem:[#allocation5 + $0x104] sm:$0xff]
        %v556 = vld [vmem:[#allocation5 + $0x10c] sm:$0xff]
        %v557 = vld [vmem:[#allocation5 + $0x114] sm:$0xf]
        %v558 = vld [vmem:[#allocation5 + $0x118] sm:$0xff]
        %v559 = vld [vmem:[#allocation5 + $0x120] sm:$0xff]
        %v560 = vld [vmem:[#allocation5 + $0x128] sm:$0xf]
        %v561 = vld [vmem:[#allocation5 + $0x12c] sm:$0xff]
        %v562 = vld [vmem:[#allocation5 + $0x134] sm:$0xff]
        %v563 = vld [vmem:[#allocation5 + $0x13c] sm:$0xf]
        %v564 = vld [vmem:[#allocation5 + $0x140] sm:$0xff]
        %v565 = vld [vmem:[#allocation5 + $0x148] sm:$0xff]
        %v566 = vld [vmem:[#allocation5 + $0x150] sm:$0xf]
        %v567 = vld [vmem:[#allocation5 + $0x154] sm:$0xff]
        %v568 = vld [vmem:[#allocation5 + $0x15c] sm:$0xff]
        %v569 = vld [vmem:[#allocation5 + $0x164] sm:$0xf]
        %v570 = vld [vmem:[#allocation5 + $0x168] sm:$0xff]
        %v571 = vld [vmem:[#allocation5 + $0x170] sm:$0xff]
        %v572 = vld [vmem:[#allocation5 + $0x178] sm:$0xf]
        %v573 = vld [vmem:[#allocation5 + $0x17c] sm:$0xff]
        %v574 = vld [vmem:[#allocation5 + $0x184] sm:$0xff]
        %v575 = vld [vmem:[#allocation5 + $0x18c] sm:$0xf]
        %v576 = vld [vmem:[#allocation5 + $0x190] sm:$0xff]
        %v577 = vld [vmem:[#allocation5 + $0x198] sm:$0xff]
        %v578 = vld [vmem:[#allocation5 + $0x1a0] sm:$0xf]
        %v579 = vld [vmem:[#allocation5 + $0x1a4] sm:$0xff]
        %v580 = vld [vmem:[#allocation5 + $0x1ac] sm:$0xff]
        %v581 = vld [vmem:[#allocation5 + $0x1b4] sm:$0xf]
        %v582 = vld [vmem:[#allocation5 + $0x1b8] sm:$0xff]
        %v583 = vld [vmem:[#allocation5 + $0x1c0] sm:$0xff]
        %v584 = vld [vmem:[#allocation5 + $0x1c8] sm:$0xf]
        %v585 = vld [vmem:[#allocation5 + $0x1cc] sm:$0xff]
        %v586 = vld [vmem:[#allocation5 + $0x1d4] sm:$0xff]
        %v587 = vld [vmem:[#allocation5 + $0x1dc] sm:$0xf]
        %v588 = vld [vmem:[#allocation5 + $0x1e0] sm:$0xff]
        %v589 = vld [vmem:[#allocation5 + $0x1e8] sm:$0xff]
        %v590 = vld [vmem:[#allocation5 + $0x1f0] sm:$0xf]
        %v591 = vld [vmem:[#allocation5 + $0x1f4] sm:$0xff]
        %v592 = vld [vmem:[#allocation5 + $0x1fc] sm:$0xff]
        %v593 = vld [vmem:[#allocation5 + $0x204] sm:$0xf]
        %v594 = vld [vmem:[#allocation5 + $0x208] sm:$0xff]
        %v595 = vld [vmem:[#allocation5 + $0x210] sm:$0xff]
        %v596 = vld [vmem:[#allocation5 + $0x218] sm:$0xf]
        %v597 = vld [vmem:[#allocation5 + $0x21c] sm:$0xff]
        %v598 = vld [vmem:[#allocation5 + $0x224] sm:$0xff]
        %v599 = vld [vmem:[#allocation5 + $0x22c] sm:$0xf]
        %v600 = vld [vmem:[#allocation5 + $0x230] sm:$0xff]
        %v601 = vld [vmem:[#allocation5 + $0x238] sm:$0xff]
        %v602 = vld [vmem:[#allocation5 + $0x240] sm:$0xf]
        %v603 = vld [vmem:[#allocation5 + $0x244] sm:$0xff]
        %v604 = vld [vmem:[#allocation5 + $0x24c] sm:$0xff]
        %v605 = vld [vmem:[#allocation5 + $0x254] sm:$0xf]
        %v606 = vld [vmem:[#allocation5 + $0x258] sm:$0xff]
        %v607 = vld [vmem:[#allocation5 + $0x260] sm:$0xff]
        %v608 = vld [vmem:[#allocation5 + $0x268] sm:$0xf]
        %v609 = vld [vmem:[#allocation5 + $0x26c] sm:$0xff]
        %v610 = vld [vmem:[#allocation5 + $0x274] sm:$0xff]
        %v611 = vld [vmem:[#allocation5 + $0x27c] sm:$0xf]
        %v612 = vld [vmem:[#allocation5 + $0x280] sm:$0xff]
        %v613 = vld [vmem:[#allocation5 + $0x288] sm:$0xff]
        %v614 = vld [vmem:[#allocation5 + $0x290] sm:$0xf]
        %v615 = vld [vmem:[#allocation5 + $0x294] sm:$0xff]
        %v616 = vld [vmem:[#allocation5 + $0x29c] sm:$0xff]
        %v617 = vld [vmem:[#allocation5 + $0x2a4] sm:$0xf]
        %v618 = vld [vmem:[#allocation5 + $0x2a8] sm:$0xff]
        %v619 = vld [vmem:[#allocation5 + $0x2b0] sm:$0xff]
        %v620 = vld [vmem:[#allocation5 + $0x2b8] sm:$0xf]
        %v621 = vld [vmem:[#allocation5 + $0x2bc] sm:$0xff]
        %v622 = vld [vmem:[#allocation5 + $0x2c4] sm:$0xff]
        %v623 = vld [vmem:[#allocation5 + $0x2cc] sm:$0xf]
        %v624 = vld [vmem:[#allocation5 + $0x2d0] sm:$0xff]
        %v625 = vld [vmem:[#allocation5 + $0x2d8] sm:$0xff]
        %v626 = vld [vmem:[#allocation5 + $0x2e0] sm:$0xf]
        %v627 = vld [vmem:[#allocation5 + $0x2e4] sm:$0xff]
        %v628 = vld [vmem:[#allocation5 + $0x2ec] sm:$0xff]
        %v629 = vld [vmem:[#allocation5 + $0x2f4] sm:$0xf]
        %v630 = vld [vmem:[#allocation5 + $0x2f8] sm:$0xff]
        %v631 = vld [vmem:[#allocation5 + $0x300] sm:$0xff]
        %v632 = vld [vmem:[#allocation5 + $0x308] sm:$0xf]
        %v633 = vld [vmem:[#allocation5 + $0x30c] sm:$0xff]
        %v634 = vld [vmem:[#allocation5 + $0x314] sm:$0xff]
        %v635 = vld [vmem:[#allocation5 + $0x31c] sm:$0xf]
        %v636 = vld [vmem:[#allocation5 + $0x320] sm:$0xff]
        %v637 = vld [vmem:[#allocation5 + $0x328] sm:$0xff]
        %v638 = vld [vmem:[#allocation5 + $0x330] sm:$0xf]
        %v639 = vld [vmem:[#allocation5 + $0x334] sm:$0xff]
        %v640 = vld [vmem:[#allocation5 + $0x33c] sm:$0xff]
        %v641 = vld [vmem:[#allocation5 + $0x344] sm:$0xf]
        %v642 = vld [vmem:[#allocation5 + $0x348] sm:$0xff]
        %v643 = vld [vmem:[#allocation5 + $0x350] sm:$0xff]
        %v644 = vld [vmem:[#allocation5 + $0x358] sm:$0xf]
        %v645 = vld [vmem:[#allocation5 + $0x35c] sm:$0xff]
        %v646 = vld [vmem:[#allocation5 + $0x364] sm:$0xff]
        %v647 = vld [vmem:[#allocation5 + $0x36c] sm:$0xf]
        %v648 = vld [vmem:[#allocation5 + $0x370] sm:$0xff]
        %v649 = vld [vmem:[#allocation5 + $0x378] sm:$0xff]
        %v650 = vld [vmem:[#allocation5 + $0x380] sm:$0xf]
        %v651 = vld [vmem:[#allocation5 + $0x384] sm:$0xff]
        %v652 = vld [vmem:[#allocation5 + $0x38c] sm:$0xff]
        %v653 = vld [vmem:[#allocation5 + $0x394] sm:$0xf]
        %v654 = vld [vmem:[#allocation5 + $0x398] sm:$0xff]
        %v655 = vld [vmem:[#allocation5 + $0x3a0] sm:$0xff]
        %v656 = vld [vmem:[#allocation5 + $0x3a8] sm:$0xf]
        %v657 = vld [vmem:[#allocation5 + $0x3ac] sm:$0xff]
        %v658 = vld [vmem:[#allocation5 + $0x3b4] sm:$0xff]
        %v659 = vld [vmem:[#allocation5 + $0x3bc] sm:$0xf]
        %v660 = vld [vmem:[#allocation5 + $0x3c0] sm:$0xff]
        %v661 = vld [vmem:[#allocation5 + $0x3c8] sm:$0xff]
        %v662 = vld [vmem:[#allocation5 + $0x3d0] sm:$0xf]
        %v663 = vld [vmem:[#allocation5 + $0x3d4] sm:$0xff]
        %v664 = vld [vmem:[#allocation5 + $0x3dc] sm:$0xff]
        %v665 = vld [vmem:[#allocation5 + $0x3e4] sm:$0xf]
        %v666 = vld [vmem:[#allocation5 + $0x3e8] sm:$0xff]
        %v667 = vld [vmem:[#allocation5 + $0x3f0] sm:$0xff]
        %v668 = vld [vmem:[#allocation5 + $0x3f8] sm:$0xf]
        %v669 = vld [vmem:[#allocation5 + $0x3fc] sm:$0xff]
        %v670 = vld [vmem:[#allocation5 + $0x404] sm:$0xff]
        %v671 = vld [vmem:[#allocation5 + $0x40c] sm:$0xf]
        %v672 = vld [vmem:[#allocation5 + $0x410] sm:$0xff]
        %v673 = vld [vmem:[#allocation5 + $0x418] sm:$0xff]
        %v674 = vld [vmem:[#allocation5 + $0x420] sm:$0xf]
        %v675 = vld [vmem:[#allocation5 + $0x424] sm:$0xff]
        %v676 = vld [vmem:[#allocation5 + $0x42c] sm:$0xff]
        %v677 = vld [vmem:[#allocation5 + $0x434] sm:$0xf]
        %v678 = vld [vmem:[#allocation5 + $0x438] sm:$0xff]
        %v679 = vld [vmem:[#allocation5 + $0x440] sm:$0xff]
        %v680 = vld [vmem:[#allocation5 + $0x448] sm:$0xf]
        %v681 = vld [vmem:[#allocation5 + $0x44c] sm:$0xff]
        %v682 = vld [vmem:[#allocation5 + $0x454] sm:$0xff]
        %v683 = vld [vmem:[#allocation5 + $0x45c] sm:$0xf]
        %v684 = vld [vmem:[#allocation5 + $0x460] sm:$0xff]
        %v685 = vld [vmem:[#allocation5 + $0x468] sm:$0xff]
        %v686 = vld [vmem:[#allocation5 + $0x470] sm:$0xf]
        %v687 = vld [vmem:[#allocation5 + $0x474] sm:$0xff]
        %v688 = vld [vmem:[#allocation5 + $0x47c] sm:$0xff]
        %v689 = vld [vmem:[#allocation5 + $0x484] sm:$0xf]
        %v690 = vld [vmem:[#allocation5 + $0x488] sm:$0xff]
        %v691 = vld [vmem:[#allocation5 + $0x490] sm:$0xff]
        %v692 = vld [vmem:[#allocation5 + $0x498] sm:$0xf]
        %v693 = vld [vmem:[#allocation5 + $0x49c] sm:$0xff]
        %v694 = vld [vmem:[#allocation5 + $0x4a4] sm:$0xff]
        %v695 = vld [vmem:[#allocation5 + $0x4ac] sm:$0xf]
        %v696 = vld [vmem:[#allocation5 + $0x4b0] sm:$0xff]
        %v697 = vld [vmem:[#allocation5 + $0x4b8] sm:$0xff]
        %v698 = vld [vmem:[#allocation5 + $0x4c0] sm:$0xf]
        %v699 = vld [vmem:[#allocation5 + $0x4c4] sm:$0xff]
        %v700 = vld [vmem:[#allocation5 + $0x4cc] sm:$0xff]
        %v701 = vld [vmem:[#allocation5 + $0x4d4] sm:$0xf]
        %v702 = vld [vmem:[#allocation5 + $0x4d8] sm:$0xff]
        %v703 = vld [vmem:[#allocation5 + $0x4e0] sm:$0xff]
        %v704 = vld [vmem:[#allocation5 + $0x4e8] sm:$0xf]
        %v705 = vld [vmem:[#allocation5 + $0x4ec] sm:$0xff]
        %v706 = vld [vmem:[#allocation5 + $0x4f4] sm:$0xff]
        %v707 = vld [vmem:[#allocation5 + $0x4fc] sm:$0xf]
        %v708 = vld [vmem:[#allocation5 + $0x500] sm:$0xff]
        %v709 = vld [vmem:[#allocation5 + $0x508] sm:$0xff]
        %v710 = vld [vmem:[#allocation5 + $0x510] sm:$0xf]
        %v711 = vld [vmem:[#allocation5 + $0x514] sm:$0xff]
        %v712 = vld [vmem:[#allocation5 + $0x51c] sm:$0xff]
        %v713 = vld [vmem:[#allocation5 + $0x524] sm:$0xf]
        %v714 = vld [vmem:[#allocation5 + $0x528] sm:$0xff]
        %v715 = vld [vmem:[#allocation5 + $0x530] sm:$0xff]
        %v716 = vld [vmem:[#allocation5 + $0x538] sm:$0xf]
        %v717 = vld [vmem:[#allocation5 + $0x53c] sm:$0xff]
        %v718 = vld [vmem:[#allocation5 + $0x544] sm:$0xff]
        %v719 = vld [vmem:[#allocation5 + $0x54c] sm:$0xf]
        %v720 = vld [vmem:[#allocation5 + $0x550] sm:$0xff]
        %v721 = vld [vmem:[#allocation5 + $0x558] sm:$0xff]
        %v722 = vld [vmem:[#allocation5 + $0x560] sm:$0xf]
        %v723 = vld [vmem:[#allocation5 + $0x564] sm:$0xff]
        %v724 = vld [vmem:[#allocation5 + $0x56c] sm:$0xff]
        %v725 = vld [vmem:[#allocation5 + $0x574] sm:$0xf]
        %v726 = vld [vmem:[#allocation5 + $0x578] sm:$0xff]
        %v727 = vld [vmem:[#allocation5 + $0x580] sm:$0xff]
        %v728 = vld [vmem:[#allocation5 + $0x588] sm:$0xf]
        %v729 = vld [vmem:[#allocation5 + $0x58c] sm:$0xff]
        %v730 = vld [vmem:[#allocation5 + $0x594] sm:$0xff]
        %v731 = vld [vmem:[#allocation5 + $0x59c] sm:$0xf]
        %v732 = vld [vmem:[#allocation5 + $0x5a0] sm:$0xff]
        %v733 = vld [vmem:[#allocation5 + $0x5a8] sm:$0xff]
        %v734 = vld [vmem:[#allocation5 + $0x5b0] sm:$0xf]
        %v735 = vld [vmem:[#allocation5 + $0x5b4] sm:$0xff]
        %v736 = vld [vmem:[#allocation5 + $0x5bc] sm:$0xff]
        %v737 = vld [vmem:[#allocation5 + $0x5c4] sm:$0xf]
        %v738 = vld [vmem:[#allocation5 + $0x5c8] sm:$0xff]
        %v739 = vld [vmem:[#allocation5 + $0x5d0] sm:$0xff]
        %v740 = vld [vmem:[#allocation5 + $0x5d8] sm:$0xf]
        %v741 = vld [vmem:[#allocation5 + $0x5dc] sm:$0xff]
        %v742 = vld [vmem:[#allocation5 + $0x5e4] sm:$0xff]
        %v743 = vld [vmem:[#allocation5 + $0x5ec] sm:$0xf]
        %v744 = vld [vmem:[#allocation5 + $0x5f0] sm:$0xff]
        %v745 = vld [vmem:[#allocation5 + $0x5f8] sm:$0xff]
        %v746 = vld [vmem:[#allocation5 + $0x600] sm:$0xf]
        %v747 = vld [vmem:[#allocation5 + $0x604] sm:$0xff]
        %v748 = vld [vmem:[#allocation5 + $0x60c] sm:$0xff]
        %v749 = vld [vmem:[#allocation5 + $0x614] sm:$0xf]
        %v750 = vld [vmem:[#allocation5 + $0x618] sm:$0xff]
        %v751 = vld [vmem:[#allocation5 + $0x620] sm:$0xff]
        %v752 = vld [vmem:[#allocation5 + $0x628] sm:$0xf]
        %v753 = vld [vmem:[#allocation5 + $0x62c] sm:$0xff]
        %v754 = vld [vmem:[#allocation5 + $0x634] sm:$0xff]
        %v755 = vld [vmem:[#allocation5 + $0x63c] sm:$0xf]
        %v756 = vld [vmem:[#allocation5 + $0x640] sm:$0xff]
        %v757 = vld [vmem:[#allocation5 + $0x648] sm:$0xff]
        %v758 = vld [vmem:[#allocation5 + $0x650] sm:$0xf]
        %v759 = vld [vmem:[#allocation5 + $0x654] sm:$0xff]
        %v760 = vld [vmem:[#allocation5 + $0x65c] sm:$0xff]
        %v761 = vld [vmem:[#allocation5 + $0x664] sm:$0xf]
        %v762 = vld [vmem:[#allocation5 + $0x668] sm:$0xff]
        %v763 = vld [vmem:[#allocation5 + $0x670] sm:$0xff]
        %v764 = vld [vmem:[#allocation5 + $0x678] sm:$0xf]
        %v765 = vld [vmem:[#allocation5 + $0x67c] sm:$0xff]
        %v766 = vld [vmem:[#allocation5 + $0x684] sm:$0xff]
        %v767 = vld [vmem:[#allocation5 + $0x68c] sm:$0xf]
        %v768 = vld [vmem:[#allocation5 + $0x690] sm:$0xff]
        %v769 = vld [vmem:[#allocation5 + $0x698] sm:$0xff]
        %v770 = vld [vmem:[#allocation5 + $0x6a0] sm:$0xf]
        %v771 = vld [vmem:[#allocation5 + $0x6a4] sm:$0xff]
        %v772 = vld [vmem:[#allocation5 + $0x6ac] sm:$0xff]
        %v773 = vld [vmem:[#allocation5 + $0x6b4] sm:$0xf]
        %v774 = vld [vmem:[#allocation5 + $0x6b8] sm:$0xff]
        %v775 = vld [vmem:[#allocation5 + $0x6c0] sm:$0xff]
        %v776 = vld [vmem:[#allocation5 + $0x6c8] sm:$0xf]
        %v777 = vld [vmem:[#allocation5 + $0x6cc] sm:$0xff]
        %v778 = vld [vmem:[#allocation5 + $0x6d4] sm:$0xff]
        %v779 = vld [vmem:[#allocation5 + $0x6dc] sm:$0xf]
        %v780 = vld [vmem:[#allocation5 + $0x6e0] sm:$0xff]
        %v781 = vld [vmem:[#allocation5 + $0x6e8] sm:$0xff]
        %v782 = vld [vmem:[#allocation5 + $0x6f0] sm:$0xf]
        %v783 = vld [vmem:[#allocation5 + $0x6f4] sm:$0xff]
        %v784 = vld [vmem:[#allocation5 + $0x6fc] sm:$0xff]
        %v785 = vld [vmem:[#allocation5 + $0x704] sm:$0xf]
        %v786 = vld [vmem:[#allocation5 + $0x708] sm:$0xff]
        %v787 = vld [vmem:[#allocation5 + $0x710] sm:$0xff]
        %v788 = vld [vmem:[#allocation5 + $0x718] sm:$0xf]
        %v789 = vld [vmem:[#allocation5 + $0x71c] sm:$0xff]
        %v790 = vld [vmem:[#allocation5 + $0x724] sm:$0xff]
        %v791 = vld [vmem:[#allocation5 + $0x72c] sm:$0xf]
        %v792 = vld [vmem:[#allocation5 + $0x730] sm:$0xff]
        %v793 = vld [vmem:[#allocation5 + $0x738] sm:$0xff]
        %v794 = vld [vmem:[#allocation5 + $0x740] sm:$0xf]
        %v795 = vld [vmem:[#allocation5 + $0x744] sm:$0xff]
        %v796 = vld [vmem:[#allocation5 + $0x74c] sm:$0xff]
        %v797 = vld [vmem:[#allocation5 + $0x754] sm:$0xf]
        %v798 = vld [vmem:[#allocation5 + $0x758] sm:$0xff]
        %v799 = vld [vmem:[#allocation5 + $0x760] sm:$0xff]
        %v800 = vld [vmem:[#allocation5 + $0x768] sm:$0xf]
        %v801 = vld [vmem:[#allocation5 + $0x76c] sm:$0xff]
        %v802 = vld [vmem:[#allocation5 + $0x774] sm:$0xff]
        %v803 = vld [vmem:[#allocation5 + $0x77c] sm:$0xf]
        %v804 = vld [vmem:[#allocation5 + $0x780] sm:$0xff]
        %v805 = vld [vmem:[#allocation5 + $0x788] sm:$0xff]
        %v806 = vld [vmem:[#allocation5 + $0x790] sm:$0xf]
        %v807 = vld [vmem:[#allocation5 + $0x794] sm:$0xff]
        %v808 = vld [vmem:[#allocation5 + $0x79c] sm:$0xff]
        %v809 = vld [vmem:[#allocation5 + $0x7a4] sm:$0xf]
        %v810 = vld [vmem:[#allocation7] sm:$0x1f]
        %v812 = vperm.slane %v810, 0
        %v813 = vperm.slane %v810, 1
        %v814 = vperm.slane %v810, 2
        %v815 = vperm.slane %v810, 3
        %v816 = vperm.slane %v810, 4
        %v830 = vunpack.c.l.b16 %v508
        %v831 = vunpack.c.h.b16 %v508
        %v832 = vunpack.c.l.b16 %v509
        %v833 = vunpack.c.h.b16 %v509
        %v834 = vunpack.c.l.b16 %v510
        %v835 = vunpack.c.h.b16 %v510
        %v836 = vunpack.c.l.b16 %v511
        %v837 = vunpack.c.l.b16 %v512
        %v838 = vunpack.c.h.b16 %v512
        %v839 = vunpack.c.l.b16 %v513
        %v840 = vunpack.c.h.b16 %v513
        %v841 = vunpack.c.l.b16 %v514
        %v842 = vunpack.c.h.b16 %v514
        %v843 = vunpack.c.l.b16 %v515
        %v844 = vpack.c.b16 %v837, %v830
        %v845 = vpack.c.b16 %v838, %v831
        %v846 = vpack.c.b16 %v839, %v832
        %v847 = vpack.c.b16 %v840, %v833
        %v848 = vpack.c.b16 %v841, %v834
        %v849 = vpack.c.b16 %v842, %v835
        %v850 = vpack.c.b16 %v843, %v836
        %v1151 = vunpack.c.l.b16 %v516
        %v1152 = vunpack.c.h.b16 %v516
        %v1153 = vunpack.c.l.b16 %v517
        %v1154 = vunpack.c.h.b16 %v517
        %v1155 = vunpack.c.l.b16 %v518
        %v1156 = vunpack.c.l.b16 %v519
        %v1157 = vunpack.c.h.b16 %v519
        %v1158 = vunpack.c.l.b16 %v520
        %v1159 = vunpack.c.h.b16 %v520
        %v1160 = vunpack.c.l.b16 %v521
        %v1161 = vunpack.c.l.b16 %v522
        %v1162 = vunpack.c.h.b16 %v522
        %v1163 = vunpack.c.l.b16 %v523
        %v1164 = vunpack.c.h.b16 %v523
        %v1165 = vunpack.c.l.b16 %v524
        %v1166 = vunpack.c.l.b16 %v525
        %v1167 = vunpack.c.h.b16 %v525
        %v1168 = vunpack.c.l.b16 %v526
        %v1169 = vunpack.c.h.b16 %v526
        %v1170 = vunpack.c.l.b16 %v527
        %v1171 = vunpack.c.l.b16 %v528
        %v1172 = vunpack.c.h.b16 %v528
        %v1173 = vunpack.c.l.b16 %v529
        %v1174 = vunpack.c.h.b16 %v529
        %v1175 = vunpack.c.l.b16 %v530
        %v1176 = vunpack.c.l.b16 %v531
        %v1177 = vunpack.c.h.b16 %v531
        %v1178 = vunpack.c.l.b16 %v532
        %v1179 = vunpack.c.h.b16 %v532
        %v1180 = vunpack.c.l.b16 %v533
        %v1181 = vunpack.c.l.b16 %v534
        %v1182 = vunpack.c.h.b16 %v534
        %v1183 = vunpack.c.l.b16 %v535
        %v1184 = vunpack.c.h.b16 %v535
        %v1185 = vunpack.c.l.b16 %v536
        %v1186 = vunpack.c.l.b16 %v537
        %v1187 = vunpack.c.h.b16 %v537
        %v1188 = vunpack.c.l.b16 %v538
        %v1189 = vunpack.c.h.b16 %v538
        %v1190 = vunpack.c.l.b16 %v539
        %v1191 = vunpack.c.l.b16 %v540
        %v1192 = vunpack.c.h.b16 %v540
        %v1193 = vunpack.c.l.b16 %v541
        %v1194 = vunpack.c.h.b16 %v541
        %v1195 = vunpack.c.l.b16 %v542
        %v1196 = vunpack.c.l.b16 %v543
        %v1197 = vunpack.c.h.b16 %v543
        %v1198 = vunpack.c.l.b16 %v544
        %v1199 = vunpack.c.h.b16 %v544
        %v1200 = vunpack.c.l.b16 %v545
        %v1201 = vunpack.c.l.b16 %v546
        %v1202 = vunpack.c.h.b16 %v546
        %v1203 = vunpack.c.l.b16 %v547
        %v1204 = vunpack.c.h.b16 %v547
        %v1205 = vunpack.c.l.b16 %v548
        %v1206 = vunpack.c.l.b16 %v549
        %v1207 = vunpack.c.h.b16 %v549
        %v1208 = vunpack.c.l.b16 %v550
        %v1209 = vunpack.c.h.b16 %v550
        %v1210 = vunpack.c.l.b16 %v551
        %v1211 = vunpack.c.l.b16 %v552
        %v1212 = vunpack.c.h.b16 %v552
        %v1213 = vunpack.c.l.b16 %v553
        %v1214 = vunpack.c.h.b16 %v553
        %v1215 = vunpack.c.l.b16 %v554
        %v1216 = vunpack.c.l.b16 %v555
        %v1217 = vunpack.c.h.b16 %v555
        %v1218 = vunpack.c.l.b16 %v556
        %v1219 = vunpack.c.h.b16 %v556
        %v1220 = vunpack.c.l.b16 %v557
        %v1221 = vunpack.c.l.b16 %v558
        %v1222 = vunpack.c.h.b16 %v558
        %v1223 = vunpack.c.l.b16 %v559
        %v1224 = vunpack.c.h.b16 %v559
        %v1225 = vunpack.c.l.b16 %v560
        %v1226 = vunpack.c.l.b16 %v561
        %v1227 = vunpack.c.h.b16 %v561
        %v1228 = vunpack.c.l.b16 %v562
        %v1229 = vunpack.c.h.b16 %v562
        %v1230 = vunpack.c.l.b16 %v563
        %v1231 = vunpack.c.l.b16 %v564
        %v1232 = vunpack.c.h.b16 %v564
        %v1233 = vunpack.c.l.b16 %v565
        %v1234 = vunpack.c.h.b16 %v565
        %v1235 = vunpack.c.l.b16 %v566
        %v1236 = vunpack.c.l.b16 %v567
        %v1237 = vunpack.c.h.b16 %v567
        %v1238 = vunpack.c.l.b16 %v568
        %v1239 = vunpack.c.h.b16 %v568
        %v1240 = vunpack.c.l.b16 %v569
        %v1241 = vunpack.c.l.b16 %v570
        %v1242 = vunpack.c.h.b16 %v570
        %v1243 = vunpack.c.l.b16 %v571
        %v1244 = vunpack.c.h.b16 %v571
        %v1245 = vunpack.c.l.b16 %v572
        %v1246 = vunpack.c.l.b16 %v573
        %v1247 = vunpack.c.h.b16 %v573
        %v1248 = vunpack.c.l.b16 %v574
        %v1249 = vunpack.c.h.b16 %v574
        %v1250 = vunpack.c.l.b16 %v575
        %v1251 = vunpack.c.l.b16 %v576
        %v1252 = vunpack.c.h.b16 %v576
        %v1253 = vunpack.c.l.b16 %v577
        %v1254 = vunpack.c.h.b16 %v577
        %v1255 = vunpack.c.l.b16 %v578
        %v1256 = vunpack.c.l.b16 %v579
        %v1257 = vunpack.c.h.b16 %v579
        %v1258 = vunpack.c.l.b16 %v580
        %v1259 = vunpack.c.h.b16 %v580
        %v1260 = vunpack.c.l.b16 %v581
        %v1261 = vunpack.c.l.b16 %v582
        %v1262 = vunpack.c.h.b16 %v582
        %v1263 = vunpack.c.l.b16 %v583
        %v1264 = vunpack.c.h.b16 %v583
        %v1265 = vunpack.c.l.b16 %v584
        %v1266 = vunpack.c.l.b16 %v585
        %v1267 = vunpack.c.h.b16 %v585
        %v1268 = vunpack.c.l.b16 %v586
        %v1269 = vunpack.c.h.b16 %v586
        %v1270 = vunpack.c.l.b16 %v587
        %v1271 = vunpack.c.l.b16 %v588
        %v1272 = vunpack.c.h.b16 %v588
        %v1273 = vunpack.c.l.b16 %v589
        %v1274 = vunpack.c.h.b16 %v589
        %v1275 = vunpack.c.l.b16 %v590
        %v1276 = vunpack.c.l.b16 %v591
        %v1277 = vunpack.c.h.b16 %v591
        %v1278 = vunpack.c.l.b16 %v592
        %v1279 = vunpack.c.h.b16 %v592
        %v1280 = vunpack.c.l.b16 %v593
        %v1281 = vunpack.c.l.b16 %v594
        %v1282 = vunpack.c.h.b16 %v594
        %v1283 = vunpack.c.l.b16 %v595
        %v1284 = vunpack.c.h.b16 %v595
        %v1285 = vunpack.c.l.b16 %v596
        %v1286 = vunpack.c.l.b16 %v597
        %v1287 = vunpack.c.h.b16 %v597
        %v1288 = vunpack.c.l.b16 %v598
        %v1289 = vunpack.c.h.b16 %v598
        %v1290 = vunpack.c.l.b16 %v599
        %v1291 = vunpack.c.l.b16 %v600
        %v1292 = vunpack.c.h.b16 %v600
        %v1293 = vunpack.c.l.b16 %v601
        %v1294 = vunpack.c.h.b16 %v601
        %v1295 = vunpack.c.l.b16 %v602
        %v1296 = vunpack.c.l.b16 %v603
        %v1297 = vunpack.c.h.b16 %v603
        %v1298 = vunpack.c.l.b16 %v604
        %v1299 = vunpack.c.h.b16 %v604
        %v1300 = vunpack.c.l.b16 %v605
        %v1301 = vunpack.c.l.b16 %v606
        %v1302 = vunpack.c.h.b16 %v606
        %v1303 = vunpack.c.l.b16 %v607
        %v1304 = vunpack.c.h.b16 %v607
        %v1305 = vunpack.c.l.b16 %v608
        %v1306 = vunpack.c.l.b16 %v609
        %v1307 = vunpack.c.h.b16 %v609
        %v1308 = vunpack.c.l.b16 %v610
        %v1309 = vunpack.c.h.b16 %v610
        %v1310 = vunpack.c.l.b16 %v611
        %v1311 = vunpack.c.l.b16 %v612
        %v1312 = vunpack.c.h.b16 %v612
        %v1313 = vunpack.c.l.b16 %v613
        %v1314 = vunpack.c.h.b16 %v613
        %v1315 = vunpack.c.l.b16 %v614
        %v1316 = vunpack.c.l.b16 %v615
        %v1317 = vunpack.c.h.b16 %v615
        %v1318 = vunpack.c.l.b16 %v616
        %v1319 = vunpack.c.h.b16 %v616
        %v1320 = vunpack.c.l.b16 %v617
        %v1321 = vunpack.c.l.b16 %v618
        %v1322 = vunpack.c.h.b16 %v618
        %v1323 = vunpack.c.l.b16 %v619
        %v1324 = vunpack.c.h.b16 %v619
        %v1325 = vunpack.c.l.b16 %v620
        %v1326 = vunpack.c.l.b16 %v621
        %v1327 = vunpack.c.h.b16 %v621
        %v1328 = vunpack.c.l.b16 %v622
        %v1329 = vunpack.c.h.b16 %v622
        %v1330 = vunpack.c.l.b16 %v623
        %v1331 = vunpack.c.l.b16 %v624
        %v1332 = vunpack.c.h.b16 %v624
        %v1333 = vunpack.c.l.b16 %v625
        %v1334 = vunpack.c.h.b16 %v625
        %v1335 = vunpack.c.l.b16 %v626
        %v1336 = vunpack.c.l.b16 %v627
        %v1337 = vunpack.c.h.b16 %v627
        %v1338 = vunpack.c.l.b16 %v628
        %v1339 = vunpack.c.h.b16 %v628
        %v1340 = vunpack.c.l.b16 %v629
        %v1341 = vunpack.c.l.b16 %v630
        %v1342 = vunpack.c.h.b16 %v630
        %v1343 = vunpack.c.l.b16 %v631
        %v1344 = vunpack.c.h.b16 %v631
        %v1345 = vunpack.c.l.b16 %v632
        %v1346 = vunpack.c.l.b16 %v633
        %v1347 = vunpack.c.h.b16 %v633
        %v1348 = vunpack.c.l.b16 %v634
        %v1349 = vunpack.c.h.b16 %v634
        %v1350 = vunpack.c.l.b16 %v635
        %v1351 = vunpack.c.l.b16 %v636
        %v1352 = vunpack.c.h.b16 %v636
        %v1353 = vunpack.c.l.b16 %v637
        %v1354 = vunpack.c.h.b16 %v637
        %v1355 = vunpack.c.l.b16 %v638
        %v1356 = vunpack.c.l.b16 %v639
        %v1357 = vunpack.c.h.b16 %v639
        %v1358 = vunpack.c.l.b16 %v640
        %v1359 = vunpack.c.h.b16 %v640
        %v1360 = vunpack.c.l.b16 %v641
        %v1361 = vunpack.c.l.b16 %v642
        %v1362 = vunpack.c.h.b16 %v642
        %v1363 = vunpack.c.l.b16 %v643
        %v1364 = vunpack.c.h.b16 %v643
        %v1365 = vunpack.c.l.b16 %v644
        %v1366 = vunpack.c.l.b16 %v645
        %v1367 = vunpack.c.h.b16 %v645
        %v1368 = vunpack.c.l.b16 %v646
        %v1369 = vunpack.c.h.b16 %v646
        %v1370 = vunpack.c.l.b16 %v647
        %v1371 = vunpack.c.l.b16 %v648
        %v1372 = vunpack.c.h.b16 %v648
        %v1373 = vunpack.c.l.b16 %v649
        %v1374 = vunpack.c.h.b16 %v649
        %v1375 = vunpack.c.l.b16 %v650
        %v1376 = vunpack.c.l.b16 %v651
        %v1377 = vunpack.c.h.b16 %v651
        %v1378 = vunpack.c.l.b16 %v652
        %v1379 = vunpack.c.h.b16 %v652
        %v1380 = vunpack.c.l.b16 %v653
        %v1381 = vunpack.c.l.b16 %v654
        %v1382 = vunpack.c.h.b16 %v654
        %v1383 = vunpack.c.l.b16 %v655
        %v1384 = vunpack.c.h.b16 %v655
        %v1385 = vunpack.c.l.b16 %v656
        %v1386 = vunpack.c.l.b16 %v657
        %v1387 = vunpack.c.h.b16 %v657
        %v1388 = vunpack.c.l.b16 %v658
        %v1389 = vunpack.c.h.b16 %v658
        %v1390 = vunpack.c.l.b16 %v659
        %v1391 = vunpack.c.l.b16 %v660
        %v1392 = vunpack.c.h.b16 %v660
        %v1393 = vunpack.c.l.b16 %v661
        %v1394 = vunpack.c.h.b16 %v661
        %v1395 = vunpack.c.l.b16 %v662
        %v1396 = vunpack.c.l.b16 %v663
        %v1397 = vunpack.c.h.b16 %v663
        %v1398 = vunpack.c.l.b16 %v664
        %v1399 = vunpack.c.h.b16 %v664
        %v1400 = vunpack.c.l.b16 %v665
        %v1401 = vunpack.c.l.b16 %v666
        %v1402 = vunpack.c.h.b16 %v666
        %v1403 = vunpack.c.l.b16 %v667
        %v1404 = vunpack.c.h.b16 %v667
        %v1405 = vunpack.c.l.b16 %v668
        %v1406 = vunpack.c.l.b16 %v669
        %v1407 = vunpack.c.h.b16 %v669
        %v1408 = vunpack.c.l.b16 %v670
        %v1409 = vunpack.c.h.b16 %v670
        %v1410 = vunpack.c.l.b16 %v671
        %v1411 = vunpack.c.l.b16 %v672
        %v1412 = vunpack.c.h.b16 %v672
        %v1413 = vunpack.c.l.b16 %v673
        %v1414 = vunpack.c.h.b16 %v673
        %v1415 = vunpack.c.l.b16 %v674
        %v1416 = vunpack.c.l.b16 %v675
        %v1417 = vunpack.c.h.b16 %v675
        %v1418 = vunpack.c.l.b16 %v676
        %v1419 = vunpack.c.h.b16 %v676
        %v1420 = vunpack.c.l.b16 %v677
        %v1421 = vunpack.c.l.b16 %v678
        %v1422 = vunpack.c.h.b16 %v678
        %v1423 = vunpack.c.l.b16 %v679
        %v1424 = vunpack.c.h.b16 %v679
        %v1425 = vunpack.c.l.b16 %v680
        %v1426 = vunpack.c.l.b16 %v681
        %v1427 = vunpack.c.h.b16 %v681
        %v1428 = vunpack.c.l.b16 %v682
        %v1429 = vunpack.c.h.b16 %v682
        %v1430 = vunpack.c.l.b16 %v683
        %v1431 = vunpack.c.l.b16 %v684
        %v1432 = vunpack.c.h.b16 %v684
        %v1433 = vunpack.c.l.b16 %v685
        %v1434 = vunpack.c.h.b16 %v685
        %v1435 = vunpack.c.l.b16 %v686
        %v1436 = vunpack.c.l.b16 %v687
        %v1437 = vunpack.c.h.b16 %v687
        %v1438 = vunpack.c.l.b16 %v688
        %v1439 = vunpack.c.h.b16 %v688
        %v1440 = vunpack.c.l.b16 %v689
        %v1441 = vunpack.c.l.b16 %v690
        %v1442 = vunpack.c.h.b16 %v690
        %v1443 = vunpack.c.l.b16 %v691
        %v1444 = vunpack.c.h.b16 %v691
        %v1445 = vunpack.c.l.b16 %v692
        %v1446 = vunpack.c.l.b16 %v693
        %v1447 = vunpack.c.h.b16 %v693
        %v1448 = vunpack.c.l.b16 %v694
        %v1449 = vunpack.c.h.b16 %v694
        %v1450 = vunpack.c.l.b16 %v695
        %v1451 = vunpack.c.l.b16 %v696
        %v1452 = vunpack.c.h.b16 %v696
        %v1453 = vunpack.c.l.b16 %v697
        %v1454 = vunpack.c.h.b16 %v697
        %v1455 = vunpack.c.l.b16 %v698
        %v1456 = vunpack.c.l.b16 %v699
        %v1457 = vunpack.c.h.b16 %v699
        %v1458 = vunpack.c.l.b16 %v700
        %v1459 = vunpack.c.h.b16 %v700
        %v1460 = vunpack.c.l.b16 %v701
        %v1461 = vunpack.c.l.b16 %v702
        %v1462 = vunpack.c.h.b16 %v702
        %v1463 = vunpack.c.l.b16 %v703
        %v1464 = vunpack.c.h.b16 %v703
        %v1465 = vunpack.c.l.b16 %v704
        %v1466 = vunpack.c.l.b16 %v705
        %v1467 = vunpack.c.h.b16 %v705
        %v1468 = vunpack.c.l.b16 %v706
        %v1469 = vunpack.c.h.b16 %v706
        %v1470 = vunpack.c.l.b16 %v707
        %v1471 = vunpack.c.l.b16 %v708
        %v1472 = vunpack.c.h.b16 %v708
        %v1473 = vunpack.c.l.b16 %v709
        %v1474 = vunpack.c.h.b16 %v709
        %v1475 = vunpack.c.l.b16 %v710
        %v1476 = vunpack.c.l.b16 %v711
        %v1477 = vunpack.c.h.b16 %v711
        %v1478 = vunpack.c.l.b16 %v712
        %v1479 = vunpack.c.h.b16 %v712
        %v1480 = vunpack.c.l.b16 %v713
        %v1481 = vunpack.c.l.b16 %v714
        %v1482 = vunpack.c.h.b16 %v714
        %v1483 = vunpack.c.l.b16 %v715
        %v1484 = vunpack.c.h.b16 %v715
        %v1485 = vunpack.c.l.b16 %v716
        %v1486 = vunpack.c.l.b16 %v717
        %v1487 = vunpack.c.h.b16 %v717
        %v1488 = vunpack.c.l.b16 %v718
        %v1489 = vunpack.c.h.b16 %v718
        %v1490 = vunpack.c.l.b16 %v719
        %v1491 = vunpack.c.l.b16 %v720
        %v1492 = vunpack.c.h.b16 %v720
        %v1493 = vunpack.c.l.b16 %v721
        %v1494 = vunpack.c.h.b16 %v721
        %v1495 = vunpack.c.l.b16 %v722
        %v1496 = vunpack.c.l.b16 %v723
        %v1497 = vunpack.c.h.b16 %v723
        %v1498 = vunpack.c.l.b16 %v724
        %v1499 = vunpack.c.h.b16 %v724
        %v1500 = vunpack.c.l.b16 %v725
        %v1501 = vunpack.c.l.b16 %v726
        %v1502 = vunpack.c.h.b16 %v726
        %v1503 = vunpack.c.l.b16 %v727
        %v1504 = vunpack.c.h.b16 %v727
        %v1505 = vunpack.c.l.b16 %v728
        %v1506 = vunpack.c.l.b16 %v729
        %v1507 = vunpack.c.h.b16 %v729
        %v1508 = vunpack.c.l.b16 %v730
        %v1509 = vunpack.c.h.b16 %v730
        %v1510 = vunpack.c.l.b16 %v731
        %v1511 = vunpack.c.l.b16 %v732
        %v1512 = vunpack.c.h.b16 %v732
        %v1513 = vunpack.c.l.b16 %v733
        %v1514 = vunpack.c.h.b16 %v733
        %v1515 = vunpack.c.l.b16 %v734
        %v1516 = vunpack.c.l.b16 %v735
        %v1517 = vunpack.c.h.b16 %v735
        %v1518 = vunpack.c.l.b16 %v736
        %v1519 = vunpack.c.h.b16 %v736
        %v1520 = vunpack.c.l.b16 %v737
        %v1521 = vunpack.c.l.b16 %v738
        %v1522 = vunpack.c.h.b16 %v738
        %v1523 = vunpack.c.l.b16 %v739
        %v1524 = vunpack.c.h.b16 %v739
        %v1525 = vunpack.c.l.b16 %v740
        %v1526 = vunpack.c.l.b16 %v741
        %v1527 = vunpack.c.h.b16 %v741
        %v1528 = vunpack.c.l.b16 %v742
        %v1529 = vunpack.c.h.b16 %v742
        %v1530 = vunpack.c.l.b16 %v743
        %v1531 = vunpack.c.l.b16 %v744
        %v1532 = vunpack.c.h.b16 %v744
        %v1533 = vunpack.c.l.b16 %v745
        %v1534 = vunpack.c.h.b16 %v745
        %v1535 = vunpack.c.l.b16 %v746
        %v1536 = vunpack.c.l.b16 %v747
        %v1537 = vunpack.c.h.b16 %v747
        %v1538 = vunpack.c.l.b16 %v748
        %v1539 = vunpack.c.h.b16 %v748
        %v1540 = vunpack.c.l.b16 %v749
        %v1541 = vunpack.c.l.b16 %v750
        %v1542 = vunpack.c.h.b16 %v750
        %v1543 = vunpack.c.l.b16 %v751
        %v1544 = vunpack.c.h.b16 %v751
        %v1545 = vunpack.c.l.b16 %v752
        %v1546 = vunpack.c.l.b16 %v753
        %v1547 = vunpack.c.h.b16 %v753
        %v1548 = vunpack.c.l.b16 %v754
        %v1549 = vunpack.c.h.b16 %v754
        %v1550 = vunpack.c.l.b16 %v755
        %v1551 = vunpack.c.l.b16 %v756
        %v1552 = vunpack.c.h.b16 %v756
        %v1553 = vunpack.c.l.b16 %v757
        %v1554 = vunpack.c.h.b16 %v757
        %v1555 = vunpack.c.l.b16 %v758
        %v1556 = vunpack.c.l.b16 %v759
        %v1557 = vunpack.c.h.b16 %v759
        %v1558 = vunpack.c.l.b16 %v760
        %v1559 = vunpack.c.h.b16 %v760
        %v1560 = vunpack.c.l.b16 %v761
        %v1561 = vunpack.c.l.b16 %v762
        %v1562 = vunpack.c.h.b16 %v762
        %v1563 = vunpack.c.l.b16 %v763
        %v1564 = vunpack.c.h.b16 %v763
        %v1565 = vunpack.c.l.b16 %v764
        %v1566 = vunpack.c.l.b16 %v765
        %v1567 = vunpack.c.h.b16 %v765
        %v1568 = vunpack.c.l.b16 %v766
        %v1569 = vunpack.c.h.b16 %v766
        %v1570 = vunpack.c.l.b16 %v767
        %v1571 = vunpack.c.l.b16 %v768
        %v1572 = vunpack.c.h.b16 %v768
        %v1573 = vunpack.c.l.b16 %v769
        %v1574 = vunpack.c.h.b16 %v769
        %v1575 = vunpack.c.l.b16 %v770
        %v1576 = vunpack.c.l.b16 %v771
        %v1577 = vunpack.c.h.b16 %v771
        %v1578 = vunpack.c.l.b16 %v772
        %v1579 = vunpack.c.h.b16 %v772
        %v1580 = vunpack.c.l.b16 %v773
        %v1581 = vunpack.c.l.b16 %v774
        %v1582 = vunpack.c.h.b16 %v774
        %v1583 = vunpack.c.l.b16 %v775
        %v1584 = vunpack.c.h.b16 %v775
        %v1585 = vunpack.c.l.b16 %v776
        %v1586 = vunpack.c.l.b16 %v777
        %v1587 = vunpack.c.h.b16 %v777
        %v1588 = vunpack.c.l.b16 %v778
        %v1589 = vunpack.c.h.b16 %v778
        %v1590 = vunpack.c.l.b16 %v779
        %v1591 = vunpack.c.l.b16 %v780
        %v1592 = vunpack.c.h.b16 %v780
        %v1593 = vunpack.c.l.b16 %v781
        %v1594 = vunpack.c.h.b16 %v781
        %v1595 = vunpack.c.l.b16 %v782
        %v1596 = vunpack.c.l.b16 %v783
        %v1597 = vunpack.c.h.b16 %v783
        %v1598 = vunpack.c.l.b16 %v784
        %v1599 = vunpack.c.h.b16 %v784
        %v1600 = vunpack.c.l.b16 %v785
        %v1601 = vunpack.c.l.b16 %v786
        %v1602 = vunpack.c.h.b16 %v786
        %v1603 = vunpack.c.l.b16 %v787
        %v1604 = vunpack.c.h.b16 %v787
        %v1605 = vunpack.c.l.b16 %v788
        %v1606 = vunpack.c.l.b16 %v789
        %v1607 = vunpack.c.h.b16 %v789
        %v1608 = vunpack.c.l.b16 %v790
        %v1609 = vunpack.c.h.b16 %v790
        %v1610 = vunpack.c.l.b16 %v791
        %v1611 = vunpack.c.l.b16 %v792
        %v1612 = vunpack.c.h.b16 %v792
        %v1613 = vunpack.c.l.b16 %v793
        %v1614 = vunpack.c.h.b16 %v793
        %v1615 = vunpack.c.l.b16 %v794
        %v1616 = vunpack.c.l.b16 %v795
        %v1617 = vunpack.c.h.b16 %v795
        %v1618 = vunpack.c.l.b16 %v796
        %v1619 = vunpack.c.h.b16 %v796
        %v1620 = vunpack.c.l.b16 %v797
        %v1621 = vunpack.c.l.b16 %v798
        %v1622 = vunpack.c.h.b16 %v798
        %v1623 = vunpack.c.l.b16 %v799
        %v1624 = vunpack.c.h.b16 %v799
        %v1625 = vunpack.c.l.b16 %v800
        %v1626 = vunpack.c.l.b16 %v801
        %v1627 = vunpack.c.h.b16 %v801
        %v1628 = vunpack.c.l.b16 %v802
        %v1629 = vunpack.c.h.b16 %v802
        %v1630 = vunpack.c.l.b16 %v803
        %v1631 = vunpack.c.l.b16 %v804
        %v1632 = vunpack.c.h.b16 %v804
        %v1633 = vunpack.c.l.b16 %v805
        %v1634 = vunpack.c.h.b16 %v805
        %v1635 = vunpack.c.l.b16 %v806
        %v1636 = vunpack.c.l.b16 %v807
        %v1637 = vunpack.c.h.b16 %v807
        %v1638 = vunpack.c.l.b16 %v808
        %v1639 = vunpack.c.h.b16 %v808
        %v1640 = vunpack.c.l.b16 %v809
        %v1641 = vpack.c.b16 %v1156, %v1151
        %v1642 = vpack.c.b16 %v1157, %v1152
        %v1643 = vpack.c.b16 %v1158, %v1153
        %v1644 = vpack.c.b16 %v1159, %v1154
        %v1645 = vpack.c.b16 %v1160, %v1155
        %v1646 = vpack.c.b16 %v1166, %v1161
        %v1647 = vpack.c.b16 %v1167, %v1162
        %v1648 = vpack.c.b16 %v1168, %v1163
        %v1649 = vpack.c.b16 %v1169, %v1164
        %v1650 = vpack.c.b16 %v1170, %v1165
        %v1651 = vpack.c.b16 %v1176, %v1171
        %v1652 = vpack.c.b16 %v1177, %v1172
        %v1653 = vpack.c.b16 %v1178, %v1173
        %v1654 = vpack.c.b16 %v1179, %v1174
        %v1655 = vpack.c.b16 %v1180, %v1175
        %v1656 = vpack.c.b16 %v1186, %v1181
        %v1657 = vpack.c.b16 %v1187, %v1182
        %v1658 = vpack.c.b16 %v1188, %v1183
        %v1659 = vpack.c.b16 %v1189, %v1184
        %v1660 = vpack.c.b16 %v1190, %v1185
        %v1661 = vpack.c.b16 %v1196, %v1191
        %v1662 = vpack.c.b16 %v1197, %v1192
        %v1663 = vpack.c.b16 %v1198, %v1193
        %v1664 = vpack.c.b16 %v1199, %v1194
        %v1665 = vpack.c.b16 %v1200, %v1195
        %v1666 = vpack.c.b16 %v1206, %v1201
        %v1667 = vpack.c.b16 %v1207, %v1202
        %v1668 = vpack.c.b16 %v1208, %v1203
        %v1669 = vpack.c.b16 %v1209, %v1204
        %v1670 = vpack.c.b16 %v1210, %v1205
        %v1671 = vpack.c.b16 %v1216, %v1211
        %v1672 = vpack.c.b16 %v1217, %v1212
        %v1673 = vpack.c.b16 %v1218, %v1213
        %v1674 = vpack.c.b16 %v1219, %v1214
        %v1675 = vpack.c.b16 %v1220, %v1215
        %v1676 = vpack.c.b16 %v1226, %v1221
        %v1677 = vpack.c.b16 %v1227, %v1222
        %v1678 = vpack.c.b16 %v1228, %v1223
        %v1679 = vpack.c.b16 %v1229, %v1224
        %v1680 = vpack.c.b16 %v1230, %v1225
        %v1681 = vpack.c.b16 %v1236, %v1231
        %v1682 = vpack.c.b16 %v1237, %v1232
        %v1683 = vpack.c.b16 %v1238, %v1233
        %v1684 = vpack.c.b16 %v1239, %v1234
        %v1685 = vpack.c.b16 %v1240, %v1235
        %v1686 = vpack.c.b16 %v1246, %v1241
        %v1687 = vpack.c.b16 %v1247, %v1242
        %v1688 = vpack.c.b16 %v1248, %v1243
        %v1689 = vpack.c.b16 %v1249, %v1244
        %v1690 = vpack.c.b16 %v1250, %v1245
        %v1691 = vpack.c.b16 %v1256, %v1251
        %v1692 = vpack.c.b16 %v1257, %v1252
        %v1693 = vpack.c.b16 %v1258, %v1253
        %v1694 = vpack.c.b16 %v1259, %v1254
        %v1695 = vpack.c.b16 %v1260, %v1255
        %v1696 = vpack.c.b16 %v1266, %v1261
        %v1697 = vpack.c.b16 %v1267, %v1262
        %v1698 = vpack.c.b16 %v1268, %v1263
        %v1699 = vpack.c.b16 %v1269, %v1264
        %v1700 = vpack.c.b16 %v1270, %v1265
        %v1701 = vpack.c.b16 %v1276, %v1271
        %v1702 = vpack.c.b16 %v1277, %v1272
        %v1703 = vpack.c.b16 %v1278, %v1273
        %v1704 = vpack.c.b16 %v1279, %v1274
        %v1705 = vpack.c.b16 %v1280, %v1275
        %v1706 = vpack.c.b16 %v1286, %v1281
        %v1707 = vpack.c.b16 %v1287, %v1282
        %v1708 = vpack.c.b16 %v1288, %v1283
        %v1709 = vpack.c.b16 %v1289, %v1284
        %v1710 = vpack.c.b16 %v1290, %v1285
        %v1711 = vpack.c.b16 %v1296, %v1291
        %v1712 = vpack.c.b16 %v1297, %v1292
        %v1713 = vpack.c.b16 %v1298, %v1293
        %v1714 = vpack.c.b16 %v1299, %v1294
        %v1715 = vpack.c.b16 %v1300, %v1295
        %v1716 = vpack.c.b16 %v1306, %v1301
        %v1717 = vpack.c.b16 %v1307, %v1302
        %v1718 = vpack.c.b16 %v1308, %v1303
        %v1719 = vpack.c.b16 %v1309, %v1304
        %v1720 = vpack.c.b16 %v1310, %v1305
        %v1721 = vpack.c.b16 %v1316, %v1311
        %v1722 = vpack.c.b16 %v1317, %v1312
        %v1723 = vpack.c.b16 %v1318, %v1313
        %v1724 = vpack.c.b16 %v1319, %v1314
        %v1725 = vpack.c.b16 %v1320, %v1315
        %v1726 = vpack.c.b16 %v1326, %v1321
        %v1727 = vpack.c.b16 %v1327, %v1322
        %v1728 = vpack.c.b16 %v1328, %v1323
        %v1729 = vpack.c.b16 %v1329, %v1324
        %v1730 = vpack.c.b16 %v1330, %v1325
        %v1731 = vpack.c.b16 %v1336, %v1331
        %v1732 = vpack.c.b16 %v1337, %v1332
        %v1733 = vpack.c.b16 %v1338, %v1333
        %v1734 = vpack.c.b16 %v1339, %v1334
        %v1735 = vpack.c.b16 %v1340, %v1335
        %v1736 = vpack.c.b16 %v1346, %v1341
        %v1737 = vpack.c.b16 %v1347, %v1342
        %v1738 = vpack.c.b16 %v1348, %v1343
        %v1739 = vpack.c.b16 %v1349, %v1344
        %v1740 = vpack.c.b16 %v1350, %v1345
        %v1741 = vpack.c.b16 %v1356, %v1351
        %v1742 = vpack.c.b16 %v1357, %v1352
        %v1743 = vpack.c.b16 %v1358, %v1353
        %v1744 = vpack.c.b16 %v1359, %v1354
        %v1745 = vpack.c.b16 %v1360, %v1355
        %v1746 = vpack.c.b16 %v1366, %v1361
        %v1747 = vpack.c.b16 %v1367, %v1362
        %v1748 = vpack.c.b16 %v1368, %v1363
        %v1749 = vpack.c.b16 %v1369, %v1364
        %v1750 = vpack.c.b16 %v1370, %v1365
        %v1751 = vpack.c.b16 %v1376, %v1371
        %v1752 = vpack.c.b16 %v1377, %v1372
        %v1753 = vpack.c.b16 %v1378, %v1373
        %v1754 = vpack.c.b16 %v1379, %v1374
        %v1755 = vpack.c.b16 %v1380, %v1375
        %v1756 = vpack.c.b16 %v1386, %v1381
        %v1757 = vpack.c.b16 %v1387, %v1382
        %v1758 = vpack.c.b16 %v1388, %v1383
        %v1759 = vpack.c.b16 %v1389, %v1384
        %v1760 = vpack.c.b16 %v1390, %v1385
        %v1761 = vpack.c.b16 %v1396, %v1391
        %v1762 = vpack.c.b16 %v1397, %v1392
        %v1763 = vpack.c.b16 %v1398, %v1393
        %v1764 = vpack.c.b16 %v1399, %v1394
        %v1765 = vpack.c.b16 %v1400, %v1395
        %v1766 = vpack.c.b16 %v1406, %v1401
        %v1767 = vpack.c.b16 %v1407, %v1402
        %v1768 = vpack.c.b16 %v1408, %v1403
        %v1769 = vpack.c.b16 %v1409, %v1404
        %v1770 = vpack.c.b16 %v1410, %v1405
        %v1771 = vpack.c.b16 %v1416, %v1411
        %v1772 = vpack.c.b16 %v1417, %v1412
        %v1773 = vpack.c.b16 %v1418, %v1413
        %v1774 = vpack.c.b16 %v1419, %v1414
        %v1775 = vpack.c.b16 %v1420, %v1415
        %v1776 = vpack.c.b16 %v1426, %v1421
        %v1777 = vpack.c.b16 %v1427, %v1422
        %v1778 = vpack.c.b16 %v1428, %v1423
        %v1779 = vpack.c.b16 %v1429, %v1424
        %v1780 = vpack.c.b16 %v1430, %v1425
        %v1781 = vpack.c.b16 %v1436, %v1431
        %v1782 = vpack.c.b16 %v1437, %v1432
        %v1783 = vpack.c.b16 %v1438, %v1433
        %v1784 = vpack.c.b16 %v1439, %v1434
        %v1785 = vpack.c.b16 %v1440, %v1435
        %v1786 = vpack.c.b16 %v1446, %v1441
        %v1787 = vpack.c.b16 %v1447, %v1442
        %v1788 = vpack.c.b16 %v1448, %v1443
        %v1789 = vpack.c.b16 %v1449, %v1444
        %v1790 = vpack.c.b16 %v1450, %v1445
        %v1791 = vpack.c.b16 %v1456, %v1451
        %v1792 = vpack.c.b16 %v1457, %v1452
        %v1793 = vpack.c.b16 %v1458, %v1453
        %v1794 = vpack.c.b16 %v1459, %v1454
        %v1795 = vpack.c.b16 %v1460, %v1455
        %v1796 = vpack.c.b16 %v1466, %v1461
        %v1797 = vpack.c.b16 %v1467, %v1462
        %v1798 = vpack.c.b16 %v1468, %v1463
        %v1799 = vpack.c.b16 %v1469, %v1464
        %v1800 = vpack.c.b16 %v1470, %v1465
        %v1801 = vpack.c.b16 %v1476, %v1471
        %v1802 = vpack.c.b16 %v1477, %v1472
        %v1803 = vpack.c.b16 %v1478, %v1473
        %v1804 = vpack.c.b16 %v1479, %v1474
        %v1805 = vpack.c.b16 %v1480, %v1475
        %v1806 = vpack.c.b16 %v1486, %v1481
        %v1807 = vpack.c.b16 %v1487, %v1482
        %v1808 = vpack.c.b16 %v1488, %v1483
        %v1809 = vpack.c.b16 %v1489, %v1484
        %v1810 = vpack.c.b16 %v1490, %v1485
        %v1811 = vpack.c.b16 %v1496, %v1491
        %v1812 = vpack.c.b16 %v1497, %v1492
        %v1813 = vpack.c.b16 %v1498, %v1493
        %v1814 = vpack.c.b16 %v1499, %v1494
        %v1815 = vpack.c.b16 %v1500, %v1495
        %v1816 = vpack.c.b16 %v1506, %v1501
        %v1817 = vpack.c.b16 %v1507, %v1502
        %v1818 = vpack.c.b16 %v1508, %v1503
        %v1819 = vpack.c.b16 %v1509, %v1504
        %v1820 = vpack.c.b16 %v1510, %v1505
        %v1821 = vpack.c.b16 %v1516, %v1511
        %v1822 = vpack.c.b16 %v1517, %v1512
        %v1823 = vpack.c.b16 %v1518, %v1513
        %v1824 = vpack.c.b16 %v1519, %v1514
        %v1825 = vpack.c.b16 %v1520, %v1515
        %v1826 = vpack.c.b16 %v1526, %v1521
        %v1827 = vpack.c.b16 %v1527, %v1522
        %v1828 = vpack.c.b16 %v1528, %v1523
        %v1829 = vpack.c.b16 %v1529, %v1524
        %v1830 = vpack.c.b16 %v1530, %v1525
        %v1831 = vpack.c.b16 %v1536, %v1531
        %v1832 = vpack.c.b16 %v1537, %v1532
        %v1833 = vpack.c.b16 %v1538, %v1533
        %v1834 = vpack.c.b16 %v1539, %v1534
        %v1835 = vpack.c.b16 %v1540, %v1535
        %v1836 = vpack.c.b16 %v1546, %v1541
        %v1837 = vpack.c.b16 %v1547, %v1542
        %v1838 = vpack.c.b16 %v1548, %v1543
        %v1839 = vpack.c.b16 %v1549, %v1544
        %v1840 = vpack.c.b16 %v1550, %v1545
        %v1841 = vpack.c.b16 %v1556, %v1551
        %v1842 = vpack.c.b16 %v1557, %v1552
        %v1843 = vpack.c.b16 %v1558, %v1553
        %v1844 = vpack.c.b16 %v1559, %v1554
        %v1845 = vpack.c.b16 %v1560, %v1555
        %v1846 = vpack.c.b16 %v1566, %v1561
        %v1847 = vpack.c.b16 %v1567, %v1562
        %v1848 = vpack.c.b16 %v1568, %v1563
        %v1849 = vpack.c.b16 %v1569, %v1564
        %v1850 = vpack.c.b16 %v1570, %v1565
        %v1851 = vpack.c.b16 %v1576, %v1571
        %v1852 = vpack.c.b16 %v1577, %v1572
        %v1853 = vpack.c.b16 %v1578, %v1573
        %v1854 = vpack.c.b16 %v1579, %v1574
        %v1855 = vpack.c.b16 %v1580, %v1575
        %v1856 = vpack.c.b16 %v1586, %v1581
        %v1857 = vpack.c.b16 %v1587, %v1582
        %v1858 = vpack.c.b16 %v1588, %v1583
        %v1859 = vpack.c.b16 %v1589, %v1584
        %v1860 = vpack.c.b16 %v1590, %v1585
        %v1861 = vpack.c.b16 %v1596, %v1591
        %v1862 = vpack.c.b16 %v1597, %v1592
        %v1863 = vpack.c.b16 %v1598, %v1593
        %v1864 = vpack.c.b16 %v1599, %v1594
        %v1865 = vpack.c.b16 %v1600, %v1595
        %v1866 = vpack.c.b16 %v1606, %v1601
        %v1867 = vpack.c.b16 %v1607, %v1602
        %v1868 = vpack.c.b16 %v1608, %v1603
        %v1869 = vpack.c.b16 %v1609, %v1604
        %v1870 = vpack.c.b16 %v1610, %v1605
        %v1871 = vpack.c.b16 %v1616, %v1611
        %v1872 = vpack.c.b16 %v1617, %v1612
        %v1873 = vpack.c.b16 %v1618, %v1613
        %v1874 = vpack.c.b16 %v1619, %v1614
        %v1875 = vpack.c.b16 %v1620, %v1615
        %v1876 = vpack.c.b16 %v1626, %v1621
        %v1877 = vpack.c.b16 %v1627, %v1622
        %v1878 = vpack.c.b16 %v1628, %v1623
        %v1879 = vpack.c.b16 %v1629, %v1624
        %v1880 = vpack.c.b16 %v1630, %v1625
        %v1881 = vpack.c.b16 %v1636, %v1631
        %v1882 = vpack.c.b16 %v1637, %v1632
        %v1883 = vpack.c.b16 %v1638, %v1633
        %v1884 = vpack.c.b16 %v1639, %v1634
        %v1885 = vpack.c.b16 %v1640, %v1635
        %vm2131 = vcmask 130048
        %v2133 = vsel %vm2131, %v850, 0
        %2135 = vmatpush.bf16.msra.mxu0 %v1676
        %2136 = vmatpush.bf16.msra.mxu0 %v1671
        %2137 = vmatpush.bf16.msra.mxu0 %v1666
        %2138 = vmatpush.bf16.msra.mxu0 %v1661
        %2139 = vmatpush.bf16.msra.mxu0 %v1656
        %2140 = vmatpush.bf16.msra.mxu0 %v1651
        %2141 = vmatpush.bf16.msra.mxu0 %v1646
        %2142 = vmatpush.bf16.msra.mxu0 %v1641
        %2143 = vmatmul.bf16.gmra.mxu0 %v844
        %v2144 = vpop.f32.mrf.mxu0
        %v2145 = vadd.f32 %v812, %v2144
        %v2146 = vpop.f32.mrf.mxu0
        %v2147 = vadd.f32 %v812, %v2146
        %2148 = vdwg.mxu0
        %2149 = vmatpush.bf16.msra.mxu0 %v1716
        %2150 = vmatpush.bf16.msra.mxu0 %v1711
        %2151 = vmatpush.bf16.msra.mxu0 %v1706
        %2152 = vmatpush.bf16.msra.mxu0 %v1701
        %2153 = vmatpush.bf16.msra.mxu0 %v1696
        %2154 = vmatpush.bf16.msra.mxu0 %v1691
        %2155 = vmatpush.bf16.msra.mxu0 %v1686
        %2156 = vmatpush.bf16.msra.mxu0 %v1681
        %2157 = vmatmul.bf16.gmra.mxu0 %v845
        %v2158 = vpop.f32.mrf.mxu0
        %v2159 = vadd.f32 %v2145, %v2158
        %v2160 = vpop.f32.mrf.mxu0
        %v2161 = vadd.f32 %v2147, %v2160
        %2162 = vdwg.mxu0
        %2163 = vmatpush.bf16.msra.mxu0 %v1756
        %2164 = vmatpush.bf16.msra.mxu0 %v1751
        %2165 = vmatpush.bf16.msra.mxu0 %v1746
        %2166 = vmatpush.bf16.msra.mxu0 %v1741
        %2167 = vmatpush.bf16.msra.mxu0 %v1736
        %2168 = vmatpush.bf16.msra.mxu0 %v1731
        %2169 = vmatpush.bf16.msra.mxu0 %v1726
        %2170 = vmatpush.bf16.msra.mxu0 %v1721
        %2171 = vmatmul.bf16.gmra.mxu0 %v846
        %v2172 = vpop.f32.mrf.mxu0
        %v2173 = vadd.f32 %v2159, %v2172
        %v2174 = vpop.f32.mrf.mxu0
        %v2175 = vadd.f32 %v2161, %v2174
        %2176 = vdwg.mxu0
        %2177 = vmatpush.bf16.msra.mxu0 %v1796
        %2178 = vmatpush.bf16.msra.mxu0 %v1791
        %2179 = vmatpush.bf16.msra.mxu0 %v1786
        %2180 = vmatpush.bf16.msra.mxu0 %v1781
        %2181 = vmatpush.bf16.msra.mxu0 %v1776
        %2182 = vmatpush.bf16.msra.mxu0 %v1771
        %2183 = vmatpush.bf16.msra.mxu0 %v1766
        %2184 = vmatpush.bf16.msra.mxu0 %v1761
        %2185 = vmatmul.bf16.gmra.mxu0 %v847
        %v2186 = vpop.f32.mrf.mxu0
        %v2187 = vadd.f32 %v2173, %v2186
        %v2188 = vpop.f32.mrf.mxu0
        %v2189 = vadd.f32 %v2175, %v2188
        %2190 = vdwg.mxu0
        %2191 = vmatpush.bf16.msra.mxu0 %v1836
        %2192 = vmatpush.bf16.msra.mxu0 %v1831
        %2193 = vmatpush.bf16.msra.mxu0 %v1826
        %2194 = vmatpush.bf16.msra.mxu0 %v1821
        %2195 = vmatpush.bf16.msra.mxu0 %v1816
        %2196 = vmatpush.bf16.msra.mxu0 %v1811
        %2197 = vmatpush.bf16.msra.mxu0 %v1806
        %2198 = vmatpush.bf16.msra.mxu0 %v1801
        %2199 = vmatmul.bf16.gmra.mxu0 %v848
        %v2200 = vpop.f32.mrf.mxu0
        %v2201 = vadd.f32 %v2187, %v2200
        %v2202 = vpop.f32.mrf.mxu0
        %v2203 = vadd.f32 %v2189, %v2202
        %2204 = vdwg.mxu0
        %2205 = vmatpush.bf16.msra.mxu0 %v1876
        %2206 = vmatpush.bf16.msra.mxu0 %v1871
        %2207 = vmatpush.bf16.msra.mxu0 %v1866
        %2208 = vmatpush.bf16.msra.mxu0 %v1861
        %2209 = vmatpush.bf16.msra.mxu0 %v1856
        %2210 = vmatpush.bf16.msra.mxu0 %v1851
        %2211 = vmatpush.bf16.msra.mxu0 %v1846
        %2212 = vmatpush.bf16.msra.mxu0 %v1841
        %2213 = vmatmul.bf16.gmra.mxu0 %v849
        %v2214 = vpop.f32.mrf.mxu0
        %v2215 = vadd.f32 %v2201, %v2214
        %v2216 = vpop.f32.mrf.mxu0
        %v2217 = vadd.f32 %v2203, %v2216
        %2218 = vdwg.mxu0
        %2219 = vmatpush.bf16.msra.mxu0 0
        %2220 = vmatpush.bf16.msra.mxu0 0
        %2221 = vmatpush.bf16.msra.mxu0 0
        %2222 = vmatpush.bf16.msra.mxu0 0
        %2223 = vmatpush.bf16.msra.mxu0 0
        %2224 = vmatpush.bf16.msra.mxu0 0
        %2225 = vmatpush.bf16.msra.mxu0 0
        %2226 = vmatpush.bf16.msra.mxu0 %v1881
        %2227 = vmatmul.bf16.gmra.mxu0 %v2133
        %v2228 = vpop.f32.mrf.mxu0
        %v2229 = vadd.f32 %v2215, %v2228
        %v2230 = vpop.f32.mrf.mxu0
        %v2231 = vadd.f32 %v2217, %v2230
        %2232 = vdwg.mxu0
        %2233 = vmatpush.bf16.msra.mxu0 %v1677
        %2234 = vmatpush.bf16.msra.mxu0 %v1672
        %2235 = vmatpush.bf16.msra.mxu0 %v1667
        %2236 = vmatpush.bf16.msra.mxu0 %v1662
        %2237 = vmatpush.bf16.msra.mxu0 %v1657
        %2238 = vmatpush.bf16.msra.mxu0 %v1652
        %2239 = vmatpush.bf16.msra.mxu0 %v1647
        %2240 = vmatpush.bf16.msra.mxu0 %v1642
        %2241 = vmatmul.bf16.gmra.mxu0 %v844
        %v2242 = vpop.f32.mrf.mxu0
        %v2243 = vadd.f32 %v813, %v2242
        %v2244 = vpop.f32.mrf.mxu0
        %v2245 = vadd.f32 %v813, %v2244
        %2246 = vdwg.mxu0
        %2247 = vmatpush.bf16.msra.mxu0 %v1717
        %2248 = vmatpush.bf16.msra.mxu0 %v1712
        %2249 = vmatpush.bf16.msra.mxu0 %v1707
        %2250 = vmatpush.bf16.msra.mxu0 %v1702
        %2251 = vmatpush.bf16.msra.mxu0 %v1697
        %2252 = vmatpush.bf16.msra.mxu0 %v1692
        %2253 = vmatpush.bf16.msra.mxu0 %v1687
        %2254 = vmatpush.bf16.msra.mxu0 %v1682
        %2255 = vmatmul.bf16.gmra.mxu0 %v845
        %v2256 = vpop.f32.mrf.mxu0
        %v2257 = vadd.f32 %v2243, %v2256
        %v2258 = vpop.f32.mrf.mxu0
        %v2259 = vadd.f32 %v2245, %v2258
        %2260 = vdwg.mxu0
        %2261 = vmatpush.bf16.msra.mxu0 %v1757
        %2262 = vmatpush.bf16.msra.mxu0 %v1752
        %2263 = vmatpush.bf16.msra.mxu0 %v1747
        %2264 = vmatpush.bf16.msra.mxu0 %v1742
        %2265 = vmatpush.bf16.msra.mxu0 %v1737
        %2266 = vmatpush.bf16.msra.mxu0 %v1732
        %2267 = vmatpush.bf16.msra.mxu0 %v1727
        %2268 = vmatpush.bf16.msra.mxu0 %v1722
        %2269 = vmatmul.bf16.gmra.mxu0 %v846
        %v2270 = vpop.f32.mrf.mxu0
        %v2271 = vadd.f32 %v2257, %v2270
        %v2272 = vpop.f32.mrf.mxu0
        %v2273 = vadd.f32 %v2259, %v2272
        %2274 = vdwg.mxu0
        %2275 = vmatpush.bf16.msra.mxu0 %v1797
        %2276 = vmatpush.bf16.msra.mxu0 %v1792
        %2277 = vmatpush.bf16.msra.mxu0 %v1787
        %2278 = vmatpush.bf16.msra.mxu0 %v1782
        %2279 = vmatpush.bf16.msra.mxu0 %v1777
        %2280 = vmatpush.bf16.msra.mxu0 %v1772
        %2281 = vmatpush.bf16.msra.mxu0 %v1767
        %2282 = vmatpush.bf16.msra.mxu0 %v1762
        %2283 = vmatmul.bf16.gmra.mxu0 %v847
        %v2284 = vpop.f32.mrf.mxu0
        %v2285 = vadd.f32 %v2271, %v2284
        %v2286 = vpop.f32.mrf.mxu0
        %v2287 = vadd.f32 %v2273, %v2286
        %2288 = vdwg.mxu0
        %2289 = vmatpush.bf16.msra.mxu0 %v1837
        %2290 = vmatpush.bf16.msra.mxu0 %v1832
        %2291 = vmatpush.bf16.msra.mxu0 %v1827
        %2292 = vmatpush.bf16.msra.mxu0 %v1822
        %2293 = vmatpush.bf16.msra.mxu0 %v1817
        %2294 = vmatpush.bf16.msra.mxu0 %v1812
        %2295 = vmatpush.bf16.msra.mxu0 %v1807
        %2296 = vmatpush.bf16.msra.mxu0 %v1802
        %2297 = vmatmul.bf16.gmra.mxu0 %v848
        %v2298 = vpop.f32.mrf.mxu0
        %v2299 = vadd.f32 %v2285, %v2298
        %v2300 = vpop.f32.mrf.mxu0
        %v2301 = vadd.f32 %v2287, %v2300
        %2302 = vdwg.mxu0
        %2303 = vmatpush.bf16.msra.mxu0 %v1877
        %2304 = vmatpush.bf16.msra.mxu0 %v1872
        %2305 = vmatpush.bf16.msra.mxu0 %v1867
        %2306 = vmatpush.bf16.msra.mxu0 %v1862
        %2307 = vmatpush.bf16.msra.mxu0 %v1857
        %2308 = vmatpush.bf16.msra.mxu0 %v1852
        %2309 = vmatpush.bf16.msra.mxu0 %v1847
        %2310 = vmatpush.bf16.msra.mxu0 %v1842
        %2311 = vmatmul.bf16.gmra.mxu0 %v849
        %v2312 = vpop.f32.mrf.mxu0
        %v2313 = vadd.f32 %v2299, %v2312
        %v2314 = vpop.f32.mrf.mxu0
        %v2315 = vadd.f32 %v2301, %v2314
        %2316 = vdwg.mxu0
        %2317 = vmatpush.bf16.msra.mxu0 0
        %2318 = vmatpush.bf16.msra.mxu0 0
        %2319 = vmatpush.bf16.msra.mxu0 0
        %2320 = vmatpush.bf16.msra.mxu0 0
        %2321 = vmatpush.bf16.msra.mxu0 0
        %2322 = vmatpush.bf16.msra.mxu0 0
        %2323 = vmatpush.bf16.msra.mxu0 0
        %2324 = vmatpush.bf16.msra.mxu0 %v1882
        %2325 = vmatmul.bf16.gmra.mxu0 %v2133
        %v2326 = vpop.f32.mrf.mxu0
        %v2327 = vadd.f32 %v2313, %v2326
        %v2328 = vpop.f32.mrf.mxu0
        %v2329 = vadd.f32 %v2315, %v2328
        %2330 = vdwg.mxu0
        %2331 = vmatpush.bf16.msra.mxu0 %v1678
        %2332 = vmatpush.bf16.msra.mxu0 %v1673
        %2333 = vmatpush.bf16.msra.mxu0 %v1668
        %2334 = vmatpush.bf16.msra.mxu0 %v1663
        %2335 = vmatpush.bf16.msra.mxu0 %v1658
        %2336 = vmatpush.bf16.msra.mxu0 %v1653
        %2337 = vmatpush.bf16.msra.mxu0 %v1648
        %2338 = vmatpush.bf16.msra.mxu0 %v1643
        %2339 = vmatmul.bf16.gmra.mxu0 %v844
        %v2340 = vpop.f32.mrf.mxu0
        %v2341 = vadd.f32 %v814, %v2340
        %v2342 = vpop.f32.mrf.mxu0
        %v2343 = vadd.f32 %v814, %v2342
        %2344 = vdwg.mxu0
        %2345 = vmatpush.bf16.msra.mxu0 %v1718
        %2346 = vmatpush.bf16.msra.mxu0 %v1713
        %2347 = vmatpush.bf16.msra.mxu0 %v1708
        %2348 = vmatpush.bf16.msra.mxu0 %v1703
        %2349 = vmatpush.bf16.msra.mxu0 %v1698
        %2350 = vmatpush.bf16.msra.mxu0 %v1693
        %2351 = vmatpush.bf16.msra.mxu0 %v1688
        %2352 = vmatpush.bf16.msra.mxu0 %v1683
        %2353 = vmatmul.bf16.gmra.mxu0 %v845
        %v2354 = vpop.f32.mrf.mxu0
        %v2355 = vadd.f32 %v2341, %v2354
        %v2356 = vpop.f32.mrf.mxu0
        %v2357 = vadd.f32 %v2343, %v2356
        %2358 = vdwg.mxu0
        %2359 = vmatpush.bf16.msra.mxu0 %v1758
        %2360 = vmatpush.bf16.msra.mxu0 %v1753
        %2361 = vmatpush.bf16.msra.mxu0 %v1748
        %2362 = vmatpush.bf16.msra.mxu0 %v1743
        %2363 = vmatpush.bf16.msra.mxu0 %v1738
        %2364 = vmatpush.bf16.msra.mxu0 %v1733
        %2365 = vmatpush.bf16.msra.mxu0 %v1728
        %2366 = vmatpush.bf16.msra.mxu0 %v1723
        %2367 = vmatmul.bf16.gmra.mxu0 %v846
        %v2368 = vpop.f32.mrf.mxu0
        %v2369 = vadd.f32 %v2355, %v2368
        %v2370 = vpop.f32.mrf.mxu0
        %v2371 = vadd.f32 %v2357, %v2370
        %2372 = vdwg.mxu0
        %2373 = vmatpush.bf16.msra.mxu0 %v1798
        %2374 = vmatpush.bf16.msra.mxu0 %v1793
        %2375 = vmatpush.bf16.msra.mxu0 %v1788
        %2376 = vmatpush.bf16.msra.mxu0 %v1783
        %2377 = vmatpush.bf16.msra.mxu0 %v1778
        %2378 = vmatpush.bf16.msra.mxu0 %v1773
        %2379 = vmatpush.bf16.msra.mxu0 %v1768
        %2380 = vmatpush.bf16.msra.mxu0 %v1763
        %2381 = vmatmul.bf16.gmra.mxu0 %v847
        %v2382 = vpop.f32.mrf.mxu0
        %v2383 = vadd.f32 %v2369, %v2382
        %v2384 = vpop.f32.mrf.mxu0
        %v2385 = vadd.f32 %v2371, %v2384
        %2386 = vdwg.mxu0
        %2387 = vmatpush.bf16.msra.mxu0 %v1838
        %2388 = vmatpush.bf16.msra.mxu0 %v1833
        %2389 = vmatpush.bf16.msra.mxu0 %v1828
        %2390 = vmatpush.bf16.msra.mxu0 %v1823
        %2391 = vmatpush.bf16.msra.mxu0 %v1818
        %2392 = vmatpush.bf16.msra.mxu0 %v1813
        %2393 = vmatpush.bf16.msra.mxu0 %v1808
        %2394 = vmatpush.bf16.msra.mxu0 %v1803
        %2395 = vmatmul.bf16.gmra.mxu0 %v848
        %v2396 = vpop.f32.mrf.mxu0
        %v2397 = vadd.f32 %v2383, %v2396
        %v2398 = vpop.f32.mrf.mxu0
        %v2399 = vadd.f32 %v2385, %v2398
        %2400 = vdwg.mxu0
        %2401 = vmatpush.bf16.msra.mxu0 %v1878
        %2402 = vmatpush.bf16.msra.mxu0 %v1873
        %2403 = vmatpush.bf16.msra.mxu0 %v1868
        %2404 = vmatpush.bf16.msra.mxu0 %v1863
        %2405 = vmatpush.bf16.msra.mxu0 %v1858
        %2406 = vmatpush.bf16.msra.mxu0 %v1853
        %2407 = vmatpush.bf16.msra.mxu0 %v1848
        %2408 = vmatpush.bf16.msra.mxu0 %v1843
        %2409 = vmatmul.bf16.gmra.mxu0 %v849
        %v2410 = vpop.f32.mrf.mxu0
        %v2411 = vadd.f32 %v2397, %v2410
        %v2412 = vpop.f32.mrf.mxu0
        %v2413 = vadd.f32 %v2399, %v2412
        %2414 = vdwg.mxu0
        %2415 = vmatpush.bf16.msra.mxu0 0
        %2416 = vmatpush.bf16.msra.mxu0 0
        %2417 = vmatpush.bf16.msra.mxu0 0
        %2418 = vmatpush.bf16.msra.mxu0 0
        %2419 = vmatpush.bf16.msra.mxu0 0
        %2420 = vmatpush.bf16.msra.mxu0 0
        %2421 = vmatpush.bf16.msra.mxu0 0
        %2422 = vmatpush.bf16.msra.mxu0 %v1883
        %2423 = vmatmul.bf16.gmra.mxu0 %v2133
        %v2424 = vpop.f32.mrf.mxu0
        %v2425 = vadd.f32 %v2411, %v2424
        %v2426 = vpop.f32.mrf.mxu0
        %v2427 = vadd.f32 %v2413, %v2426
        %2428 = vdwg.mxu0
        %2429 = vmatpush.bf16.msra.mxu0 %v1679
        %2430 = vmatpush.bf16.msra.mxu0 %v1674
        %2431 = vmatpush.bf16.msra.mxu0 %v1669
        %2432 = vmatpush.bf16.msra.mxu0 %v1664
        %2433 = vmatpush.bf16.msra.mxu0 %v1659
        %2434 = vmatpush.bf16.msra.mxu0 %v1654
        %2435 = vmatpush.bf16.msra.mxu0 %v1649
        %2436 = vmatpush.bf16.msra.mxu0 %v1644
        %2437 = vmatmul.bf16.gmra.mxu0 %v844
        %v2438 = vpop.f32.mrf.mxu0
        %v2439 = vadd.f32 %v815, %v2438
        %v2440 = vpop.f32.mrf.mxu0
        %v2441 = vadd.f32 %v815, %v2440
        %2442 = vdwg.mxu0
        %2443 = vmatpush.bf16.msra.mxu0 %v1719
        %2444 = vmatpush.bf16.msra.mxu0 %v1714
        %2445 = vmatpush.bf16.msra.mxu0 %v1709
        %2446 = vmatpush.bf16.msra.mxu0 %v1704
        %2447 = vmatpush.bf16.msra.mxu0 %v1699
        %2448 = vmatpush.bf16.msra.mxu0 %v1694
        %2449 = vmatpush.bf16.msra.mxu0 %v1689
        %2450 = vmatpush.bf16.msra.mxu0 %v1684
        %2451 = vmatmul.bf16.gmra.mxu0 %v845
        %v2452 = vpop.f32.mrf.mxu0
        %v2453 = vadd.f32 %v2439, %v2452
        %v2454 = vpop.f32.mrf.mxu0
        %v2455 = vadd.f32 %v2441, %v2454
        %2456 = vdwg.mxu0
        %2457 = vmatpush.bf16.msra.mxu0 %v1759
        %2458 = vmatpush.bf16.msra.mxu0 %v1754
        %2459 = vmatpush.bf16.msra.mxu0 %v1749
        %2460 = vmatpush.bf16.msra.mxu0 %v1744
        %2461 = vmatpush.bf16.msra.mxu0 %v1739
        %2462 = vmatpush.bf16.msra.mxu0 %v1734
        %2463 = vmatpush.bf16.msra.mxu0 %v1729
        %2464 = vmatpush.bf16.msra.mxu0 %v1724
        %2465 = vmatmul.bf16.gmra.mxu0 %v846
        %v2466 = vpop.f32.mrf.mxu0
        %v2467 = vadd.f32 %v2453, %v2466
        %v2468 = vpop.f32.mrf.mxu0
        %v2469 = vadd.f32 %v2455, %v2468
        %2470 = vdwg.mxu0
        %2471 = vmatpush.bf16.msra.mxu0 %v1799
        %2472 = vmatpush.bf16.msra.mxu0 %v1794
        %2473 = vmatpush.bf16.msra.mxu0 %v1789
        %2474 = vmatpush.bf16.msra.mxu0 %v1784
        %2475 = vmatpush.bf16.msra.mxu0 %v1779
        %2476 = vmatpush.bf16.msra.mxu0 %v1774
        %2477 = vmatpush.bf16.msra.mxu0 %v1769
        %2478 = vmatpush.bf16.msra.mxu0 %v1764
        %2479 = vmatmul.bf16.gmra.mxu0 %v847
        %v2480 = vpop.f32.mrf.mxu0
        %v2481 = vadd.f32 %v2467, %v2480
        %v2482 = vpop.f32.mrf.mxu0
        %v2483 = vadd.f32 %v2469, %v2482
        %2484 = vdwg.mxu0
        %2485 = vmatpush.bf16.msra.mxu0 %v1839
        %2486 = vmatpush.bf16.msra.mxu0 %v1834
        %2487 = vmatpush.bf16.msra.mxu0 %v1829
        %2488 = vmatpush.bf16.msra.mxu0 %v1824
        %2489 = vmatpush.bf16.msra.mxu0 %v1819
        %2490 = vmatpush.bf16.msra.mxu0 %v1814
        %2491 = vmatpush.bf16.msra.mxu0 %v1809
        %2492 = vmatpush.bf16.msra.mxu0 %v1804
        %2493 = vmatmul.bf16.gmra.mxu0 %v848
        %v2494 = vpop.f32.mrf.mxu0
        %v2495 = vadd.f32 %v2481, %v2494
        %v2496 = vpop.f32.mrf.mxu0
        %v2497 = vadd.f32 %v2483, %v2496
        %2498 = vdwg.mxu0
        %2499 = vmatpush.bf16.msra.mxu0 %v1879
        %2500 = vmatpush.bf16.msra.mxu0 %v1874
        %2501 = vmatpush.bf16.msra.mxu0 %v1869
        %2502 = vmatpush.bf16.msra.mxu0 %v1864
        %2503 = vmatpush.bf16.msra.mxu0 %v1859
        %2504 = vmatpush.bf16.msra.mxu0 %v1854
        %2505 = vmatpush.bf16.msra.mxu0 %v1849
        %2506 = vmatpush.bf16.msra.mxu0 %v1844
        %2507 = vmatmul.bf16.gmra.mxu0 %v849
        %v2508 = vpop.f32.mrf.mxu0
        %v2509 = vadd.f32 %v2495, %v2508
        %v2510 = vpop.f32.mrf.mxu0
        %v2511 = vadd.f32 %v2497, %v2510
        %2512 = vdwg.mxu0
        %2513 = vmatpush.bf16.msra.mxu0 0
        %2514 = vmatpush.bf16.msra.mxu0 0
        %2515 = vmatpush.bf16.msra.mxu0 0
        %2516 = vmatpush.bf16.msra.mxu0 0
        %2517 = vmatpush.bf16.msra.mxu0 0
        %2518 = vmatpush.bf16.msra.mxu0 0
        %2519 = vmatpush.bf16.msra.mxu0 0
        %2520 = vmatpush.bf16.msra.mxu0 %v1884
        %2521 = vmatmul.bf16.gmra.mxu0 %v2133
        %v2522 = vpop.f32.mrf.mxu0
        %v2523 = vadd.f32 %v2509, %v2522
        %v2524 = vpop.f32.mrf.mxu0
        %v2525 = vadd.f32 %v2511, %v2524
        %2526 = vdwg.mxu0
        %2527 = vmatpush.bf16.msra.mxu0 %v1680
        %2528 = vmatpush.bf16.msra.mxu0 %v1675
        %2529 = vmatpush.bf16.msra.mxu0 %v1670
        %2530 = vmatpush.bf16.msra.mxu0 %v1665
        %2531 = vmatpush.bf16.msra.mxu0 %v1660
        %2532 = vmatpush.bf16.msra.mxu0 %v1655
        %2533 = vmatpush.bf16.msra.mxu0 %v1650
        %2534 = vmatpush.bf16.msra.mxu0 %v1645
        %2535 = vmatmul.bf16.gmra.mxu0 %v844
        %v2536 = vpop.f32.mrf.mxu0
        %v2537 = vadd.f32 %v816, %v2536
        %v2538 = vpop.f32.mrf.mxu0
        %v2539 = vadd.f32 %v816, %v2538
        %2540 = vdwg.mxu0
        %2541 = vmatpush.bf16.msra.mxu0 %v1720
        %2542 = vmatpush.bf16.msra.mxu0 %v1715
        %2543 = vmatpush.bf16.msra.mxu0 %v1710
        %2544 = vmatpush.bf16.msra.mxu0 %v1705
        %2545 = vmatpush.bf16.msra.mxu0 %v1700
        %2546 = vmatpush.bf16.msra.mxu0 %v1695
        %2547 = vmatpush.bf16.msra.mxu0 %v1690
        %2548 = vmatpush.bf16.msra.mxu0 %v1685
        %2549 = vmatmul.bf16.gmra.mxu0 %v845
        %v2550 = vpop.f32.mrf.mxu0
        %v2551 = vadd.f32 %v2537, %v2550
        %v2552 = vpop.f32.mrf.mxu0
        %v2553 = vadd.f32 %v2539, %v2552
        %2554 = vdwg.mxu0
        %2555 = vmatpush.bf16.msra.mxu0 %v1760
        %2556 = vmatpush.bf16.msra.mxu0 %v1755
        %2557 = vmatpush.bf16.msra.mxu0 %v1750
        %2558 = vmatpush.bf16.msra.mxu0 %v1745
        %2559 = vmatpush.bf16.msra.mxu0 %v1740
        %2560 = vmatpush.bf16.msra.mxu0 %v1735
        %2561 = vmatpush.bf16.msra.mxu0 %v1730
        %2562 = vmatpush.bf16.msra.mxu0 %v1725
        %2563 = vmatmul.bf16.gmra.mxu0 %v846
        %v2564 = vpop.f32.mrf.mxu0
        %v2565 = vadd.f32 %v2551, %v2564
        %v2566 = vpop.f32.mrf.mxu0
        %v2567 = vadd.f32 %v2553, %v2566
        %2568 = vdwg.mxu0
        %2569 = vmatpush.bf16.msra.mxu0 %v1800
        %2570 = vmatpush.bf16.msra.mxu0 %v1795
        %2571 = vmatpush.bf16.msra.mxu0 %v1790
        %2572 = vmatpush.bf16.msra.mxu0 %v1785
        %2573 = vmatpush.bf16.msra.mxu0 %v1780
        %2574 = vmatpush.bf16.msra.mxu0 %v1775
        %2575 = vmatpush.bf16.msra.mxu0 %v1770
        %2576 = vmatpush.bf16.msra.mxu0 %v1765
        %2577 = vmatmul.bf16.gmra.mxu0 %v847
        %v2578 = vpop.f32.mrf.mxu0
        %v2579 = vadd.f32 %v2565, %v2578
        %v2580 = vpop.f32.mrf.mxu0
        %v2581 = vadd.f32 %v2567, %v2580
        %2582 = vdwg.mxu0
        %2583 = vmatpush.bf16.msra.mxu0 %v1840
        %2584 = vmatpush.bf16.msra.mxu0 %v1835
        %2585 = vmatpush.bf16.msra.mxu0 %v1830
        %2586 = vmatpush.bf16.msra.mxu0 %v1825
        %2587 = vmatpush.bf16.msra.mxu0 %v1820
        %2588 = vmatpush.bf16.msra.mxu0 %v1815
        %2589 = vmatpush.bf16.msra.mxu0 %v1810
        %2590 = vmatpush.bf16.msra.mxu0 %v1805
        %2591 = vmatmul.bf16.gmra.mxu0 %v848
        %v2592 = vpop.f32.mrf.mxu0
        %v2593 = vadd.f32 %v2579, %v2592
        %v2594 = vpop.f32.mrf.mxu0
        %v2595 = vadd.f32 %v2581, %v2594
        %2596 = vdwg.mxu0
        %2597 = vmatpush.bf16.msra.mxu0 %v1880
        %2598 = vmatpush.bf16.msra.mxu0 %v1875
        %2599 = vmatpush.bf16.msra.mxu0 %v1870
        %2600 = vmatpush.bf16.msra.mxu0 %v1865
        %2601 = vmatpush.bf16.msra.mxu0 %v1860
        %2602 = vmatpush.bf16.msra.mxu0 %v1855
        %2603 = vmatpush.bf16.msra.mxu0 %v1850
        %2604 = vmatpush.bf16.msra.mxu0 %v1845
        %2605 = vmatmul.bf16.gmra.mxu0 %v849
        %v2606 = vpop.f32.mrf.mxu0
        %v2607 = vadd.f32 %v2593, %v2606
        %v2608 = vpop.f32.mrf.mxu0
        %v2609 = vadd.f32 %v2595, %v2608
        %2610 = vdwg.mxu0
        %2611 = vmatpush.bf16.msra.mxu0 0
        %2612 = vmatpush.bf16.msra.mxu0 0
        %2613 = vmatpush.bf16.msra.mxu0 0
        %2614 = vmatpush.bf16.msra.mxu0 0
        %2615 = vmatpush.bf16.msra.mxu0 0
        %2616 = vmatpush.bf16.msra.mxu0 0
        %2617 = vmatpush.bf16.msra.mxu0 0
        %2618 = vmatpush.bf16.msra.mxu0 %v1885
        %2619 = vmatmul.bf16.gmra.mxu0 %v2133
        %v2620 = vpop.f32.mrf.mxu0
        %v2621 = vadd.f32 %v2607, %v2620
        %v2622 = vpop.f32.mrf.mxu0
        %v2623 = vadd.f32 %v2609, %v2622
        %2624 = vdwg.mxu0
        %v2625 = vmax.f32 %v2229, 0.0
        %v2626 = vmax.f32 %v2327, 0.0
        %v2627 = vmax.f32 %v2425, 0.0
        %v2628 = vmax.f32 %v2523, 0.0
        %v2629 = vmax.f32 %v2621, 0.0
        %v2630 = vmax.f32 %v2231, 0.0
        %v2631 = vmax.f32 %v2329, 0.0
        %v2632 = vmax.f32 %v2427, 0.0
        %v2633 = vmax.f32 %v2525, 0.0
        %v2634 = vmax.f32 %v2623, 0.0
        %v2635 = vpack.c.bf16 %v2630, %v2625
        %v2636 = vpack.c.bf16 %v2631, %v2626
        %v2637 = vpack.c.bf16 %v2632, %v2627
        %v2638 = vpack.c.bf16 %v2633, %v2628
        %v2639 = vpack.c.bf16 %v2634, %v2629
        %v2640 = vld [vmem:[#allocation8] sm:$0xff]
        %v2641 = vld [vmem:[#allocation8 + $0x8] sm:$0xf]
        %v2642 = vld [vmem:[#allocation8 + $0xc] sm:$0xff]
        %v2643 = vld [vmem:[#allocation8 + $0x14] sm:$0xf]
        %v2644 = vld [vmem:[#allocation8 + $0x18] sm:$0xff]
        %v2645 = vld [vmem:[#allocation8 + $0x20] sm:$0xf]
        %v2646 = vld [vmem:[#allocation8 + $0x24] sm:$0xff]
        %v2647 = vld [vmem:[#allocation8 + $0x2c] sm:$0xf]
        %v2648 = vld [vmem:[#allocation8 + $0x30] sm:$0xff]
        %v2649 = vld [vmem:[#allocation8 + $0x38] sm:$0xf]
        %v2650 = vld [vmem:[#allocation8 + $0x3c] sm:$0xff]
        %v2651 = vld [vmem:[#allocation8 + $0x44] sm:$0xf]
        %v2652 = vld [vmem:[#allocation8 + $0x48] sm:$0xff]
        %v2653 = vld [vmem:[#allocation8 + $0x50] sm:$0xf]
        %v2654 = vld [vmem:[#allocation8 + $0x54] sm:$0xff]
        %v2655 = vld [vmem:[#allocation8 + $0x5c] sm:$0xf]
        %v2656 = vld [vmem:[#allocation8 + $0x60] sm:$0xff]
        %v2657 = vld [vmem:[#allocation8 + $0x68] sm:$0xf]
        %v2658 = vld [vmem:[#allocation8 + $0x6c] sm:$0xff]
        %v2659 = vld [vmem:[#allocation8 + $0x74] sm:$0xf]
        %v2660 = vld [vmem:[#allocation8 + $0x78] sm:$0xff]
        %v2661 = vld [vmem:[#allocation8 + $0x80] sm:$0xf]
        %v2662 = vld [vmem:[#allocation8 + $0x84] sm:$0xff]
        %v2663 = vld [vmem:[#allocation8 + $0x8c] sm:$0xf]
        %v2664 = vld [vmem:[#allocation8 + $0x90] sm:$0xff]
        %v2665 = vld [vmem:[#allocation8 + $0x98] sm:$0xf]
        %v2666 = vld [vmem:[#allocation8 + $0x9c] sm:$0xff]
        %v2667 = vld [vmem:[#allocation8 + $0xa4] sm:$0xf]
        %v2668 = vld [vmem:[#allocation8 + $0xa8] sm:$0xff]
        %v2669 = vld [vmem:[#allocation8 + $0xb0] sm:$0xf]
        %v2670 = vld [vmem:[#allocation8 + $0xb4] sm:$0xff]
        %v2671 = vld [vmem:[#allocation8 + $0xbc] sm:$0xf]
        %v2672 = vld [vmem:[#allocation8 + $0xc0] sm:$0xff]
        %v2673 = vld [vmem:[#allocation8 + $0xc8] sm:$0xf]
        %v2674 = vld [vmem:[#allocation8 + $0xcc] sm:$0xff]
        %v2675 = vld [vmem:[#allocation8 + $0xd4] sm:$0xf]
        %v2676 = vld [vmem:[#allocation8 + $0xd8] sm:$0xff]
        %v2677 = vld [vmem:[#allocation8 + $0xe0] sm:$0xf]
        %v2678 = vld [vmem:[#allocation8 + $0xe4] sm:$0xff]
        %v2679 = vld [vmem:[#allocation8 + $0xec] sm:$0xf]
        %v2680 = vld [vmem:[#allocation8 + $0xf0] sm:$0xff]
        %v2681 = vld [vmem:[#allocation8 + $0xf8] sm:$0xf]
        %v2682 = vld [vmem:[#allocation8 + $0xfc] sm:$0xff]
        %v2683 = vld [vmem:[#allocation8 + $0x104] sm:$0xf]
        %v2684 = vld [vmem:[#allocation8 + $0x108] sm:$0xff]
        %v2685 = vld [vmem:[#allocation8 + $0x110] sm:$0xf]
        %v2686 = vld [vmem:[#allocation8 + $0x114] sm:$0xff]
        %v2687 = vld [vmem:[#allocation8 + $0x11c] sm:$0xf]
        %v2688 = vld [vmem:[#allocation8 + $0x120] sm:$0xff]
        %v2689 = vld [vmem:[#allocation8 + $0x128] sm:$0xf]
        %v2690 = vld [vmem:[#allocation8 + $0x12c] sm:$0xff]
        %v2691 = vld [vmem:[#allocation8 + $0x134] sm:$0xf]
        %v2692 = vld [vmem:[#allocation8 + $0x138] sm:$0xff]
        %v2693 = vld [vmem:[#allocation8 + $0x140] sm:$0xf]
        %v2694 = vld [vmem:[#allocation8 + $0x144] sm:$0xff]
        %v2695 = vld [vmem:[#allocation8 + $0x14c] sm:$0xf]
        %v2696 = vld [vmem:[#allocation8 + $0x150] sm:$0xff]
        %v2697 = vld [vmem:[#allocation8 + $0x158] sm:$0xf]
        %v2698 = vld [vmem:[#allocation8 + $0x15c] sm:$0xff]
        %v2699 = vld [vmem:[#allocation8 + $0x164] sm:$0xf]
        %v2700 = vld [vmem:[#allocation8 + $0x168] sm:$0xff]
        %v2701 = vld [vmem:[#allocation8 + $0x170] sm:$0xf]
        %v2702 = vld [vmem:[#allocation8 + $0x174] sm:$0xff]
        %v2703 = vld [vmem:[#allocation8 + $0x17c] sm:$0xf]
        %v2704 = vld [vmem:[#allocation8 + $0x180] sm:$0xff]
        %v2705 = vld [vmem:[#allocation8 + $0x188] sm:$0xf]
        %v2706 = vld [vmem:[#allocation8 + $0x18c] sm:$0xff]
        %v2707 = vld [vmem:[#allocation8 + $0x194] sm:$0xf]
        %v2708 = vld [vmem:[#allocation8 + $0x198] sm:$0xff]
        %v2709 = vld [vmem:[#allocation8 + $0x1a0] sm:$0xf]
        %v2710 = vld [vmem:[#allocation8 + $0x1a4] sm:$0xff]
        %v2711 = vld [vmem:[#allocation8 + $0x1ac] sm:$0xf]
        %v2712 = vld [vmem:[#allocation8 + $0x1b0] sm:$0xff]
        %v2713 = vld [vmem:[#allocation8 + $0x1b8] sm:$0xf]
        %v2714 = vld [vmem:[#allocation8 + $0x1bc] sm:$0xff]
        %v2715 = vld [vmem:[#allocation8 + $0x1c4] sm:$0xf]
        %v2716 = vld [vmem:[#allocation8 + $0x1c8] sm:$0xff]
        %v2717 = vld [vmem:[#allocation8 + $0x1d0] sm:$0xf]
        %v2718 = vld [vmem:[#allocation8 + $0x1d4] sm:$0xff]
        %v2719 = vld [vmem:[#allocation8 + $0x1dc] sm:$0xf]
        %v2720 = vld [vmem:[#allocation8 + $0x1e0] sm:$0xff]
        %v2721 = vld [vmem:[#allocation8 + $0x1e8] sm:$0xf]
        %v2722 = vld [vmem:[#allocation8 + $0x1ec] sm:$0xff]
        %v2723 = vld [vmem:[#allocation8 + $0x1f4] sm:$0xf]
        %v2724 = vld [vmem:[#allocation8 + $0x1f8] sm:$0xff]
        %v2725 = vld [vmem:[#allocation8 + $0x200] sm:$0xf]
        %v2726 = vld [vmem:[#allocation8 + $0x204] sm:$0xff]
        %v2727 = vld [vmem:[#allocation8 + $0x20c] sm:$0xf]
        %v2728 = vld [vmem:[#allocation8 + $0x210] sm:$0xff]
        %v2729 = vld [vmem:[#allocation8 + $0x218] sm:$0xf]
        %v2730 = vld [vmem:[#allocation8 + $0x21c] sm:$0xff]
        %v2731 = vld [vmem:[#allocation8 + $0x224] sm:$0xf]
        %v2732 = vld [vmem:[#allocation8 + $0x228] sm:$0xff]
        %v2733 = vld [vmem:[#allocation8 + $0x230] sm:$0xf]
        %v2734 = vld [vmem:[#allocation8 + $0x234] sm:$0xff]
        %v2735 = vld [vmem:[#allocation8 + $0x23c] sm:$0xf]
        %v2736 = vld [vmem:[#allocation8 + $0x240] sm:$0xff]
        %v2737 = vld [vmem:[#allocation8 + $0x248] sm:$0xf]
        %v2738 = vld [vmem:[#allocation8 + $0x24c] sm:$0xff]
        %v2739 = vld [vmem:[#allocation8 + $0x254] sm:$0xf]
        %v2740 = vld [vmem:[#allocation8 + $0x258] sm:$0xff]
        %v2741 = vld [vmem:[#allocation8 + $0x260] sm:$0xf]
        %v2742 = vld [vmem:[#allocation8 + $0x264] sm:$0xff]
        %v2743 = vld [vmem:[#allocation8 + $0x26c] sm:$0xf]
        %v2744 = vld [vmem:[#allocation8 + $0x270] sm:$0xff]
        %v2745 = vld [vmem:[#allocation8 + $0x278] sm:$0xf]
        %v2746 = vld [vmem:[#allocation8 + $0x27c] sm:$0xff]
        %v2747 = vld [vmem:[#allocation8 + $0x284] sm:$0xf]
        %v2748 = vld [vmem:[#allocation8 + $0x288] sm:$0xff]
        %v2749 = vld [vmem:[#allocation8 + $0x290] sm:$0xf]
        %v2750 = vld [vmem:[#allocation8 + $0x294] sm:$0xff]
        %v2751 = vld [vmem:[#allocation8 + $0x29c] sm:$0xf]
        %v2752 = vld [vmem:[#allocation8 + $0x2a0] sm:$0xff]
        %v2753 = vld [vmem:[#allocation8 + $0x2a8] sm:$0xf]
        %v2754 = vld [vmem:[#allocation8 + $0x2ac] sm:$0xff]
        %v2755 = vld [vmem:[#allocation8 + $0x2b4] sm:$0xf]
        %v2756 = vld [vmem:[#allocation8 + $0x2b8] sm:$0xff]
        %v2757 = vld [vmem:[#allocation8 + $0x2c0] sm:$0xf]
        %v2758 = vld [vmem:[#allocation8 + $0x2c4] sm:$0xff]
        %v2759 = vld [vmem:[#allocation8 + $0x2cc] sm:$0xf]
        %v2760 = vld [vmem:[#allocation8 + $0x2d0] sm:$0xff]
        %v2761 = vld [vmem:[#allocation8 + $0x2d8] sm:$0xf]
        %v2762 = vld [vmem:[#allocation8 + $0x2dc] sm:$0xff]
        %v2763 = vld [vmem:[#allocation8 + $0x2e4] sm:$0xf]
        %v2764 = vld [vmem:[#allocation8 + $0x2e8] sm:$0xff]
        %v2765 = vld [vmem:[#allocation8 + $0x2f0] sm:$0xf]
        %v2766 = vld [vmem:[#allocation8 + $0x2f4] sm:$0xff]
        %v2767 = vld [vmem:[#allocation8 + $0x2fc] sm:$0xf]
        %v2768 = vld [vmem:[#allocation8 + $0x300] sm:$0xff]
        %v2769 = vld [vmem:[#allocation8 + $0x308] sm:$0xf]
        %v2770 = vld [vmem:[#allocation8 + $0x30c] sm:$0xff]
        %v2771 = vld [vmem:[#allocation8 + $0x314] sm:$0xf]
        %v2772 = vld [vmem:[#allocation8 + $0x318] sm:$0xff]
        %v2773 = vld [vmem:[#allocation8 + $0x320] sm:$0xf]
        %v2774 = vld [vmem:[#allocation8 + $0x324] sm:$0xff]
        %v2775 = vld [vmem:[#allocation8 + $0x32c] sm:$0xf]
        %v2776 = vld [vmem:[#allocation8 + $0x330] sm:$0xff]
        %v2777 = vld [vmem:[#allocation8 + $0x338] sm:$0xf]
        %v2778 = vld [vmem:[#allocation8 + $0x33c] sm:$0xff]
        %v2779 = vld [vmem:[#allocation8 + $0x344] sm:$0xf]
        %v2780 = vld [vmem:[#allocation8 + $0x348] sm:$0xff]
        %v2781 = vld [vmem:[#allocation8 + $0x350] sm:$0xf]
        %v2782 = vld [vmem:[#allocation8 + $0x354] sm:$0xff]
        %v2783 = vld [vmem:[#allocation8 + $0x35c] sm:$0xf]
        %v2784 = vld [vmem:[#allocation8 + $0x360] sm:$0xff]
        %v2785 = vld [vmem:[#allocation8 + $0x368] sm:$0xf]
        %v2786 = vld [vmem:[#allocation8 + $0x36c] sm:$0xff]
        %v2787 = vld [vmem:[#allocation8 + $0x374] sm:$0xf]
        %v2788 = vld [vmem:[#allocation8 + $0x378] sm:$0xff]
        %v2789 = vld [vmem:[#allocation8 + $0x380] sm:$0xf]
        %v2790 = vld [vmem:[#allocation8 + $0x384] sm:$0xff]
        %v2791 = vld [vmem:[#allocation8 + $0x38c] sm:$0xf]
        %v2792 = vld [vmem:[#allocation8 + $0x390] sm:$0xff]
        %v2793 = vld [vmem:[#allocation8 + $0x398] sm:$0xf]
        %v2794 = vld [vmem:[#allocation8 + $0x39c] sm:$0xff]
        %v2795 = vld [vmem:[#allocation8 + $0x3a4] sm:$0xf]
        %v2796 = vld [vmem:[#allocation8 + $0x3a8] sm:$0xff]
        %v2797 = vld [vmem:[#allocation8 + $0x3b0] sm:$0xf]
        %v2798 = vld [vmem:[#allocation8 + $0x3b4] sm:$0xff]
        %v2799 = vld [vmem:[#allocation8 + $0x3bc] sm:$0xf]
        %v2800 = vld [vmem:[%s4] sm:$0x7]
        %v2802 = vperm.slane %v2800, 0
        %v2803 = vperm.slane %v2800, 1
        %v2804 = vperm.slane %v2800, 2
        %v2968 = vunpack.c.l.b16 %v2640
        %v2969 = vunpack.c.h.b16 %v2640
        %v2970 = vunpack.c.l.b16 %v2641
        %v2971 = vunpack.c.l.b16 %v2642
        %v2972 = vunpack.c.h.b16 %v2642
        %v2973 = vunpack.c.l.b16 %v2643
        %v2974 = vunpack.c.l.b16 %v2644
        %v2975 = vunpack.c.h.b16 %v2644
        %v2976 = vunpack.c.l.b16 %v2645
        %v2977 = vunpack.c.l.b16 %v2646
        %v2978 = vunpack.c.h.b16 %v2646
        %v2979 = vunpack.c.l.b16 %v2647
        %v2980 = vunpack.c.l.b16 %v2648
        %v2981 = vunpack.c.h.b16 %v2648
        %v2982 = vunpack.c.l.b16 %v2649
        %v2983 = vunpack.c.l.b16 %v2650
        %v2984 = vunpack.c.h.b16 %v2650
        %v2985 = vunpack.c.l.b16 %v2651
        %v2986 = vunpack.c.l.b16 %v2652
        %v2987 = vunpack.c.h.b16 %v2652
        %v2988 = vunpack.c.l.b16 %v2653
        %v2989 = vunpack.c.l.b16 %v2654
        %v2990 = vunpack.c.h.b16 %v2654
        %v2991 = vunpack.c.l.b16 %v2655
        %v2992 = vunpack.c.l.b16 %v2656
        %v2993 = vunpack.c.h.b16 %v2656
        %v2994 = vunpack.c.l.b16 %v2657
        %v2995 = vunpack.c.l.b16 %v2658
        %v2996 = vunpack.c.h.b16 %v2658
        %v2997 = vunpack.c.l.b16 %v2659
        %v2998 = vunpack.c.l.b16 %v2660
        %v2999 = vunpack.c.h.b16 %v2660
        %v3000 = vunpack.c.l.b16 %v2661
        %v3001 = vunpack.c.l.b16 %v2662
        %v3002 = vunpack.c.h.b16 %v2662
        %v3003 = vunpack.c.l.b16 %v2663
        %v3004 = vunpack.c.l.b16 %v2664
        %v3005 = vunpack.c.h.b16 %v2664
        %v3006 = vunpack.c.l.b16 %v2665
        %v3007 = vunpack.c.l.b16 %v2666
        %v3008 = vunpack.c.h.b16 %v2666
        %v3009 = vunpack.c.l.b16 %v2667
        %v3010 = vunpack.c.l.b16 %v2668
        %v3011 = vunpack.c.h.b16 %v2668
        %v3012 = vunpack.c.l.b16 %v2669
        %v3013 = vunpack.c.l.b16 %v2670
        %v3014 = vunpack.c.h.b16 %v2670
        %v3015 = vunpack.c.l.b16 %v2671
        %v3016 = vunpack.c.l.b16 %v2672
        %v3017 = vunpack.c.h.b16 %v2672
        %v3018 = vunpack.c.l.b16 %v2673
        %v3019 = vunpack.c.l.b16 %v2674
        %v3020 = vunpack.c.h.b16 %v2674
        %v3021 = vunpack.c.l.b16 %v2675
        %v3022 = vunpack.c.l.b16 %v2676
        %v3023 = vunpack.c.h.b16 %v2676
        %v3024 = vunpack.c.l.b16 %v2677
        %v3025 = vunpack.c.l.b16 %v2678
        %v3026 = vunpack.c.h.b16 %v2678
        %v3027 = vunpack.c.l.b16 %v2679
        %v3028 = vunpack.c.l.b16 %v2680
        %v3029 = vunpack.c.h.b16 %v2680
        %v3030 = vunpack.c.l.b16 %v2681
        %v3031 = vunpack.c.l.b16 %v2682
        %v3032 = vunpack.c.h.b16 %v2682
        %v3033 = vunpack.c.l.b16 %v2683
        %v3034 = vunpack.c.l.b16 %v2684
        %v3035 = vunpack.c.h.b16 %v2684
        %v3036 = vunpack.c.l.b16 %v2685
        %v3037 = vunpack.c.l.b16 %v2686
        %v3038 = vunpack.c.h.b16 %v2686
        %v3039 = vunpack.c.l.b16 %v2687
        %v3040 = vunpack.c.l.b16 %v2688
        %v3041 = vunpack.c.h.b16 %v2688
        %v3042 = vunpack.c.l.b16 %v2689
        %v3043 = vunpack.c.l.b16 %v2690
        %v3044 = vunpack.c.h.b16 %v2690
        %v3045 = vunpack.c.l.b16 %v2691
        %v3046 = vunpack.c.l.b16 %v2692
        %v3047 = vunpack.c.h.b16 %v2692
        %v3048 = vunpack.c.l.b16 %v2693
        %v3049 = vunpack.c.l.b16 %v2694
        %v3050 = vunpack.c.h.b16 %v2694
        %v3051 = vunpack.c.l.b16 %v2695
        %v3052 = vunpack.c.l.b16 %v2696
        %v3053 = vunpack.c.h.b16 %v2696
        %v3054 = vunpack.c.l.b16 %v2697
        %v3055 = vunpack.c.l.b16 %v2698
        %v3056 = vunpack.c.h.b16 %v2698
        %v3057 = vunpack.c.l.b16 %v2699
        %v3058 = vunpack.c.l.b16 %v2700
        %v3059 = vunpack.c.h.b16 %v2700
        %v3060 = vunpack.c.l.b16 %v2701
        %v3061 = vunpack.c.l.b16 %v2702
        %v3062 = vunpack.c.h.b16 %v2702
        %v3063 = vunpack.c.l.b16 %v2703
        %v3064 = vunpack.c.l.b16 %v2704
        %v3065 = vunpack.c.h.b16 %v2704
        %v3066 = vunpack.c.l.b16 %v2705
        %v3067 = vunpack.c.l.b16 %v2706
        %v3068 = vunpack.c.h.b16 %v2706
        %v3069 = vunpack.c.l.b16 %v2707
        %v3070 = vunpack.c.l.b16 %v2708
        %v3071 = vunpack.c.h.b16 %v2708
        %v3072 = vunpack.c.l.b16 %v2709
        %v3073 = vunpack.c.l.b16 %v2710
        %v3074 = vunpack.c.h.b16 %v2710
        %v3075 = vunpack.c.l.b16 %v2711
        %v3076 = vunpack.c.l.b16 %v2712
        %v3077 = vunpack.c.h.b16 %v2712
        %v3078 = vunpack.c.l.b16 %v2713
        %v3079 = vunpack.c.l.b16 %v2714
        %v3080 = vunpack.c.h.b16 %v2714
        %v3081 = vunpack.c.l.b16 %v2715
        %v3082 = vunpack.c.l.b16 %v2716
        %v3083 = vunpack.c.h.b16 %v2716
        %v3084 = vunpack.c.l.b16 %v2717
        %v3085 = vunpack.c.l.b16 %v2718
        %v3086 = vunpack.c.h.b16 %v2718
        %v3087 = vunpack.c.l.b16 %v2719
        %v3088 = vunpack.c.l.b16 %v2720
        %v3089 = vunpack.c.h.b16 %v2720
        %v3090 = vunpack.c.l.b16 %v2721
        %v3091 = vunpack.c.l.b16 %v2722
        %v3092 = vunpack.c.h.b16 %v2722
        %v3093 = vunpack.c.l.b16 %v2723
        %v3094 = vunpack.c.l.b16 %v2724
        %v3095 = vunpack.c.h.b16 %v2724
        %v3096 = vunpack.c.l.b16 %v2725
        %v3097 = vunpack.c.l.b16 %v2726
        %v3098 = vunpack.c.h.b16 %v2726
        %v3099 = vunpack.c.l.b16 %v2727
        %v3100 = vunpack.c.l.b16 %v2728
        %v3101 = vunpack.c.h.b16 %v2728
        %v3102 = vunpack.c.l.b16 %v2729
        %v3103 = vunpack.c.l.b16 %v2730
        %v3104 = vunpack.c.h.b16 %v2730
        %v3105 = vunpack.c.l.b16 %v2731
        %v3106 = vunpack.c.l.b16 %v2732
        %v3107 = vunpack.c.h.b16 %v2732
        %v3108 = vunpack.c.l.b16 %v2733
        %v3109 = vunpack.c.l.b16 %v2734
        %v3110 = vunpack.c.h.b16 %v2734
        %v3111 = vunpack.c.l.b16 %v2735
        %v3112 = vunpack.c.l.b16 %v2736
        %v3113 = vunpack.c.h.b16 %v2736
        %v3114 = vunpack.c.l.b16 %v2737
        %v3115 = vunpack.c.l.b16 %v2738
        %v3116 = vunpack.c.h.b16 %v2738
        %v3117 = vunpack.c.l.b16 %v2739
        %v3118 = vunpack.c.l.b16 %v2740
        %v3119 = vunpack.c.h.b16 %v2740
        %v3120 = vunpack.c.l.b16 %v2741
        %v3121 = vunpack.c.l.b16 %v2742
        %v3122 = vunpack.c.h.b16 %v2742
        %v3123 = vunpack.c.l.b16 %v2743
        %v3124 = vunpack.c.l.b16 %v2744
        %v3125 = vunpack.c.h.b16 %v2744
        %v3126 = vunpack.c.l.b16 %v2745
        %v3127 = vunpack.c.l.b16 %v2746
        %v3128 = vunpack.c.h.b16 %v2746
        %v3129 = vunpack.c.l.b16 %v2747
        %v3130 = vunpack.c.l.b16 %v2748
        %v3131 = vunpack.c.h.b16 %v2748
        %v3132 = vunpack.c.l.b16 %v2749
        %v3133 = vunpack.c.l.b16 %v2750
        %v3134 = vunpack.c.h.b16 %v2750
        %v3135 = vunpack.c.l.b16 %v2751
        %v3136 = vunpack.c.l.b16 %v2752
        %v3137 = vunpack.c.h.b16 %v2752
        %v3138 = vunpack.c.l.b16 %v2753
        %v3139 = vunpack.c.l.b16 %v2754
        %v3140 = vunpack.c.h.b16 %v2754
        %v3141 = vunpack.c.l.b16 %v2755
        %v3142 = vunpack.c.l.b16 %v2756
        %v3143 = vunpack.c.h.b16 %v2756
        %v3144 = vunpack.c.l.b16 %v2757
        %v3145 = vunpack.c.l.b16 %v2758
        %v3146 = vunpack.c.h.b16 %v2758
        %v3147 = vunpack.c.l.b16 %v2759
        %v3148 = vunpack.c.l.b16 %v2760
        %v3149 = vunpack.c.h.b16 %v2760
        %v3150 = vunpack.c.l.b16 %v2761
        %v3151 = vunpack.c.l.b16 %v2762
        %v3152 = vunpack.c.h.b16 %v2762
        %v3153 = vunpack.c.l.b16 %v2763
        %v3154 = vunpack.c.l.b16 %v2764
        %v3155 = vunpack.c.h.b16 %v2764
        %v3156 = vunpack.c.l.b16 %v2765
        %v3157 = vunpack.c.l.b16 %v2766
        %v3158 = vunpack.c.h.b16 %v2766
        %v3159 = vunpack.c.l.b16 %v2767
        %v3160 = vunpack.c.l.b16 %v2768
        %v3161 = vunpack.c.h.b16 %v2768
        %v3162 = vunpack.c.l.b16 %v2769
        %v3163 = vunpack.c.l.b16 %v2770
        %v3164 = vunpack.c.h.b16 %v2770
        %v3165 = vunpack.c.l.b16 %v2771
        %v3166 = vunpack.c.l.b16 %v2772
        %v3167 = vunpack.c.h.b16 %v2772
        %v3168 = vunpack.c.l.b16 %v2773
        %v3169 = vunpack.c.l.b16 %v2774
        %v3170 = vunpack.c.h.b16 %v2774
        %v3171 = vunpack.c.l.b16 %v2775
        %v3172 = vunpack.c.l.b16 %v2776
        %v3173 = vunpack.c.h.b16 %v2776
        %v3174 = vunpack.c.l.b16 %v2777
        %v3175 = vunpack.c.l.b16 %v2778
        %v3176 = vunpack.c.h.b16 %v2778
        %v3177 = vunpack.c.l.b16 %v2779
        %v3178 = vunpack.c.l.b16 %v2780
        %v3179 = vunpack.c.h.b16 %v2780
        %v3180 = vunpack.c.l.b16 %v2781
        %v3181 = vunpack.c.l.b16 %v2782
        %v3182 = vunpack.c.h.b16 %v2782
        %v3183 = vunpack.c.l.b16 %v2783
        %v3184 = vunpack.c.l.b16 %v2784
        %v3185 = vunpack.c.h.b16 %v2784
        %v3186 = vunpack.c.l.b16 %v2785
        %v3187 = vunpack.c.l.b16 %v2786
        %v3188 = vunpack.c.h.b16 %v2786
        %v3189 = vunpack.c.l.b16 %v2787
        %v3190 = vunpack.c.l.b16 %v2788
        %v3191 = vunpack.c.h.b16 %v2788
        %v3192 = vunpack.c.l.b16 %v2789
        %v3193 = vunpack.c.l.b16 %v2790
        %v3194 = vunpack.c.h.b16 %v2790
        %v3195 = vunpack.c.l.b16 %v2791
        %v3196 = vunpack.c.l.b16 %v2792
        %v3197 = vunpack.c.h.b16 %v2792
        %v3198 = vunpack.c.l.b16 %v2793
        %v3199 = vunpack.c.l.b16 %v2794
        %v3200 = vunpack.c.h.b16 %v2794
        %v3201 = vunpack.c.l.b16 %v2795
        %v3202 = vunpack.c.l.b16 %v2796
        %v3203 = vunpack.c.h.b16 %v2796
        %v3204 = vunpack.c.l.b16 %v2797
        %v3205 = vunpack.c.l.b16 %v2798
        %v3206 = vunpack.c.h.b16 %v2798
        %v3207 = vunpack.c.l.b16 %v2799
        %v3208 = vpack.c.b16 %v2971, %v2968
        %v3209 = vpack.c.b16 %v2972, %v2969
        %v3210 = vpack.c.b16 %v2973, %v2970
        %v3211 = vpack.c.b16 %v2977, %v2974
        %v3212 = vpack.c.b16 %v2978, %v2975
        %v3213 = vpack.c.b16 %v2979, %v2976
        %v3214 = vpack.c.b16 %v2983, %v2980
        %v3215 = vpack.c.b16 %v2984, %v2981
        %v3216 = vpack.c.b16 %v2985, %v2982
        %v3217 = vpack.c.b16 %v2989, %v2986
        %v3218 = vpack.c.b16 %v2990, %v2987
        %v3219 = vpack.c.b16 %v2991, %v2988
        %v3220 = vpack.c.b16 %v2995, %v2992
        %v3221 = vpack.c.b16 %v2996, %v2993
        %v3222 = vpack.c.b16 %v2997, %v2994
        %v3223 = vpack.c.b16 %v3001, %v2998
        %v3224 = vpack.c.b16 %v3002, %v2999
        %v3225 = vpack.c.b16 %v3003, %v3000
        %v3226 = vpack.c.b16 %v3007, %v3004
        %v3227 = vpack.c.b16 %v3008, %v3005
        %v3228 = vpack.c.b16 %v3009, %v3006
        %v3229 = vpack.c.b16 %v3013, %v3010
        %v3230 = vpack.c.b16 %v3014, %v3011
        %v3231 = vpack.c.b16 %v3015, %v3012
        %v3232 = vpack.c.b16 %v3019, %v3016
        %v3233 = vpack.c.b16 %v3020, %v3017
        %v3234 = vpack.c.b16 %v3021, %v3018
        %v3235 = vpack.c.b16 %v3025, %v3022
        %v3236 = vpack.c.b16 %v3026, %v3023
        %v3237 = vpack.c.b16 %v3027, %v3024
        %v3238 = vpack.c.b16 %v3031, %v3028
        %v3239 = vpack.c.b16 %v3032, %v3029
        %v3240 = vpack.c.b16 %v3033, %v3030
        %v3241 = vpack.c.b16 %v3037, %v3034
        %v3242 = vpack.c.b16 %v3038, %v3035
        %v3243 = vpack.c.b16 %v3039, %v3036
        %v3244 = vpack.c.b16 %v3043, %v3040
        %v3245 = vpack.c.b16 %v3044, %v3041
        %v3246 = vpack.c.b16 %v3045, %v3042
        %v3247 = vpack.c.b16 %v3049, %v3046
        %v3248 = vpack.c.b16 %v3050, %v3047
        %v3249 = vpack.c.b16 %v3051, %v3048
        %v3250 = vpack.c.b16 %v3055, %v3052
        %v3251 = vpack.c.b16 %v3056, %v3053
        %v3252 = vpack.c.b16 %v3057, %v3054
        %v3253 = vpack.c.b16 %v3061, %v3058
        %v3254 = vpack.c.b16 %v3062, %v3059
        %v3255 = vpack.c.b16 %v3063, %v3060
        %v3256 = vpack.c.b16 %v3067, %v3064
        %v3257 = vpack.c.b16 %v3068, %v3065
        %v3258 = vpack.c.b16 %v3069, %v3066
        %v3259 = vpack.c.b16 %v3073, %v3070
        %v3260 = vpack.c.b16 %v3074, %v3071
        %v3261 = vpack.c.b16 %v3075, %v3072
        %v3262 = vpack.c.b16 %v3079, %v3076
        %v3263 = vpack.c.b16 %v3080, %v3077
        %v3264 = vpack.c.b16 %v3081, %v3078
        %v3265 = vpack.c.b16 %v3085, %v3082
        %v3266 = vpack.c.b16 %v3086, %v3083
        %v3267 = vpack.c.b16 %v3087, %v3084
        %v3268 = vpack.c.b16 %v3091, %v3088
        %v3269 = vpack.c.b16 %v3092, %v3089
        %v3270 = vpack.c.b16 %v3093, %v3090
        %v3271 = vpack.c.b16 %v3097, %v3094
        %v3272 = vpack.c.b16 %v3098, %v3095
        %v3273 = vpack.c.b16 %v3099, %v3096
        %v3274 = vpack.c.b16 %v3103, %v3100
        %v3275 = vpack.c.b16 %v3104, %v3101
        %v3276 = vpack.c.b16 %v3105, %v3102
        %v3277 = vpack.c.b16 %v3109, %v3106
        %v3278 = vpack.c.b16 %v3110, %v3107
        %v3279 = vpack.c.b16 %v3111, %v3108
        %v3280 = vpack.c.b16 %v3115, %v3112
        %v3281 = vpack.c.b16 %v3116, %v3113
        %v3282 = vpack.c.b16 %v3117, %v3114
        %v3283 = vpack.c.b16 %v3121, %v3118
        %v3284 = vpack.c.b16 %v3122, %v3119
        %v3285 = vpack.c.b16 %v3123, %v3120
        %v3286 = vpack.c.b16 %v3127, %v3124
        %v3287 = vpack.c.b16 %v3128, %v3125
        %v3288 = vpack.c.b16 %v3129, %v3126
        %v3289 = vpack.c.b16 %v3133, %v3130
        %v3290 = vpack.c.b16 %v3134, %v3131
        %v3291 = vpack.c.b16 %v3135, %v3132
        %v3292 = vpack.c.b16 %v3139, %v3136
        %v3293 = vpack.c.b16 %v3140, %v3137
        %v3294 = vpack.c.b16 %v3141, %v3138
        %v3295 = vpack.c.b16 %v3145, %v3142
        %v3296 = vpack.c.b16 %v3146, %v3143
        %v3297 = vpack.c.b16 %v3147, %v3144
        %v3298 = vpack.c.b16 %v3151, %v3148
        %v3299 = vpack.c.b16 %v3152, %v3149
        %v3300 = vpack.c.b16 %v3153, %v3150
        %v3301 = vpack.c.b16 %v3157, %v3154
        %v3302 = vpack.c.b16 %v3158, %v3155
        %v3303 = vpack.c.b16 %v3159, %v3156
        %v3304 = vpack.c.b16 %v3163, %v3160
        %v3305 = vpack.c.b16 %v3164, %v3161
        %v3306 = vpack.c.b16 %v3165, %v3162
        %v3307 = vpack.c.b16 %v3169, %v3166
        %v3308 = vpack.c.b16 %v3170, %v3167
        %v3309 = vpack.c.b16 %v3171, %v3168
        %v3310 = vpack.c.b16 %v3175, %v3172
        %v3311 = vpack.c.b16 %v3176, %v3173
        %v3312 = vpack.c.b16 %v3177, %v3174
        %v3313 = vpack.c.b16 %v3181, %v3178
        %v3314 = vpack.c.b16 %v3182, %v3179
        %v3315 = vpack.c.b16 %v3183, %v3180
        %v3316 = vpack.c.b16 %v3187, %v3184
        %v3317 = vpack.c.b16 %v3188, %v3185
        %v3318 = vpack.c.b16 %v3189, %v3186
        %v3319 = vpack.c.b16 %v3193, %v3190
        %v3320 = vpack.c.b16 %v3194, %v3191
        %v3321 = vpack.c.b16 %v3195, %v3192
        %v3322 = vpack.c.b16 %v3199, %v3196
        %v3323 = vpack.c.b16 %v3200, %v3197
        %v3324 = vpack.c.b16 %v3201, %v3198
        %v3325 = vpack.c.b16 %v3205, %v3202
        %v3326 = vpack.c.b16 %v3206, %v3203
        %v3327 = vpack.c.b16 %v3207, %v3204
        %3448 = vmatpush.bf16.msra.mxu0 %v3229
        %3449 = vmatpush.bf16.msra.mxu0 %v3226
        %3450 = vmatpush.bf16.msra.mxu0 %v3223
        %3451 = vmatpush.bf16.msra.mxu0 %v3220
        %3452 = vmatpush.bf16.msra.mxu0 %v3217
        %3453 = vmatpush.bf16.msra.mxu0 %v3214
        %3454 = vmatpush.bf16.msra.mxu0 %v3211
        %3455 = vmatpush.bf16.msra.mxu0 %v3208
        %3456 = vmatmul.bf16.gmra.mxu0 %v2635
        %v3457 = vpop.f32.mrf.mxu0
        %v3458 = vadd.f32 %v2802, %v3457
        %v3459 = vpop.f32.mrf.mxu0
        %v3460 = vadd.f32 %v2802, %v3459
        %3461 = vdwg.mxu0
        %3462 = vmatpush.bf16.msra.mxu0 %v3253
        %3463 = vmatpush.bf16.msra.mxu0 %v3250
        %3464 = vmatpush.bf16.msra.mxu0 %v3247
        %3465 = vmatpush.bf16.msra.mxu0 %v3244
        %3466 = vmatpush.bf16.msra.mxu0 %v3241
        %3467 = vmatpush.bf16.msra.mxu0 %v3238
        %3468 = vmatpush.bf16.msra.mxu0 %v3235
        %3469 = vmatpush.bf16.msra.mxu0 %v3232
        %3470 = vmatmul.bf16.gmra.mxu0 %v2636
        %v3471 = vpop.f32.mrf.mxu0
        %v3472 = vadd.f32 %v3458, %v3471
        %v3473 = vpop.f32.mrf.mxu0
        %v3474 = vadd.f32 %v3460, %v3473
        %3475 = vdwg.mxu0
        %3476 = vmatpush.bf16.msra.mxu0 %v3277
        %3477 = vmatpush.bf16.msra.mxu0 %v3274
        %3478 = vmatpush.bf16.msra.mxu0 %v3271
        %3479 = vmatpush.bf16.msra.mxu0 %v3268
        %3480 = vmatpush.bf16.msra.mxu0 %v3265
        %3481 = vmatpush.bf16.msra.mxu0 %v3262
        %3482 = vmatpush.bf16.msra.mxu0 %v3259
        %3483 = vmatpush.bf16.msra.mxu0 %v3256
        %3484 = vmatmul.bf16.gmra.mxu0 %v2637
        %v3485 = vpop.f32.mrf.mxu0
        %v3486 = vadd.f32 %v3472, %v3485
        %v3487 = vpop.f32.mrf.mxu0
        %v3488 = vadd.f32 %v3474, %v3487
        %3489 = vdwg.mxu0
        %3490 = vmatpush.bf16.msra.mxu0 %v3301
        %3491 = vmatpush.bf16.msra.mxu0 %v3298
        %3492 = vmatpush.bf16.msra.mxu0 %v3295
        %3493 = vmatpush.bf16.msra.mxu0 %v3292
        %3494 = vmatpush.bf16.msra.mxu0 %v3289
        %3495 = vmatpush.bf16.msra.mxu0 %v3286
        %3496 = vmatpush.bf16.msra.mxu0 %v3283
        %3497 = vmatpush.bf16.msra.mxu0 %v3280
        %3498 = vmatmul.bf16.gmra.mxu0 %v2638
        %v3499 = vpop.f32.mrf.mxu0
        %v3500 = vadd.f32 %v3486, %v3499
        %v3501 = vpop.f32.mrf.mxu0
        %v3502 = vadd.f32 %v3488, %v3501
        %3503 = vdwg.mxu0
        %3504 = vmatpush.bf16.msra.mxu0 %v3325
        %3505 = vmatpush.bf16.msra.mxu0 %v3322
        %3506 = vmatpush.bf16.msra.mxu0 %v3319
        %3507 = vmatpush.bf16.msra.mxu0 %v3316
        %3508 = vmatpush.bf16.msra.mxu0 %v3313
        %3509 = vmatpush.bf16.msra.mxu0 %v3310
        %3510 = vmatpush.bf16.msra.mxu0 %v3307
        %3511 = vmatpush.bf16.msra.mxu0 %v3304
        %3512 = vmatmul.bf16.gmra.mxu0 %v2639
        %v3513 = vpop.f32.mrf.mxu0
        %v3514 = vadd.f32 %v3500, %v3513
        %v3515 = vpop.f32.mrf.mxu0
        %v3516 = vadd.f32 %v3502, %v3515
        %3517 = vdwg.mxu0
        %3518 = vmatpush.bf16.msra.mxu0 %v3230
        %3519 = vmatpush.bf16.msra.mxu0 %v3227
        %3520 = vmatpush.bf16.msra.mxu0 %v3224
        %3521 = vmatpush.bf16.msra.mxu0 %v3221
        %3522 = vmatpush.bf16.msra.mxu0 %v3218
        %3523 = vmatpush.bf16.msra.mxu0 %v3215
        %3524 = vmatpush.bf16.msra.mxu0 %v3212
        %3525 = vmatpush.bf16.msra.mxu0 %v3209
        %3526 = vmatmul.bf16.gmra.mxu0 %v2635
        %v3527 = vpop.f32.mrf.mxu0
        %v3528 = vadd.f32 %v2803, %v3527
        %v3529 = vpop.f32.mrf.mxu0
        %v3530 = vadd.f32 %v2803, %v3529
        %3531 = vdwg.mxu0
        %3532 = vmatpush.bf16.msra.mxu0 %v3254
        %3533 = vmatpush.bf16.msra.mxu0 %v3251
        %3534 = vmatpush.bf16.msra.mxu0 %v3248
        %3535 = vmatpush.bf16.msra.mxu0 %v3245
        %3536 = vmatpush.bf16.msra.mxu0 %v3242
        %3537 = vmatpush.bf16.msra.mxu0 %v3239
        %3538 = vmatpush.bf16.msra.mxu0 %v3236
        %3539 = vmatpush.bf16.msra.mxu0 %v3233
        %3540 = vmatmul.bf16.gmra.mxu0 %v2636
        %v3541 = vpop.f32.mrf.mxu0
        %v3542 = vadd.f32 %v3528, %v3541
        %v3543 = vpop.f32.mrf.mxu0
        %v3544 = vadd.f32 %v3530, %v3543
        %3545 = vdwg.mxu0
        %3546 = vmatpush.bf16.msra.mxu0 %v3278
        %3547 = vmatpush.bf16.msra.mxu0 %v3275
        %3548 = vmatpush.bf16.msra.mxu0 %v3272
        %3549 = vmatpush.bf16.msra.mxu0 %v3269
        %3550 = vmatpush.bf16.msra.mxu0 %v3266
        %3551 = vmatpush.bf16.msra.mxu0 %v3263
        %3552 = vmatpush.bf16.msra.mxu0 %v3260
        %3553 = vmatpush.bf16.msra.mxu0 %v3257
        %3554 = vmatmul.bf16.gmra.mxu0 %v2637
        %v3555 = vpop.f32.mrf.mxu0
        %v3556 = vadd.f32 %v3542, %v3555
        %v3557 = vpop.f32.mrf.mxu0
        %v3558 = vadd.f32 %v3544, %v3557
        %3559 = vdwg.mxu0
        %3560 = vmatpush.bf16.msra.mxu0 %v3302
        %3561 = vmatpush.bf16.msra.mxu0 %v3299
        %3562 = vmatpush.bf16.msra.mxu0 %v3296
        %3563 = vmatpush.bf16.msra.mxu0 %v3293
        %3564 = vmatpush.bf16.msra.mxu0 %v3290
        %3565 = vmatpush.bf16.msra.mxu0 %v3287
        %3566 = vmatpush.bf16.msra.mxu0 %v3284
        %3567 = vmatpush.bf16.msra.mxu0 %v3281
        %3568 = vmatmul.bf16.gmra.mxu0 %v2638
        %v3569 = vpop.f32.mrf.mxu0
        %v3570 = vadd.f32 %v3556, %v3569
        %v3571 = vpop.f32.mrf.mxu0
        %v3572 = vadd.f32 %v3558, %v3571
        %3573 = vdwg.mxu0
        %3574 = vmatpush.bf16.msra.mxu0 %v3326
        %3575 = vmatpush.bf16.msra.mxu0 %v3323
        %3576 = vmatpush.bf16.msra.mxu0 %v3320
        %3577 = vmatpush.bf16.msra.mxu0 %v3317
        %3578 = vmatpush.bf16.msra.mxu0 %v3314
        %3579 = vmatpush.bf16.msra.mxu0 %v3311
        %3580 = vmatpush.bf16.msra.mxu0 %v3308
        %3581 = vmatpush.bf16.msra.mxu0 %v3305
        %3582 = vmatmul.bf16.gmra.mxu0 %v2639
        %v3583 = vpop.f32.mrf.mxu0
        %v3584 = vadd.f32 %v3570, %v3583
        %v3585 = vpop.f32.mrf.mxu0
        %v3586 = vadd.f32 %v3572, %v3585
        %3587 = vdwg.mxu0
        %3588 = vmatpush.bf16.msra.mxu0 %v3231
        %3589 = vmatpush.bf16.msra.mxu0 %v3228
        %3590 = vmatpush.bf16.msra.mxu0 %v3225
        %3591 = vmatpush.bf16.msra.mxu0 %v3222
        %3592 = vmatpush.bf16.msra.mxu0 %v3219
        %3593 = vmatpush.bf16.msra.mxu0 %v3216
        %3594 = vmatpush.bf16.msra.mxu0 %v3213
        %3595 = vmatpush.bf16.msra.mxu0 %v3210
        %3596 = vmatmul.bf16.gmra.mxu0 %v2635
        %v3597 = vpop.f32.mrf.mxu0
        %v3598 = vadd.f32 %v2804, %v3597
        %v3599 = vpop.f32.mrf.mxu0
        %v3600 = vadd.f32 %v2804, %v3599
        %3601 = vdwg.mxu0
        %3602 = vmatpush.bf16.msra.mxu0 %v3255
        %3603 = vmatpush.bf16.msra.mxu0 %v3252
        %3604 = vmatpush.bf16.msra.mxu0 %v3249
        %3605 = vmatpush.bf16.msra.mxu0 %v3246
        %3606 = vmatpush.bf16.msra.mxu0 %v3243
        %3607 = vmatpush.bf16.msra.mxu0 %v3240
        %3608 = vmatpush.bf16.msra.mxu0 %v3237
        %3609 = vmatpush.bf16.msra.mxu0 %v3234
        %3610 = vmatmul.bf16.gmra.mxu0 %v2636
        %v3611 = vpop.f32.mrf.mxu0
        %v3612 = vadd.f32 %v3598, %v3611
        %v3613 = vpop.f32.mrf.mxu0
        %v3614 = vadd.f32 %v3600, %v3613
        %3615 = vdwg.mxu0
        %3616 = vmatpush.bf16.msra.mxu0 %v3279
        %3617 = vmatpush.bf16.msra.mxu0 %v3276
        %3618 = vmatpush.bf16.msra.mxu0 %v3273
        %3619 = vmatpush.bf16.msra.mxu0 %v3270
        %3620 = vmatpush.bf16.msra.mxu0 %v3267
        %3621 = vmatpush.bf16.msra.mxu0 %v3264
        %3622 = vmatpush.bf16.msra.mxu0 %v3261
        %3623 = vmatpush.bf16.msra.mxu0 %v3258
        %3624 = vmatmul.bf16.gmra.mxu0 %v2637
        %v3625 = vpop.f32.mrf.mxu0
        %v3626 = vadd.f32 %v3612, %v3625
        %v3627 = vpop.f32.mrf.mxu0
        %v3628 = vadd.f32 %v3614, %v3627
        %3629 = vdwg.mxu0
        %3630 = vmatpush.bf16.msra.mxu0 %v3303
        %3631 = vmatpush.bf16.msra.mxu0 %v3300
        %3632 = vmatpush.bf16.msra.mxu0 %v3297
        %3633 = vmatpush.bf16.msra.mxu0 %v3294
        %3634 = vmatpush.bf16.msra.mxu0 %v3291
        %3635 = vmatpush.bf16.msra.mxu0 %v3288
        %3636 = vmatpush.bf16.msra.mxu0 %v3285
        %3637 = vmatpush.bf16.msra.mxu0 %v3282
        %3638 = vmatmul.bf16.gmra.mxu0 %v2638
        %v3639 = vpop.f32.mrf.mxu0
        %v3640 = vadd.f32 %v3626, %v3639
        %v3641 = vpop.f32.mrf.mxu0
        %v3642 = vadd.f32 %v3628, %v3641
        %3643 = vdwg.mxu0
        %3644 = vmatpush.bf16.msra.mxu0 %v3327
        %3645 = vmatpush.bf16.msra.mxu0 %v3324
        %3646 = vmatpush.bf16.msra.mxu0 %v3321
        %3647 = vmatpush.bf16.msra.mxu0 %v3318
        %3648 = vmatpush.bf16.msra.mxu0 %v3315
        %3649 = vmatpush.bf16.msra.mxu0 %v3312
        %3650 = vmatpush.bf16.msra.mxu0 %v3309
        %3651 = vmatpush.bf16.msra.mxu0 %v3306
        %3652 = vmatmul.bf16.gmra.mxu0 %v2639
        %v3653 = vpop.f32.mrf.mxu0
        %v3654 = vadd.f32 %v3640, %v3653
        %v3655 = vpop.f32.mrf.mxu0
        %v3656 = vadd.f32 %v3642, %v3655
        %3657 = vdwg.mxu0
        %v3658 = vmax.f32 %v3514, 0.0
        %v3659 = vmax.f32 %v3584, 0.0
        %v3660 = vmax.f32 %v3654, 0.0
        %v3661 = vmax.f32 %v3516, 0.0
        %v3662 = vmax.f32 %v3586, 0.0
        %v3663 = vmax.f32 %v3656, 0.0
        %v3664 = vpack.c.bf16 %v3661, %v3658
        %v3665 = vpack.c.bf16 %v3662, %v3659
        %v3666 = vpack.c.bf16 %v3663, %v3660
        %v3667 = vld [vmem:[#allocation10] sm:$0xff]
        %v3668 = vld [vmem:[#allocation10 + $0x8] sm:$0xff]
        %v3669 = vld [vmem:[#allocation10 + $0x10] sm:$0xff]
        %v3670 = vld [vmem:[#allocation10 + $0x18] sm:$0xff]
        %v3671 = vld [vmem:[#allocation10 + $0x20] sm:$0xff]
        %v3672 = vld [vmem:[#allocation10 + $0x28] sm:$0xff]
        %v3673 = vld [vmem:[#allocation10 + $0x30] sm:$0xff]
        %v3674 = vld [vmem:[#allocation10 + $0x38] sm:$0xff]
        %v3675 = vld [vmem:[#allocation10 + $0x40] sm:$0xff]
        %v3676 = vld [vmem:[#allocation10 + $0x48] sm:$0xff]
        %v3677 = vld [vmem:[#allocation10 + $0x50] sm:$0xff]
        %v3678 = vld [vmem:[#allocation10 + $0x58] sm:$0xff]
        %v3679 = vld [vmem:[#allocation10 + $0x60] sm:$0xff]
        %v3680 = vld [vmem:[#allocation10 + $0x68] sm:$0xff]
        %v3681 = vld [vmem:[#allocation10 + $0x70] sm:$0xff]
        %v3682 = vld [vmem:[#allocation10 + $0x78] sm:$0xff]
        %v3683 = vld [vmem:[#allocation10 + $0x80] sm:$0xff]
        %v3684 = vld [vmem:[#allocation10 + $0x88] sm:$0xff]
        %v3685 = vld [vmem:[#allocation10 + $0x90] sm:$0xff]
        %v3686 = vld [vmem:[#allocation10 + $0x98] sm:$0xff]
        %v3687 = vld [vmem:[#allocation10 + $0xa0] sm:$0xff]
        %v3688 = vld [vmem:[#allocation10 + $0xa8] sm:$0xff]
        %v3689 = vld [vmem:[#allocation10 + $0xb0] sm:$0xff]
        %v3690 = vld [vmem:[#allocation10 + $0xb8] sm:$0xff]
        %v3691 = vld [vmem:[#allocation10 + $0xc0] sm:$0xff]
        %v3692 = vld [vmem:[#allocation10 + $0xc8] sm:$0xff]
        %v3693 = vld [vmem:[#allocation10 + $0xd0] sm:$0xff]
        %v3694 = vld [vmem:[#allocation10 + $0xd8] sm:$0xff]
        %v3695 = vld [vmem:[#allocation10 + $0xe0] sm:$0xff]
        %v3696 = vld [vmem:[#allocation10 + $0xe8] sm:$0xff]
        %v3697 = vld [vmem:[#allocation10 + $0xf0] sm:$0xff]
        %v3698 = vld [vmem:[#allocation10 + $0xf8] sm:$0xff]
        %v3699 = vld [vmem:[#allocation10 + $0x100] sm:$0xff]
        %v3700 = vld [vmem:[#allocation10 + $0x108] sm:$0xff]
        %v3701 = vld [vmem:[#allocation10 + $0x110] sm:$0xff]
        %v3702 = vld [vmem:[#allocation10 + $0x118] sm:$0xff]
        %v3703 = vld [vmem:[#allocation10 + $0x120] sm:$0xff]
        %v3704 = vld [vmem:[#allocation10 + $0x128] sm:$0xff]
        %v3705 = vld [vmem:[#allocation10 + $0x130] sm:$0xff]
        %v3706 = vld [vmem:[#allocation10 + $0x138] sm:$0xff]
        %v3707 = vld [vmem:[#allocation10 + $0x140] sm:$0xff]
        %v3708 = vld [vmem:[#allocation10 + $0x148] sm:$0xff]
        %v3709 = vld [vmem:[#allocation10 + $0x150] sm:$0xff]
        %v3710 = vld [vmem:[#allocation10 + $0x158] sm:$0xff]
        %v3711 = vld [vmem:[#allocation10 + $0x160] sm:$0xff]
        %v3712 = vld [vmem:[#allocation10 + $0x168] sm:$0xff]
        %v3713 = vld [vmem:[#allocation10 + $0x170] sm:$0xff]
        %v3714 = vld [vmem:[#allocation10 + $0x178] sm:$0xff]
        %v3715 = vld [vmem:[%s6] sm:$0x3]
        %v3717 = vperm.slane %v3715, 0
        %v3718 = vperm.slane %v3715, 1
        %v3769 = vunpack.c.l.b16 %v3667
        %v3770 = vunpack.c.h.b16 %v3667
        %v3771 = vunpack.c.l.b16 %v3668
        %v3772 = vunpack.c.h.b16 %v3668
        %v3773 = vunpack.c.l.b16 %v3669
        %v3774 = vunpack.c.h.b16 %v3669
        %v3775 = vunpack.c.l.b16 %v3670
        %v3776 = vunpack.c.h.b16 %v3670
        %v3777 = vunpack.c.l.b16 %v3671
        %v3778 = vunpack.c.h.b16 %v3671
        %v3779 = vunpack.c.l.b16 %v3672
        %v3780 = vunpack.c.h.b16 %v3672
        %v3781 = vunpack.c.l.b16 %v3673
        %v3782 = vunpack.c.h.b16 %v3673
        %v3783 = vunpack.c.l.b16 %v3674
        %v3784 = vunpack.c.h.b16 %v3674
        %v3785 = vunpack.c.l.b16 %v3675
        %v3786 = vunpack.c.h.b16 %v3675
        %v3787 = vunpack.c.l.b16 %v3676
        %v3788 = vunpack.c.h.b16 %v3676
        %v3789 = vunpack.c.l.b16 %v3677
        %v3790 = vunpack.c.h.b16 %v3677
        %v3791 = vunpack.c.l.b16 %v3678
        %v3792 = vunpack.c.h.b16 %v3678
        %v3793 = vunpack.c.l.b16 %v3679
        %v3794 = vunpack.c.h.b16 %v3679
        %v3795 = vunpack.c.l.b16 %v3680
        %v3796 = vunpack.c.h.b16 %v3680
        %v3797 = vunpack.c.l.b16 %v3681
        %v3798 = vunpack.c.h.b16 %v3681
        %v3799 = vunpack.c.l.b16 %v3682
        %v3800 = vunpack.c.h.b16 %v3682
        %v3801 = vunpack.c.l.b16 %v3683
        %v3802 = vunpack.c.h.b16 %v3683
        %v3803 = vunpack.c.l.b16 %v3684
        %v3804 = vunpack.c.h.b16 %v3684
        %v3805 = vunpack.c.l.b16 %v3685
        %v3806 = vunpack.c.h.b16 %v3685
        %v3807 = vunpack.c.l.b16 %v3686
        %v3808 = vunpack.c.h.b16 %v3686
        %v3809 = vunpack.c.l.b16 %v3687
        %v3810 = vunpack.c.h.b16 %v3687
        %v3811 = vunpack.c.l.b16 %v3688
        %v3812 = vunpack.c.h.b16 %v3688
        %v3813 = vunpack.c.l.b16 %v3689
        %v3814 = vunpack.c.h.b16 %v3689
        %v3815 = vunpack.c.l.b16 %v3690
        %v3816 = vunpack.c.h.b16 %v3690
        %v3817 = vunpack.c.l.b16 %v3691
        %v3818 = vunpack.c.h.b16 %v3691
        %v3819 = vunpack.c.l.b16 %v3692
        %v3820 = vunpack.c.h.b16 %v3692
        %v3821 = vunpack.c.l.b16 %v3693
        %v3822 = vunpack.c.h.b16 %v3693
        %v3823 = vunpack.c.l.b16 %v3694
        %v3824 = vunpack.c.h.b16 %v3694
        %v3825 = vunpack.c.l.b16 %v3695
        %v3826 = vunpack.c.h.b16 %v3695
        %v3827 = vunpack.c.l.b16 %v3696
        %v3828 = vunpack.c.h.b16 %v3696
        %v3829 = vunpack.c.l.b16 %v3697
        %v3830 = vunpack.c.h.b16 %v3697
        %v3831 = vunpack.c.l.b16 %v3698
        %v3832 = vunpack.c.h.b16 %v3698
        %v3833 = vunpack.c.l.b16 %v3699
        %v3834 = vunpack.c.h.b16 %v3699
        %v3835 = vunpack.c.l.b16 %v3700
        %v3836 = vunpack.c.h.b16 %v3700
        %v3837 = vunpack.c.l.b16 %v3701
        %v3838 = vunpack.c.h.b16 %v3701
        %v3839 = vunpack.c.l.b16 %v3702
        %v3840 = vunpack.c.h.b16 %v3702
        %v3841 = vunpack.c.l.b16 %v3703
        %v3842 = vunpack.c.h.b16 %v3703
        %v3843 = vunpack.c.l.b16 %v3704
        %v3844 = vunpack.c.h.b16 %v3704
        %v3845 = vunpack.c.l.b16 %v3705
        %v3846 = vunpack.c.h.b16 %v3705
        %v3847 = vunpack.c.l.b16 %v3706
        %v3848 = vunpack.c.h.b16 %v3706
        %v3849 = vunpack.c.l.b16 %v3707
        %v3850 = vunpack.c.h.b16 %v3707
        %v3851 = vunpack.c.l.b16 %v3708
        %v3852 = vunpack.c.h.b16 %v3708
        %v3853 = vunpack.c.l.b16 %v3709
        %v3854 = vunpack.c.h.b16 %v3709
        %v3855 = vunpack.c.l.b16 %v3710
        %v3856 = vunpack.c.h.b16 %v3710
        %v3857 = vunpack.c.l.b16 %v3711
        %v3858 = vunpack.c.h.b16 %v3711
        %v3859 = vunpack.c.l.b16 %v3712
        %v3860 = vunpack.c.h.b16 %v3712
        %v3861 = vunpack.c.l.b16 %v3713
        %v3862 = vunpack.c.h.b16 %v3713
        %v3863 = vunpack.c.l.b16 %v3714
        %v3864 = vunpack.c.h.b16 %v3714
        %v3865 = vpack.c.b16 %v3771, %v3769
        %v3866 = vpack.c.b16 %v3772, %v3770
        %v3867 = vpack.c.b16 %v3775, %v3773
        %v3868 = vpack.c.b16 %v3776, %v3774
        %v3869 = vpack.c.b16 %v3779, %v3777
        %v3870 = vpack.c.b16 %v3780, %v3778
        %v3871 = vpack.c.b16 %v3783, %v3781
        %v3872 = vpack.c.b16 %v3784, %v3782
        %v3873 = vpack.c.b16 %v3787, %v3785
        %v3874 = vpack.c.b16 %v3788, %v3786
        %v3875 = vpack.c.b16 %v3791, %v3789
        %v3876 = vpack.c.b16 %v3792, %v3790
        %v3877 = vpack.c.b16 %v3795, %v3793
        %v3878 = vpack.c.b16 %v3796, %v3794
        %v3879 = vpack.c.b16 %v3799, %v3797
        %v3880 = vpack.c.b16 %v3800, %v3798
        %v3881 = vpack.c.b16 %v3803, %v3801
        %v3882 = vpack.c.b16 %v3804, %v3802
        %v3883 = vpack.c.b16 %v3807, %v3805
        %v3884 = vpack.c.b16 %v3808, %v3806
        %v3885 = vpack.c.b16 %v3811, %v3809
        %v3886 = vpack.c.b16 %v3812, %v3810
        %v3887 = vpack.c.b16 %v3815, %v3813
        %v3888 = vpack.c.b16 %v3816, %v3814
        %v3889 = vpack.c.b16 %v3819, %v3817
        %v3890 = vpack.c.b16 %v3820, %v3818
        %v3891 = vpack.c.b16 %v3823, %v3821
        %v3892 = vpack.c.b16 %v3824, %v3822
        %v3893 = vpack.c.b16 %v3827, %v3825
        %v3894 = vpack.c.b16 %v3828, %v3826
        %v3895 = vpack.c.b16 %v3831, %v3829
        %v3896 = vpack.c.b16 %v3832, %v3830
        %v3897 = vpack.c.b16 %v3835, %v3833
        %v3898 = vpack.c.b16 %v3836, %v3834
        %v3899 = vpack.c.b16 %v3839, %v3837
        %v3900 = vpack.c.b16 %v3840, %v3838
        %v3901 = vpack.c.b16 %v3843, %v3841
        %v3902 = vpack.c.b16 %v3844, %v3842
        %v3903 = vpack.c.b16 %v3847, %v3845
        %v3904 = vpack.c.b16 %v3848, %v3846
        %v3905 = vpack.c.b16 %v3851, %v3849
        %v3906 = vpack.c.b16 %v3852, %v3850
        %v3907 = vpack.c.b16 %v3855, %v3853
        %v3908 = vpack.c.b16 %v3856, %v3854
        %v3909 = vpack.c.b16 %v3859, %v3857
        %v3910 = vpack.c.b16 %v3860, %v3858
        %v3911 = vpack.c.b16 %v3863, %v3861
        %v3912 = vpack.c.b16 %v3864, %v3862
        %3961 = vmatpush.bf16.msra.mxu0 %v3879
        %3962 = vmatpush.bf16.msra.mxu0 %v3877
        %3963 = vmatpush.bf16.msra.mxu0 %v3875
        %3964 = vmatpush.bf16.msra.mxu0 %v3873
        %3965 = vmatpush.bf16.msra.mxu0 %v3871
        %3966 = vmatpush.bf16.msra.mxu0 %v3869
        %3967 = vmatpush.bf16.msra.mxu0 %v3867
        %3968 = vmatpush.bf16.msra.mxu0 %v3865
        %3969 = vmatmul.bf16.gmra.mxu0 %v3664
        %v3970 = vpop.f32.mrf.mxu0
        %v3971 = vadd.f32 %v3717, %v3970
        %v3972 = vpop.f32.mrf.mxu0
        %v3973 = vadd.f32 %v3717, %v3972
        %3974 = vdwg.mxu0
        %3975 = vmatpush.bf16.msra.mxu0 %v3895
        %3976 = vmatpush.bf16.msra.mxu0 %v3893
        %3977 = vmatpush.bf16.msra.mxu0 %v3891
        %3978 = vmatpush.bf16.msra.mxu0 %v3889
        %3979 = vmatpush.bf16.msra.mxu0 %v3887
        %3980 = vmatpush.bf16.msra.mxu0 %v3885
        %3981 = vmatpush.bf16.msra.mxu0 %v3883
        %3982 = vmatpush.bf16.msra.mxu0 %v3881
        %3983 = vmatmul.bf16.gmra.mxu0 %v3665
        %v3984 = vpop.f32.mrf.mxu0
        %v3985 = vadd.f32 %v3971, %v3984
        %v3986 = vpop.f32.mrf.mxu0
        %v3987 = vadd.f32 %v3973, %v3986
        %3988 = vdwg.mxu0
        %3989 = vmatpush.bf16.msra.mxu0 %v3911
        %3990 = vmatpush.bf16.msra.mxu0 %v3909
        %3991 = vmatpush.bf16.msra.mxu0 %v3907
        %3992 = vmatpush.bf16.msra.mxu0 %v3905
        %3993 = vmatpush.bf16.msra.mxu0 %v3903
        %3994 = vmatpush.bf16.msra.mxu0 %v3901
        %3995 = vmatpush.bf16.msra.mxu0 %v3899
        %3996 = vmatpush.bf16.msra.mxu0 %v3897
        %3997 = vmatmul.bf16.gmra.mxu0 %v3666
        %v3998 = vpop.f32.mrf.mxu0
        %v3999 = vadd.f32 %v3985, %v3998
        %v4000 = vpop.f32.mrf.mxu0
        %v4001 = vadd.f32 %v3987, %v4000
        %4002 = vdwg.mxu0
        %4003 = vmatpush.bf16.msra.mxu0 %v3880
        %4004 = vmatpush.bf16.msra.mxu0 %v3878
        %4005 = vmatpush.bf16.msra.mxu0 %v3876
        %4006 = vmatpush.bf16.msra.mxu0 %v3874
        %4007 = vmatpush.bf16.msra.mxu0 %v3872
        %4008 = vmatpush.bf16.msra.mxu0 %v3870
        %4009 = vmatpush.bf16.msra.mxu0 %v3868
        %4010 = vmatpush.bf16.msra.mxu0 %v3866
        %4011 = vmatmul.bf16.gmra.mxu0 %v3664
        %v4012 = vpop.f32.mrf.mxu0
        %v4013 = vadd.f32 %v3718, %v4012
        %v4014 = vpop.f32.mrf.mxu0
        %v4015 = vadd.f32 %v3718, %v4014
        %4016 = vdwg.mxu0
        %4017 = vmatpush.bf16.msra.mxu0 %v3896
        %4018 = vmatpush.bf16.msra.mxu0 %v3894
        %4019 = vmatpush.bf16.msra.mxu0 %v3892
        %4020 = vmatpush.bf16.msra.mxu0 %v3890
        %4021 = vmatpush.bf16.msra.mxu0 %v3888
        %4022 = vmatpush.bf16.msra.mxu0 %v3886
        %4023 = vmatpush.bf16.msra.mxu0 %v3884
        %4024 = vmatpush.bf16.msra.mxu0 %v3882
        %4025 = vmatmul.bf16.gmra.mxu0 %v3665
        %v4026 = vpop.f32.mrf.mxu0
        %v4027 = vadd.f32 %v4013, %v4026
        %v4028 = vpop.f32.mrf.mxu0
        %v4029 = vadd.f32 %v4015, %v4028
        %4030 = vdwg.mxu0
        %4031 = vmatpush.bf16.msra.mxu0 %v3912
        %4032 = vmatpush.bf16.msra.mxu0 %v3910
        %4033 = vmatpush.bf16.msra.mxu0 %v3908
        %4034 = vmatpush.bf16.msra.mxu0 %v3906
        %4035 = vmatpush.bf16.msra.mxu0 %v3904
        %4036 = vmatpush.bf16.msra.mxu0 %v3902
        %4037 = vmatpush.bf16.msra.mxu0 %v3900
        %4038 = vmatpush.bf16.msra.mxu0 %v3898
        %4039 = vmatmul.bf16.gmra.mxu0 %v3666
        %v4040 = vpop.f32.mrf.mxu0
        %v4041 = vadd.f32 %v4027, %v4040
        %v4042 = vpop.f32.mrf.mxu0
        %v4043 = vadd.f32 %v4029, %v4042
        %4044 = vdwg.mxu0
        %v4045 = vmax.f32 %v3999, 0.0
        %v4046 = vmax.f32 %v4041, 0.0
        %v4047 = vmax.f32 %v4001, 0.0
        %v4048 = vmax.f32 %v4043, 0.0
        %v4049 = vpack.c.bf16 %v4047, %v4045
        %v4050 = vpack.c.bf16 %v4048, %v4046
        %v4051 = vld [vmem:[#allocation11] sm:$0xf]
        %v4052 = vld [vmem:[#allocation11 + $0x4] sm:$0xf]
        %v4053 = vld [vmem:[#allocation11 + $0x8] sm:$0xf]
        %v4054 = vld [vmem:[#allocation11 + $0xc] sm:$0xf]
        %v4055 = vld [vmem:[#allocation11 + $0x10] sm:$0xf]
        %v4056 = vld [vmem:[#allocation11 + $0x14] sm:$0xf]
        %v4057 = vld [vmem:[#allocation11 + $0x18] sm:$0xf]
        %v4058 = vld [vmem:[#allocation11 + $0x1c] sm:$0xf]
        %v4059 = vld [vmem:[#allocation11 + $0x20] sm:$0xf]
        %v4060 = vld [vmem:[#allocation11 + $0x24] sm:$0xf]
        %v4061 = vld [vmem:[#allocation11 + $0x28] sm:$0xf]
        %v4062 = vld [vmem:[#allocation11 + $0x2c] sm:$0xf]
        %v4063 = vld [vmem:[#allocation11 + $0x30] sm:$0xf]
        %v4064 = vld [vmem:[#allocation11 + $0x34] sm:$0xf]
        %v4065 = vld [vmem:[#allocation11 + $0x38] sm:$0xf]
        %v4066 = vld [vmem:[#allocation11 + $0x3c] sm:$0xf]
        %v4067 = vld [vmem:[#allocation11 + $0x40] sm:$0xf]
        %v4068 = vld [vmem:[#allocation11 + $0x44] sm:$0xf]
        %v4069 = vld [vmem:[#allocation11 + $0x48] sm:$0xf]
        %v4070 = vld [vmem:[#allocation11 + $0x4c] sm:$0xf]
        %v4071 = vld [vmem:[#allocation11 + $0x50] sm:$0xf]
        %v4072 = vld [vmem:[#allocation11 + $0x54] sm:$0xf]
        %v4073 = vld [vmem:[#allocation11 + $0x58] sm:$0xf]
        %v4074 = vld [vmem:[#allocation11 + $0x5c] sm:$0xf]
        %v4075 = vld [vmem:[#allocation11 + $0x60] sm:$0xf]
        %v4076 = vld [vmem:[#allocation11 + $0x64] sm:$0xf]
        %v4077 = vld [vmem:[#allocation11 + $0x68] sm:$0xf]
        %v4078 = vld [vmem:[#allocation11 + $0x6c] sm:$0xf]
        %v4079 = vld [vmem:[#allocation11 + $0x70] sm:$0xf]
        %v4080 = vld [vmem:[#allocation11 + $0x74] sm:$0xf]
        %v4081 = vld [vmem:[#allocation11 + $0x78] sm:$0xf]
        %v4082 = vld [vmem:[#allocation11 + $0x7c] sm:$0xf]
        %v4083 = vld [vmem:[%s8] sm:$0x1]
        %v4085 = vperm.slane %v4083, 0
        %v4119 = vunpack.c.l.b16 %v4051
        %v4120 = vunpack.c.l.b16 %v4052
        %v4121 = vunpack.c.l.b16 %v4053
        %v4122 = vunpack.c.l.b16 %v4054
        %v4123 = vunpack.c.l.b16 %v4055
        %v4124 = vunpack.c.l.b16 %v4056
        %v4125 = vunpack.c.l.b16 %v4057
        %v4126 = vunpack.c.l.b16 %v4058
        %v4127 = vunpack.c.l.b16 %v4059
        %v4128 = vunpack.c.l.b16 %v4060
        %v4129 = vunpack.c.l.b16 %v4061
        %v4130 = vunpack.c.l.b16 %v4062
        %v4131 = vunpack.c.l.b16 %v4063
        %v4132 = vunpack.c.l.b16 %v4064
        %v4133 = vunpack.c.l.b16 %v4065
        %v4134 = vunpack.c.l.b16 %v4066
        %v4135 = vunpack.c.l.b16 %v4067
        %v4136 = vunpack.c.l.b16 %v4068
        %v4137 = vunpack.c.l.b16 %v4069
        %v4138 = vunpack.c.l.b16 %v4070
        %v4139 = vunpack.c.l.b16 %v4071
        %v4140 = vunpack.c.l.b16 %v4072
        %v4141 = vunpack.c.l.b16 %v4073
        %v4142 = vunpack.c.l.b16 %v4074
        %v4143 = vunpack.c.l.b16 %v4075
        %v4144 = vunpack.c.l.b16 %v4076
        %v4145 = vunpack.c.l.b16 %v4077
        %v4146 = vunpack.c.l.b16 %v4078
        %v4147 = vunpack.c.l.b16 %v4079
        %v4148 = vunpack.c.l.b16 %v4080
        %v4149 = vunpack.c.l.b16 %v4081
        %v4150 = vunpack.c.l.b16 %v4082
        %v4151 = vpack.c.b16 %v4120, %v4119
        %v4152 = vpack.c.b16 %v4122, %v4121
        %v4153 = vpack.c.b16 %v4124, %v4123
        %v4154 = vpack.c.b16 %v4126, %v4125
        %v4155 = vpack.c.b16 %v4128, %v4127
        %v4156 = vpack.c.b16 %v4130, %v4129
        %v4157 = vpack.c.b16 %v4132, %v4131
        %v4158 = vpack.c.b16 %v4134, %v4133
        %v4159 = vpack.c.b16 %v4136, %v4135
        %v4160 = vpack.c.b16 %v4138, %v4137
        %v4161 = vpack.c.b16 %v4140, %v4139
        %v4162 = vpack.c.b16 %v4142, %v4141
        %v4163 = vpack.c.b16 %v4144, %v4143
        %v4164 = vpack.c.b16 %v4146, %v4145
        %v4165 = vpack.c.b16 %v4148, %v4147
        %v4166 = vpack.c.b16 %v4150, %v4149
        %4183 = vmatpush.bf16.msra.mxu0 %v4158
        %4184 = vmatpush.bf16.msra.mxu0 %v4157
        %4185 = vmatpush.bf16.msra.mxu0 %v4156
        %4186 = vmatpush.bf16.msra.mxu0 %v4155
        %4187 = vmatpush.bf16.msra.mxu0 %v4154
        %4188 = vmatpush.bf16.msra.mxu0 %v4153
        %4189 = vmatpush.bf16.msra.mxu0 %v4152
        %4190 = vmatpush.bf16.msra.mxu0 %v4151
        %4191 = vmatmul.bf16.gmra.mxu0 %v4049
        %v4192 = vpop.f32.mrf.mxu0
        %v4193 = vadd.f32 %v4085, %v4192
        %v4194 = vpop.f32.mrf.mxu0
        %v4195 = vadd.f32 %v4085, %v4194
        %4196 = vdwg.mxu0
        %4197 = vmatpush.bf16.msra.mxu0 %v4166
        %4198 = vmatpush.bf16.msra.mxu0 %v4165
        %4199 = vmatpush.bf16.msra.mxu0 %v4164
        %4200 = vmatpush.bf16.msra.mxu0 %v4163
        %4201 = vmatpush.bf16.msra.mxu0 %v4162
        %4202 = vmatpush.bf16.msra.mxu0 %v4161
        %4203 = vmatpush.bf16.msra.mxu0 %v4160
        %4204 = vmatpush.bf16.msra.mxu0 %v4159
        %4205 = vmatmul.bf16.gmra.mxu0 %v4050
        %v4206 = vpop.f32.mrf.mxu0
        %v4207 = vadd.f32 %v4193, %v4206
        %v4208 = vpop.f32.mrf.mxu0
        %v4209 = vadd.f32 %v4195, %v4208
        %4210 = vdwg.mxu0
        %v4211 = vmax.f32 %v4207, 0.0
        %v4212 = vmax.f32 %v4209, 0.0
        %v4213 = vpack.c.bf16 %v4212, %v4211
        %v4214 = vld [vmem:[#allocation13] sm:$0xf]
        %v4215 = vld [vmem:[#allocation13 + $0x4] sm:$0xf]
        %v4216 = vld [vmem:[#allocation13 + $0x8] sm:$0xf]
        %v4217 = vld [vmem:[#allocation13 + $0xc] sm:$0xf]
        %v4218 = vld [vmem:[#allocation13 + $0x10] sm:$0xf]
        %v4219 = vld [vmem:[#allocation13 + $0x14] sm:$0xf]
        %v4220 = vld [vmem:[#allocation13 + $0x18] sm:$0xf]
        %v4221 = vld [vmem:[#allocation13 + $0x1c] sm:$0xf]
        %v4222 = vld [vmem:[#allocation13 + $0x20] sm:$0xf]
        %v4223 = vld [vmem:[#allocation13 + $0x24] sm:$0xf]
        %v4224 = vld [vmem:[#allocation13 + $0x28] sm:$0xf]
        %v4225 = vld [vmem:[#allocation13 + $0x2c] sm:$0xf]
        %v4226 = vld [vmem:[#allocation13 + $0x30] sm:$0xf]
        %v4227 = vld [vmem:[#allocation13 + $0x34] sm:$0xf]
        %v4228 = vld [vmem:[#allocation13 + $0x38] sm:$0xf]
        %v4229 = vld [vmem:[#allocation13 + $0x3c] sm:$0xf]
        %v4230 = vld [vmem:[%s10] sm:$0x1]
        %v4232 = vperm.slane %v4230, 0
        %v4250 = vunpack.c.l.b16 %v4214
        %v4251 = vunpack.c.l.b16 %v4215
        %v4252 = vunpack.c.l.b16 %v4216
        %v4253 = vunpack.c.l.b16 %v4217
        %v4254 = vunpack.c.l.b16 %v4218
        %v4255 = vunpack.c.l.b16 %v4219
        %v4256 = vunpack.c.l.b16 %v4220
        %v4257 = vunpack.c.l.b16 %v4221
        %v4258 = vunpack.c.l.b16 %v4222
        %v4259 = vunpack.c.l.b16 %v4223
        %v4260 = vunpack.c.l.b16 %v4224
        %v4261 = vunpack.c.l.b16 %v4225
        %v4262 = vunpack.c.l.b16 %v4226
        %v4263 = vunpack.c.l.b16 %v4227
        %v4264 = vunpack.c.l.b16 %v4228
        %v4265 = vunpack.c.l.b16 %v4229
        %v4266 = vpack.c.b16 %v4251, %v4250
        %v4267 = vpack.c.b16 %v4253, %v4252
        %v4268 = vpack.c.b16 %v4255, %v4254
        %v4269 = vpack.c.b16 %v4257, %v4256
        %v4270 = vpack.c.b16 %v4259, %v4258
        %v4271 = vpack.c.b16 %v4261, %v4260
        %v4272 = vpack.c.b16 %v4263, %v4262
        %v4273 = vpack.c.b16 %v4265, %v4264
        %4282 = vmatpush.bf16.msra.mxu0 %v4273
        %4283 = vmatpush.bf16.msra.mxu0 %v4272
        %4284 = vmatpush.bf16.msra.mxu0 %v4271
        %4285 = vmatpush.bf16.msra.mxu0 %v4270
        %4286 = vmatpush.bf16.msra.mxu0 %v4269
        %4287 = vmatpush.bf16.msra.mxu0 %v4268
        %4288 = vmatpush.bf16.msra.mxu0 %v4267
        %4289 = vmatpush.bf16.msra.mxu0 %v4266
        %4290 = vmatmul.bf16.gmra.mxu0 %v4213
        %v4291 = vpop.f32.mrf.mxu0
        %v4292 = vadd.f32 %v4232, %v4291
        %v4293 = vpop.f32.mrf.mxu0
        %v4294 = vadd.f32 %v4232, %v4293
        %4295 = vdwg.mxu0
        %4296 = vst [vmem:[%s504] sm:$0xff] %v4292
        %4297 = vst [vmem:[%s504 + $0x8] sm:$0xff] %v4294
        %s4298 = sand.u32 %s275, 1
        %s4299 = scalar_lea.sflag [#allocation4], %s4298
        %s4300 = sand.u32 %s275, 1
        %s4301 = smul.addr %s4300, 16
        %s4302 = scalar_lea.vmem [#allocation14], %s4301
        // Predicated region
        $region93: #{tpu_custom_call.1} parent=63 // pred_check
          %p4303 = pneg %p285
        $region94: #{tpu_custom_call.1} parent=63 // pred_check_branch
          %4305 = sbr.rel (%p4303) target = $region96
        $region95: #{tpu_custom_call.1} parent=63 // pred_region
          %s4306 = smul.u32 2, %s31
          %4308 = vsyncadd %s4299, 0
          %s4309 = smul.addr %s4306, 8
          %s4310 = scalar_lea.hbm %s11, %s4309
          %s4311 = sshll.u32 %s4302, 4
          %s4312 = int_to_ptr.vmem [resolvable:$true] %s4311
          %s4313 = sshll.u32 %s4310, 4
          %s4314 = int_to_ptr.hbm [resolvable:$true] %s4313
          %4319 = dma.vmem_to_hbm [thread:$0]  %s4312, 256, %s4314, %s4299, 128, 128, 8
        $region96: #{tpu_custom_call.1} parent=63 // pred_fallthru
          _
      $region64: #{tpu_custom_call.1} parent=5 // pred_fallthru
        _
      %p4320 = scmp.le.s32.totalorder 2, %s26
      // Predicated region
      $region97: #{tpu_custom_call.1} parent=5 // pred_check
        %p4321 = pneg %p4320
      $region98: #{tpu_custom_call.1} parent=5 // pred_check_branch
        %4323 = sbr.rel (%p4321) target = $region100
      $region99: #{tpu_custom_call.1} parent=5 // pred_region
        %s4324 = ssub.s32 %s26, 2
        // Predicated region
        $region101: #{tpu_custom_call.1} parent=99 // pred_check
          %p4325 = pneg %p291
        $region102: #{tpu_custom_call.1} parent=99 // pred_check_branch
          %4327 = sbr.rel (%p4325) target = $region104
        $region103: #{tpu_custom_call.1} parent=99 // pred_region
          %s4328 = sand.u32 %s276, 1
          %s4329 = scalar_lea.sflag [#allocation4], %s4328
          %s4330 = sand.u32 %s276, 1
          %s4331 = smul.addr %s4330, 16
          %s4332 = scalar_lea.vmem [#allocation14], %s4331
          %4334 = dma.done %s4329, 256
        $region104: #{tpu_custom_call.1} parent=99 // pred_fallthru
          _
      $region100: #{tpu_custom_call.1} parent=5 // pred_fallthru
        _
    $region6: #{tpu_custom_call.1} parent=1 // loop_footer
      %s30 = sadd.s32 1, %s26
    $region7: #{tpu_custom_call.1} parent=1 // loop_footer_branch
      %25 = sbr.rel target = $region3
    $region8: #{tpu_custom_call.1} parent=1 // loop_exit
      _
    %4335 = vsyncpa [#allocation3], 1
    %s4336 = scalar_lea.sflag [#allocation3], 1
    %4337 = vsyncpa %s4336, 1
    %4338 = vsyncpa [#allocation6], 1
    %4339 = vsyncpa [#allocation9], 1
    %4340 = vsyncpa [#allocation12], 1
    %4341 = vsyncpa [#allocation4], 1
    %s4342 = scalar_lea.sflag [#allocation4], 1
    %4343 = vsyncpa %s4342, 1

</llo_original>
